<compile_context>
chip_gen: v7x
topology: tpu7x:2x2x1
jax: 0.10.0
libtpu: 0.0.40
codegen_flags: <defaults>
</compile_context>

<pallas_src>
import math

import jax
import jax.numpy as jnp
from jax import lax
from jax.experimental import pallas as pl
from jax.experimental.pallas import tpu as pltpu


def _softplus(x):
    # Numerically stable softplus (matches torch.nn.Softplus()); log1p per review.
    return jnp.maximum(x, 0.0) + jnp.log1p(jnp.exp(-jnp.abs(x)))


def _round_up(x, m):
    return (x + m - 1) // m * m


# ----------------------------------------------------------------------------------
# Pallas kernel: one row-tile of points through the collapsed 2-matmul MLP.
# ----------------------------------------------------------------------------------
def triplane_kernel(xv_ref, w1_ref, b1_ref, w2_ref, b2_ref, out_ref):
    # Layer 1: both hidden layers fused into one (6, 2W) bf16 matmul, f32 accumulate.
    #   h[:, :W]  = h_sig = softplus(x @ W_sig1 + b_sig1)
    #   h[:, W:]  = h_v   = softplus(cat(x, v) @ W_v1 + b_v1)
    h = _softplus(
        jnp.dot(xv_ref[...], w1_ref[...], preferred_element_type=jnp.float32)
        + b1_ref[...])

    # Layer 2: single (2W, P) bf16 matmul that lands feat / rgb / sdf directly in
    # their packed output lanes (rgb head pre-fused into W2 on the host).
    packed = (jnp.dot(h.astype(w2_ref.dtype), w2_ref[...],
                      preferred_element_type=jnp.float32)
              + b2_ref[...])

    out_ref[...] = packed.astype(out_ref.dtype)   # single lane-dense bf16 store


# ----------------------------------------------------------------------------------
# Parameter init (shapes / distributions match the PyTorch module's __init__).
# Weights are stored transposed vs PyTorch: (in_dim, out_dim), so x @ W == F.linear.
# ----------------------------------------------------------------------------------
def init_params(key, W=32, input_ch=3, input_ch_views=3):
    ks = iter(jax.random.split(key, 16))

    def u(shape, lo, hi):
        return jax.random.uniform(next(ks), shape, jnp.float32, lo, hi)

    def freq_w(in_dim, out_dim):
        c = math.sqrt(6.0 / in_dim) / 25.0
        return u((in_dim, out_dim), -c, c)

    def kaiming_w(in_dim, out_dim):
        gain = math.sqrt(2.0 / (1.0 + 0.2 ** 2))      # leaky_relu, a=0.2
        std = 0.25 * gain / math.sqrt(in_dim)          # 0.25 * kaiming_normal fan_in
        return std * jax.random.normal(next(ks), (in_dim, out_dim), jnp.float32)

    def bias(in_dim, out_dim):
        b = math.sqrt(1.0 / in_dim)
        return u((out_dim,), -b, b)

    return dict(
        # sigma_linear: Linear(3, W, freq_init), Softplus, Linear(W, 1, freq_init)
        w_sig1=freq_w(input_ch, W), b_sig1=bias(input_ch, W),
        w_sig2=freq_w(W, 1), b_sig2=bias(W, 1),
        # views_linears: Linear(6, W), Softplus, Linear(W, W)  (0.25*kaiming init)
        w_v1=kaiming_w(input_ch + input_ch_views, W),
        b_v1=bias(input_ch + input_ch_views, W),
        w_v2=kaiming_w(W, W), b_v2=bias(W, W),
        # rgb_linear: Linear(W, 3, freq_init)
        w_rgb=freq_w(W, 3), b_rgb=bias(W, 3),
    )


# ----------------------------------------------------------------------------------
# One-time (per parameter set) host-side weight packing / head fusion.
# ----------------------------------------------------------------------------------
def pack_params(params, packed_lanes=128):
    """Build the fused 2-matmul weights.  Run ONCE per parameter set (hoisted
    out of the per-call wrapper per the perf review).

    packed_lanes: 128 -> unmasked lane-dense stores; 64 -> half the HBM write
    bytes but masked stores.  Sweep per generation.
    """
    C, W = params["w_sig1"].shape            # input_ch, hidden width
    Cv = params["w_v1"].shape[0] - C         # input_ch_views
    P = _round_up(W + 4, packed_lanes)       # packed lanes: [feat | rgb | sdf | pad]

    # --- layer 1: (C+Cv, 2W).  cols [0,W) = sigma path (views rows zero),
    #                            cols [W,2W) = views path.
    w1 = jnp.zeros((C + Cv, 2 * W), jnp.float32)
    w1 = w1.at[:C, :W].set(params["w_sig1"])
    w1 = w1.at[:, W:].set(params["w_v1"])
    b1 = jnp.concatenate([params["b_sig1"], params["b_v1"]])[None, :]     # (1, 2W)

    # --- rgb head fused into layer 2 in f32 on the host:
    #     rgb = feat @ W_rgb + b_rgb = h_v @ (W_v2 @ W_rgb) + (b_v2 @ W_rgb + b_rgb)
    w_rgb_fused = jnp.dot(params["w_v2"], params["w_rgb"],
                          precision=lax.Precision.HIGHEST)                # (W, 3)
    b_rgb_fused = jnp.dot(params["b_v2"], params["w_rgb"],
                          precision=lax.Precision.HIGHEST) + params["b_rgb"]

    # --- layer 2: (2W, P).  rows [0,W) = h_sig -> sdf lane (W+3);
    #                        rows [W,2W) = h_v -> feat lanes [0,W) and rgb lanes [W,W+3).
    w2 = jnp.zeros((2 * W, P), jnp.float32)
    w2 = w2.at[:W, W + 3:W + 4].set(params["w_sig2"])
    w2 = w2.at[W:, :W].set(params["w_v2"])
    w2 = w2.at[W:, W:W + 3].set(w_rgb_fused)
    b2 = jnp.zeros((1, P), jnp.float32)
    b2 = b2.at[0, :W].set(params["b_v2"])
    b2 = b2.at[0, W:W + 3].set(b_rgb_fused)
    b2 = b2.at[0, W + 3].set(params["b_sig2"][0])

    return dict(w1=w1.astype(jnp.bfloat16), b1=b1,
                w2=w2.astype(jnp.bfloat16), b2=b2,
                W=W, P=P, C=C, Cv=Cv)


# ----------------------------------------------------------------------------------
# Wrapper: flatten + concat inputs, call pallas_call, unpack the lanes.
# ----------------------------------------------------------------------------------
def triplanenet_pallas(input_features, input_views, packed, tile_rows=2048):
    W, P = packed["W"], packed["P"]
    C, Cv = packed["C"], packed["Cv"]
    assert input_features.shape[-1] == C and input_views.shape[-1] == Cv
    assert input_features.shape[:-1] == input_views.shape[:-1]

    lead = input_features.shape[:-1]
    R = math.prod(lead)

    # Single combined bf16 input stream (concat folded into the first-layer weights).
    xv = jnp.concatenate(
        [input_features.reshape(R, C), input_views.reshape(R, Cv)],
        axis=-1).astype(jnp.bfloat16)                                   # (R, C+Cv)

    # Row tile: large to amortize per-step overhead, but keep >= 2 grid steps when
    # possible so the "parallel" axis balances across v7x's two TensorCores.
    TM = _round_up(min(tile_rows, max((R + 1) // 2, 8)), 8)
    grid = (pl.cdiv(R, TM),)       # no wrapper-side pad; Pallas clips the tail block

    in_specs = [
        pl.BlockSpec((TM, C + Cv), lambda t: (t, 0)),          # xv rows
        pl.BlockSpec(packed["w1"].shape, lambda t: (0, 0)),    # fused layer-1 weight
        pl.BlockSpec(packed["b1"].shape, lambda t: (0, 0)),    # fused layer-1 bias
        pl.BlockSpec(packed["w2"].shape, lambda t: (0, 0)),    # fused layer-2 weight
        pl.BlockSpec(packed["b2"].shape, lambda t: (0, 0)),    # fused layer-2 bias
    ]
    out_specs = pl.BlockSpec((TM, P), lambda t: (t, 0))
    out_shape = jax.ShapeDtypeStruct((R, P), jnp.bfloat16)     # bf16 packed output

    out_packed = pl.pallas_call(
        triplane_kernel,
        grid=grid,
        in_specs=in_specs,
        out_specs=out_specs,
        out_shape=out_shape,
        compiler_params=pltpu.CompilerParams(
            dimension_semantics=("parallel",)),
    )(xv, packed["w1"], packed["b1"], packed["w2"], packed["b2"])

    # Unpack lanes; cast back to f32 to match the PyTorch module's output dtype.
    feat = out_packed[:, :W].astype(jnp.float32).reshape(lead + (W,))
    rgb = out_packed[:, W:W + 3].astype(jnp.float32).reshape(lead + (3,))
    sdf = out_packed[:, W + 3:W + 4].astype(jnp.float32).reshape(lead + (1,))
    return rgb, sdf, feat


# ----------------------------------------------------------------------------------
# Pure-JAX reference (f32, HIGHEST precision) mirroring TriplaneNet.forward.
# ----------------------------------------------------------------------------------
def triplanenet_ref(input_features, input_views, params):
    prec = lax.Precision.HIGHEST

    def lin(x, w, b):
        return jnp.dot(x, w, precision=prec) + b

    h_sig = _softplus(lin(input_features, params["w_sig1"], params["b_sig1"]))
    sdf = lin(h_sig, params["w_sig2"], params["b_sig2"])
    mlp_in = jnp.concatenate([input_features, input_views], axis=-1)
    h_v = _softplus(lin(mlp_in, params["w_v1"], params["b_v1"]))
    feat = lin(h_v, params["w_v2"], params["b_v2"])
    rgb = lin(feat, params["w_rgb"], params["b_rgb"])
    return rgb, sdf, feat


if __name__ == "__main__":
    # Small shapes consistent with the module's forward:
    #   input_features (b, h, w, N_points, 3), input_views same shape.
    B, H, Wimg, N = 2, 8, 8, 16          # -> 2048 points total, 2 grid steps
    Whid = 32

    key = jax.random.PRNGKey(0)
    k_param, k_feat, k_view = jax.random.split(key, 3)

    params = init_params(k_param, W=Whid, input_ch=3, input_ch_views=3)
    packed_params = pack_params(params)   # hoisted: runs once per parameter set

    input_features = jax.random.uniform(
        k_feat, (B, H, Wimg, N, 3), jnp.float32, -1.0, 1.0)
    input_views = jax.random.normal(k_view, (B, H, Wimg, N, 3), jnp.float32)
    input_views = input_views / jnp.linalg.norm(input_views, axis=-1, keepdims=True)

    rgb, sdf, feat = jax.block_until_ready(
        triplanenet_pallas(input_features, input_views, packed_params,
                           tile_rows=2048))

    rgb_r, sdf_r, feat_r = triplanenet_ref(input_features, input_views, params)

    assert rgb.shape == (B, H, Wimg, N, 3)
    assert sdf.shape == (B, H, Wimg, N, 1)
    assert feat.shape == (B, H, Wimg, N, Whid)
    # Tolerance accounts for single-pass bf16 MXU matmuls + bf16 packed output
    # vs the f32 HIGHEST-precision reference (per the perf review, adequate here).
    for got, want in ((rgb, rgb_r), (sdf, sdf_r), (feat, feat_r)):
        err = float(jnp.max(jnp.abs(got - want)))
        assert err < 2e-2, f"mismatch vs reference: max abs err = {err}"

    print("KERNEL_OK")
</pallas_src>

<mosaic_0001>
module attributes {stable_mosaic.version = 11 : i64} {
  func.func @triplane_kernel(%arg0: i32, %arg1: memref<1024x6xbf16, #tpu.memory_space<vmem>>, %arg2: memref<6x64xbf16, #tpu.memory_space<vmem>>, %arg3: memref<1x64xf32, #tpu.memory_space<vmem>>, %arg4: memref<64x128xbf16, #tpu.memory_space<vmem>>, %arg5: memref<1x128xf32, #tpu.memory_space<vmem>>, %arg6: memref<1024x128xbf16, #tpu.memory_space<vmem>>) attributes {dimension_semantics = [#tpu.dimension_semantics<parallel>], iteration_bounds = array<i64: 2>, scalar_prefetch = 0 : i64, scratch_operands = 0 : i64, tpu.core_type = #tpu.core_type<tc>, window_params = [{transform_indices = @transform_0, window_bounds = array<i64: 1024, 6>}, {pipeline_mode = #tpu.pipeline_mode<synchronous>, transform_indices = @transform_1, window_bounds = array<i64: 6, 64>}, {pipeline_mode = #tpu.pipeline_mode<synchronous>, transform_indices = @transform_2, window_bounds = array<i64: 1, 64>}, {pipeline_mode = #tpu.pipeline_mode<synchronous>, transform_indices = @transform_3, window_bounds = array<i64: 64, 128>}, {pipeline_mode = #tpu.pipeline_mode<synchronous>, transform_indices = @transform_4, window_bounds = array<i64: 1, 128>}, {transform_indices = @transform_5, window_bounds = array<i64: 1024, 128>}]} {
    %c0 = arith.constant 0 : index
    %c0_0 = arith.constant 0 : index
    %0 = vector.load %arg1[%c0, %c0_0] : memref<1024x6xbf16, #tpu.memory_space<vmem>>, vector<1024x6xbf16>
    %c0_1 = arith.constant 0 : index
    %c0_2 = arith.constant 0 : index
    %1 = vector.load %arg2[%c0_1, %c0_2] : memref<6x64xbf16, #tpu.memory_space<vmem>>, vector<6x64xbf16>
    %cst = arith.constant dense<0.000000e+00> : vector<1024x64xf32>
    %2 = tpu.matmul %0, %1, %cst {dimension_numbers = #tpu.dot_dimension_numbers<[1], [0], [0], [1], [0, 0, 1, 1], [], []>} : vector<1024x6xbf16>, vector<6x64xbf16>, vector<1024x64xf32> -> vector<1024x64xf32>
    %c0_3 = arith.constant 0 : index
    %c0_4 = arith.constant 0 : index
    %3 = vector.load %arg3[%c0_3, %c0_4] : memref<1x64xf32, #tpu.memory_space<vmem>>, vector<1x64xf32>
    %4 = vector.broadcast %3 : vector<1x64xf32> to vector<1024x64xf32>
    %5 = arith.addf %2, %4 : vector<1024x64xf32>
    %cst_5 = arith.constant 0.000000e+00 : f32
    %6 = vector.broadcast %cst_5 : f32 to vector<1024x64xf32>
    %7 = arith.maximumf %5, %6 : vector<1024x64xf32>
    %8 = math.absf %5 : vector<1024x64xf32>
    %cst_6 = arith.constant 0.000000e+00 : f32
    %9 = vector.broadcast %cst_6 : f32 to vector<1024x64xf32>
    %10 = arith.subf %9, %8 : vector<1024x64xf32>
    %11 = math.exp %10 : vector<1024x64xf32>
    %12 = math.log1p %11 : vector<1024x64xf32>
    %13 = arith.addf %7, %12 : vector<1024x64xf32>
    %14 = arith.truncf %13 : vector<1024x64xf32> to vector<1024x64xbf16>
    %c0_7 = arith.constant 0 : index
    %c0_8 = arith.constant 0 : index
    %15 = vector.load %arg4[%c0_7, %c0_8] : memref<64x128xbf16, #tpu.memory_space<vmem>>, vector<64x128xbf16>
    %cst_9 = arith.constant dense<0.000000e+00> : vector<1024x128xf32>
    %16 = tpu.matmul %14, %15, %cst_9 {dimension_numbers = #tpu.dot_dimension_numbers<[1], [0], [0], [1], [0, 0, 1, 1], [], []>} : vector<1024x64xbf16>, vector<64x128xbf16>, vector<1024x128xf32> -> vector<1024x128xf32>
    %c0_10 = arith.constant 0 : index
    %c0_11 = arith.constant 0 : index
    %17 = vector.load %arg5[%c0_10, %c0_11] : memref<1x128xf32, #tpu.memory_space<vmem>>, vector<1x128xf32>
    %18 = vector.broadcast %17 : vector<1x128xf32> to vector<1024x128xf32>
    %19 = arith.addf %16, %18 : vector<1024x128xf32>
    %20 = arith.truncf %19 : vector<1024x128xf32> to vector<1024x128xbf16>
    %c0_12 = arith.constant 0 : index
    %c0_13 = arith.constant 0 : index
    %21 = vector.load %arg6[%c0_12, %c0_13] : memref<1024x128xbf16, #tpu.memory_space<vmem>>, vector<1024x128xbf16>
    tpu.vector_store %arg6[%c0_12, %c0_13], %20 {strides = array<i32>} : memref<1024x128xbf16, #tpu.memory_space<vmem>>, vector<1024x128xbf16>,
    return
  }
  func.func @transform_0(%arg0: i32) -> (i32, i32) {
    %c0_i32 = arith.constant 0 : i32
    %c0_i32_0 = arith.constant 0 : i32
    return %arg0, %c0_i32 : i32, i32
  }
  func.func @transform_1(%arg0: i32) -> (i32, i32) {
    %c0_i32 = arith.constant 0 : i32
    %c0_i32_0 = arith.constant 0 : i32
    %c0_i32_1 = arith.constant 0 : i32
    return %c0_i32, %c0_i32_0 : i32, i32
  }
  func.func @transform_2(%arg0: i32) -> (i32, i32) {
    %c0_i32 = arith.constant 0 : i32
    %c0_i32_0 = arith.constant 0 : i32
    %c0_i32_1 = arith.constant 0 : i32
    return %c0_i32, %c0_i32_0 : i32, i32
  }
  func.func @transform_3(%arg0: i32) -> (i32, i32) {
    %c0_i32 = arith.constant 0 : i32
    %c0_i32_0 = arith.constant 0 : i32
    %c0_i32_1 = arith.constant 0 : i32
    return %c0_i32, %c0_i32_0 : i32, i32
  }
  func.func @transform_4(%arg0: i32) -> (i32, i32) {
    %c0_i32 = arith.constant 0 : i32
    %c0_i32_0 = arith.constant 0 : i32
    %c0_i32_1 = arith.constant 0 : i32
    return %c0_i32, %c0_i32_0 : i32, i32
  }
  func.func @transform_5(%arg0: i32) -> (i32, i32) {
    %c0_i32 = arith.constant 0 : i32
    %c0_i32_0 = arith.constant 0 : i32
    return %arg0, %c0_i32 : i32, i32
  }
}

</mosaic_0001>

<llo_original>
// kernel: tpu_custom_call.1
$region0: #{tpu_custom_call.1}
  #allocation0 [shape = 'u32[]', space=smem, size = 0x4, offset = 0x4, fixed_abs, tag = 'smem constant byte address 0x4 - core index']
  #allocation1 [shape = 'u32[144,128]{1,0:T(1,128)}', space=vmem, size = 0x12000, scoped, tag = 'internal scratch']
  %s0 = inlined_call_operand.vmem [shape: bf16[2048,6], index: 0, kind: input, shape index: {}]
  %s1 = inlined_call_operand.vmem [shape: bf16[6,64], index: 1, kind: input, shape index: {}]
  %s2 = inlined_call_operand.vmem [shape: f32[1,64], index: 2, kind: input, shape index: {}]
  %s3 = inlined_call_operand.vmem [shape: bf16[64,128], index: 3, kind: input, shape index: {}]
  %s4 = inlined_call_operand.vmem [shape: f32[1,128], index: 4, kind: input, shape index: {}]
  %s5 = inlined_call_operand.hbm [shape: bf16[2048,128], index: 5, kind: output, shape index: {}]
  %s6 = sld [smem:[#allocation0]]
  $region53: #{tpu_custom_call.1} parent=0
    _
  %s8 = ssub.s32 1, %s6
  %s9 = scalar_select 0, %s8, %s6
  $region1: #{tpu_custom_call.1} parent=0
    #allocation2 [shape = 'u8[524288]{0}', space=vmem, size = 0x80000, scoped, tag = 'output window, operand 0']
    #allocation3 [shape = 's32[2]{0}', space=sflag, size = 0x8, scoped, tag = 'scoped memory for tpu_custom_call.1']
    %10 = vsyncpa [#allocation3], 0
    %s11 = scalar_lea.sflag [#allocation3], 1
    %12 = vsyncpa %s11, 0
    loop: start=0, step=1, limit=4
    $region2: #{tpu_custom_call.1} parent=1 // loop_pre_header
      _
    $region3: #{tpu_custom_call.1} parent=1 // loop_header
      %s14 = sphi 0, %s18
      %p15 = scmp.ge.s32.totalorder %s14, 4
      %s24 = sphi 0, %s26
      %s27 = sphi 0, %s24
      %s28 = sphi 0, %s27
      %s44 = sphi 0, %s28
      %s48 = sphi 0, %s48
      %s50 = sphi 0, %s48
      %s51 = sphi 0, %s50
      %s65 = sphi 0, %s51
      %s69 = sphi 0, %s69
      %s71 = sphi 0, %s69
      %s72 = sphi 0, %s71
      %s86 = sphi 0, %s72
      %s90 = sphi 0, %s90
      %s92 = sphi 0, %s90
      %s93 = sphi 0, %s92
      %s107 = sphi 0, %s93
      %s111 = sphi 0, %s111
      %s113 = sphi 0, %s111
      %s114 = sphi 0, %s113
      %s128 = sphi 0, %s114
      %s134 = sphi 0, %s136
      %s137 = sphi 0, %s134
      %s138 = sphi 0, %s137
      %s154 = sphi 0, %s138
    $region4: #{tpu_custom_call.1} parent=1 // loop_header_branch
      %17 = sbr.rel (%p15) target = $region8
    $region5: #{tpu_custom_call.1} parent=1 // loop_body
      %s19 = ssub.s32 %s14, 1
      %s20 = ssub.s32 %s14, 2
      %s21 = sadd.s32 %s14, 1
      %s22 = ssub.s32 %s14, %s21
      %p23 = scmp.eq.s32.totalorder %s22, 0
      %s25 = sadd.s32 %s24, 1
      %s26 = scalar_select %p23, %s24, %s25
      %p29 = pneg %p23
      %p30 = scmp.eq.s32.totalorder %s14, 1
      %p31 = por %p29, %p30
      %p32 = scmp.ne.s32.totalorder %s24, %s27
      %p33 = scmp.eq.s32.totalorder %s14, 0
      %p34 = por %p32, %p33
      %p35 = scmp.ne.s32.totalorder %s24, %s27
      %p36 = scmp.eq.s32.totalorder %s19, 1
      %p37 = por %p35, %p36
      %p38 = scmp.ne.s32.totalorder %s27, %s28
      %p39 = scmp.eq.s32.totalorder %s19, 0
      %p40 = por %p38, %p39
      %p41 = scmp.ne.s32.totalorder %s27, %s28
      %p42 = scmp.eq.s32.totalorder %s20, 1
      %p43 = por %p41, %p42
      %p45 = scmp.ne.s32.totalorder %s28, %s44
      %p46 = scmp.eq.s32.totalorder %s20, 0
      %p47 = por %p45, %p46
      %s49 = sadd.s32 %s48, 1
      %p52 = scmp.eq.s32.totalorder %s14, 1
      %p53 = scmp.ne.s32.totalorder %s48, %s50
      %p54 = scmp.eq.s32.totalorder %s14, 0
      %p55 = por %p53, %p54
      %p56 = scmp.ne.s32.totalorder %s48, %s50
      %p57 = scmp.eq.s32.totalorder %s19, 1
      %p58 = por %p56, %p57
      %p59 = scmp.ne.s32.totalorder %s50, %s51
      %p60 = scmp.eq.s32.totalorder %s19, 0
      %p61 = por %p59, %p60
      %p62 = scmp.ne.s32.totalorder %s50, %s51
      %p63 = scmp.eq.s32.totalorder %s20, 1
      %p64 = por %p62, %p63
      %p66 = scmp.ne.s32.totalorder %s51, %s65
      %p67 = scmp.eq.s32.totalorder %s20, 0
      %p68 = por %p66, %p67
      %s70 = sadd.s32 %s69, 1
      %p73 = scmp.eq.s32.totalorder %s14, 1
      %p74 = scmp.ne.s32.totalorder %s69, %s71
      %p75 = scmp.eq.s32.totalorder %s14, 0
      %p76 = por %p74, %p75
      %p77 = scmp.ne.s32.totalorder %s69, %s71
      %p78 = scmp.eq.s32.totalorder %s19, 1
      %p79 = por %p77, %p78
      %p80 = scmp.ne.s32.totalorder %s71, %s72
      %p81 = scmp.eq.s32.totalorder %s19, 0
      %p82 = por %p80, %p81
      %p83 = scmp.ne.s32.totalorder %s71, %s72
      %p84 = scmp.eq.s32.totalorder %s20, 1
      %p85 = por %p83, %p84
      %p87 = scmp.ne.s32.totalorder %s72, %s86
      %p88 = scmp.eq.s32.totalorder %s20, 0
      %p89 = por %p87, %p88
      %s91 = sadd.s32 %s90, 1
      %p94 = scmp.eq.s32.totalorder %s14, 1
      %p95 = scmp.ne.s32.totalorder %s90, %s92
      %p96 = scmp.eq.s32.totalorder %s14, 0
      %p97 = por %p95, %p96
      %p98 = scmp.ne.s32.totalorder %s90, %s92
      %p99 = scmp.eq.s32.totalorder %s19, 1
      %p100 = por %p98, %p99
      %p101 = scmp.ne.s32.totalorder %s92, %s93
      %p102 = scmp.eq.s32.totalorder %s19, 0
      %p103 = por %p101, %p102
      %p104 = scmp.ne.s32.totalorder %s92, %s93
      %p105 = scmp.eq.s32.totalorder %s20, 1
      %p106 = por %p104, %p105
      %p108 = scmp.ne.s32.totalorder %s93, %s107
      %p109 = scmp.eq.s32.totalorder %s20, 0
      %p110 = por %p108, %p109
      %s112 = sadd.s32 %s111, 1
      %p115 = scmp.eq.s32.totalorder %s14, 1
      %p116 = scmp.ne.s32.totalorder %s111, %s113
      %p117 = scmp.eq.s32.totalorder %s14, 0
      %p118 = por %p116, %p117
      %p119 = scmp.ne.s32.totalorder %s111, %s113
      %p120 = scmp.eq.s32.totalorder %s19, 1
      %p121 = por %p119, %p120
      %p122 = scmp.ne.s32.totalorder %s113, %s114
      %p123 = scmp.eq.s32.totalorder %s19, 0
      %p124 = por %p122, %p123
      %p125 = scmp.ne.s32.totalorder %s113, %s114
      %p126 = scmp.eq.s32.totalorder %s20, 1
      %p127 = por %p125, %p126
      %p129 = scmp.ne.s32.totalorder %s114, %s128
      %p130 = scmp.eq.s32.totalorder %s20, 0
      %p131 = por %p129, %p130
      %s132 = ssub.s32 %s14, %s21
      %p133 = scmp.eq.s32.totalorder %s132, 0
      %s135 = sadd.s32 %s134, 1
      %s136 = scalar_select %p133, %s134, %s135
      %p139 = pneg %p133
      %p140 = scmp.eq.s32.totalorder %s14, 1
      %p141 = por %p139, %p140
      %p142 = scmp.ne.s32.totalorder %s134, %s137
      %p143 = scmp.eq.s32.totalorder %s14, 0
      %p144 = por %p142, %p143
      %p145 = scmp.ne.s32.totalorder %s134, %s137
      %p146 = scmp.eq.s32.totalorder %s19, 1
      %p147 = por %p145, %p146
      %p148 = scmp.ne.s32.totalorder %s137, %s138
      %p149 = scmp.eq.s32.totalorder %s19, 0
      %p150 = por %p148, %p149
      %p151 = scmp.ne.s32.totalorder %s137, %s138
      %p152 = scmp.eq.s32.totalorder %s20, 1
      %p153 = por %p151, %p152
      %p155 = scmp.ne.s32.totalorder %s138, %s154
      %p156 = scmp.eq.s32.totalorder %s20, 0
      %p157 = por %p155, %p156
      %p158 = scmp.le.s32.totalorder 1, %s14
      %p159 = scmp.lt.s32.totalorder %s14, 3
      %p160 = pnand %p158, %p159
      %p161 = pneg %p160
      // Predicated region
      $region9: #{tpu_custom_call.1} parent=5 // pred_check
        _
      $region10: #{tpu_custom_call.1} parent=5 // pred_check_branch
        %163 = sbr.rel (%p160) target = $region12
      $region11: #{tpu_custom_call.1} parent=5 // pred_region
        %s164 = ssub.s32 %s14, 1
        // Predicated region
        $region13: #{tpu_custom_call.1} parent=11 // pred_check
          %p165 = pneg %p61
        $region14: #{tpu_custom_call.1} parent=11 // pred_check_branch
          %167 = sbr.rel (%p165) target = $region16
        $region15: #{tpu_custom_call.1} parent=11 // pred_region
          _
        $region16: #{tpu_custom_call.1} parent=11 // pred_fallthru
          _
        // Predicated region
        $region17: #{tpu_custom_call.1} parent=11 // pred_check
          %p168 = pneg %p82
        $region18: #{tpu_custom_call.1} parent=11 // pred_check_branch
          %170 = sbr.rel (%p168) target = $region20
        $region19: #{tpu_custom_call.1} parent=11 // pred_region
          _
        $region20: #{tpu_custom_call.1} parent=11 // pred_fallthru
          _
        // Predicated region
        $region21: #{tpu_custom_call.1} parent=11 // pred_check
          %p171 = pneg %p103
        $region22: #{tpu_custom_call.1} parent=11 // pred_check_branch
          %173 = sbr.rel (%p171) target = $region24
        $region23: #{tpu_custom_call.1} parent=11 // pred_region
          _
        $region24: #{tpu_custom_call.1} parent=11 // pred_fallthru
          _
        // Predicated region
        $region25: #{tpu_custom_call.1} parent=11 // pred_check
          %p174 = pneg %p124
        $region26: #{tpu_custom_call.1} parent=11 // pred_check_branch
          %176 = sbr.rel (%p174) target = $region28
        $region27: #{tpu_custom_call.1} parent=11 // pred_region
          _
        $region28: #{tpu_custom_call.1} parent=11 // pred_fallthru
          _
      $region12: #{tpu_custom_call.1} parent=5 // pred_fallthru
        _
      %p177 = scmp.lt.s32.totalorder %s14, 2
      // Predicated region
      $region29: #{tpu_custom_call.1} parent=5 // pred_check
        %p178 = pneg %p177
      $region30: #{tpu_custom_call.1} parent=5 // pred_check_branch
        %180 = sbr.rel (%p178) target = $region32
      $region31: #{tpu_custom_call.1} parent=5 // pred_region
        // Predicated region
        $region33: #{tpu_custom_call.1} parent=31 // pred_check
          %p181 = pneg %p34
        $region34: #{tpu_custom_call.1} parent=31 // pred_check_branch
          %183 = sbr.rel (%p181) target = $region36
        $region35: #{tpu_custom_call.1} parent=31 // pred_region
          %s184 = smul.u32 128, %s14
          %p185 = scmp.lt.s32.totalorder %s184, 255
          %s186 = scalar_select %p185, %s184, 255
          %s187 = smul.addr %s186, 4
          %s188 = scalar_lea.vmem %s0, %s187
          %s189 = smul.u32 128, %s14
        $region36: #{tpu_custom_call.1} parent=31 // pred_fallthru
          _
      $region32: #{tpu_custom_call.1} parent=5 // pred_fallthru
        _
      %p190 = scmp.le.s32.totalorder 1, %s14
      %p191 = scmp.lt.s32.totalorder %s14, 3
      %p192 = pnand %p190, %p191
      %p193 = pneg %p192
      // Predicated region
      $region37: #{tpu_custom_call.1} parent=5 // pred_check
        _
      $region38: #{tpu_custom_call.1} parent=5 // pred_check_branch
        %195 = sbr.rel (%p192) target = $region40
      $region39: #{tpu_custom_call.1} parent=5 // pred_region
        %s196 = ssub.s32 %s14, 1
        %s197 = smul.u32 128, %s19
        %p198 = scmp.lt.s32.totalorder %s197, 255
        %s199 = scalar_select %p198, %s197, 255
        %s200 = smul.addr %s199, 4
        %s201 = scalar_lea.vmem %s0, %s200
        %p202 = pneg %p40
        %p203 = pneg %p37
        %p204 = pneg %p61
        %p205 = pneg %p58
        %p206 = pneg %p82
        %p207 = pneg %p79
        %p208 = pneg %p103
        %p209 = pneg %p100
        %p210 = pneg %p124
        %p211 = pneg %p121
        %p212 = pneg %p150
        %p213 = pneg %p147
        %s214 = sand.u32 %s137, 1
        %s215 = scalar_lea.sflag [#allocation3], %s214
        %s216 = sand.u32 %s137, 1
        %s217 = smul.addr %s216, 512
        %s218 = scalar_lea.vmem [#allocation2], %s217
        %s219 = smul.u32 128, %s19
        %p220 = scmp.lt.s32.totalorder %s219, 255
        %s221 = scalar_select %p220, %s219, 255
        %s222 = smul.addr %s221, 4
        %s223 = scalar_lea.vmem %s0, %s222
        %s224 = smul.u32 128, %s19
        %s225 = smul.u32 128, %s19
        %v227 = vld [vmem:[%s223] sm:$0xf]
        %v228 = vld [vmem:[%s223 + $0x4] sm:$0xf]
        %v229 = vld [vmem:[%s223 + $0x8] sm:$0xf]
        %v230 = vld [vmem:[%s223 + $0xc] sm:$0xf]
        %v231 = vld [vmem:[%s223 + $0x10] sm:$0xf]
        %v232 = vld [vmem:[%s223 + $0x14] sm:$0xf]
        %v233 = vld [vmem:[%s223 + $0x18] sm:$0xf]
        %v234 = vld [vmem:[%s223 + $0x1c] sm:$0xf]
        %v235 = vld [vmem:[%s223 + $0x20] sm:$0xf]
        %v236 = vld [vmem:[%s223 + $0x24] sm:$0xf]
        %v237 = vld [vmem:[%s223 + $0x28] sm:$0xf]
        %v238 = vld [vmem:[%s223 + $0x2c] sm:$0xf]
        %v239 = vld [vmem:[%s223 + $0x30] sm:$0xf]
        %v240 = vld [vmem:[%s223 + $0x34] sm:$0xf]
        %v241 = vld [vmem:[%s223 + $0x38] sm:$0xf]
        %v242 = vld [vmem:[%s223 + $0x3c] sm:$0xf]
        %v243 = vld [vmem:[%s223 + $0x40] sm:$0xf]
        %v244 = vld [vmem:[%s223 + $0x44] sm:$0xf]
        %v245 = vld [vmem:[%s223 + $0x48] sm:$0xf]
        %v246 = vld [vmem:[%s223 + $0x4c] sm:$0xf]
        %v247 = vld [vmem:[%s223 + $0x50] sm:$0xf]
        %v248 = vld [vmem:[%s223 + $0x54] sm:$0xf]
        %v249 = vld [vmem:[%s223 + $0x58] sm:$0xf]
        %v250 = vld [vmem:[%s223 + $0x5c] sm:$0xf]
        %v251 = vld [vmem:[%s223 + $0x60] sm:$0xf]
        %v252 = vld [vmem:[%s223 + $0x64] sm:$0xf]
        %v253 = vld [vmem:[%s223 + $0x68] sm:$0xf]
        %v254 = vld [vmem:[%s223 + $0x6c] sm:$0xf]
        %v255 = vld [vmem:[%s223 + $0x70] sm:$0xf]
        %v256 = vld [vmem:[%s223 + $0x74] sm:$0xf]
        %v257 = vld [vmem:[%s223 + $0x78] sm:$0xf]
        %v258 = vld [vmem:[%s223 + $0x7c] sm:$0xf]
        %v259 = vld [vmem:[%s223 + $0x80] sm:$0xf]
        %v260 = vld [vmem:[%s223 + $0x84] sm:$0xf]
        %v261 = vld [vmem:[%s223 + $0x88] sm:$0xf]
        %v262 = vld [vmem:[%s223 + $0x8c] sm:$0xf]
        %v263 = vld [vmem:[%s223 + $0x90] sm:$0xf]
        %v264 = vld [vmem:[%s223 + $0x94] sm:$0xf]
        %v265 = vld [vmem:[%s223 + $0x98] sm:$0xf]
        %v266 = vld [vmem:[%s223 + $0x9c] sm:$0xf]
        %v267 = vld [vmem:[%s223 + $0xa0] sm:$0xf]
        %v268 = vld [vmem:[%s223 + $0xa4] sm:$0xf]
        %v269 = vld [vmem:[%s223 + $0xa8] sm:$0xf]
        %v270 = vld [vmem:[%s223 + $0xac] sm:$0xf]
        %v271 = vld [vmem:[%s223 + $0xb0] sm:$0xf]
        %v272 = vld [vmem:[%s223 + $0xb4] sm:$0xf]
        %v273 = vld [vmem:[%s223 + $0xb8] sm:$0xf]
        %v274 = vld [vmem:[%s223 + $0xbc] sm:$0xf]
        %v275 = vld [vmem:[%s223 + $0xc0] sm:$0xf]
        %v276 = vld [vmem:[%s223 + $0xc4] sm:$0xf]
        %v277 = vld [vmem:[%s223 + $0xc8] sm:$0xf]
        %v278 = vld [vmem:[%s223 + $0xcc] sm:$0xf]
        %v279 = vld [vmem:[%s223 + $0xd0] sm:$0xf]
        %v280 = vld [vmem:[%s223 + $0xd4] sm:$0xf]
        %v281 = vld [vmem:[%s223 + $0xd8] sm:$0xf]
        %v282 = vld [vmem:[%s223 + $0xdc] sm:$0xf]
        %v283 = vld [vmem:[%s223 + $0xe0] sm:$0xf]
        %v284 = vld [vmem:[%s223 + $0xe4] sm:$0xf]
        %v285 = vld [vmem:[%s223 + $0xe8] sm:$0xf]
        %v286 = vld [vmem:[%s223 + $0xec] sm:$0xf]
        %v287 = vld [vmem:[%s223 + $0xf0] sm:$0xf]
        %v288 = vld [vmem:[%s223 + $0xf4] sm:$0xf]
        %v289 = vld [vmem:[%s223 + $0xf8] sm:$0xf]
        %v290 = vld [vmem:[%s223 + $0xfc] sm:$0xf]
        %v291 = vld [vmem:[%s223 + $0x100] sm:$0xf]
        %v292 = vld [vmem:[%s223 + $0x104] sm:$0xf]
        %v293 = vld [vmem:[%s223 + $0x108] sm:$0xf]
        %v294 = vld [vmem:[%s223 + $0x10c] sm:$0xf]
        %v295 = vld [vmem:[%s223 + $0x110] sm:$0xf]
        %v296 = vld [vmem:[%s223 + $0x114] sm:$0xf]
        %v297 = vld [vmem:[%s223 + $0x118] sm:$0xf]
        %v298 = vld [vmem:[%s223 + $0x11c] sm:$0xf]
        %v299 = vld [vmem:[%s223 + $0x120] sm:$0xf]
        %v300 = vld [vmem:[%s223 + $0x124] sm:$0xf]
        %v301 = vld [vmem:[%s223 + $0x128] sm:$0xf]
        %v302 = vld [vmem:[%s223 + $0x12c] sm:$0xf]
        %v303 = vld [vmem:[%s223 + $0x130] sm:$0xf]
        %v304 = vld [vmem:[%s223 + $0x134] sm:$0xf]
        %v305 = vld [vmem:[%s223 + $0x138] sm:$0xf]
        %v306 = vld [vmem:[%s223 + $0x13c] sm:$0xf]
        %v307 = vld [vmem:[%s223 + $0x140] sm:$0xf]
        %v308 = vld [vmem:[%s223 + $0x144] sm:$0xf]
        %v309 = vld [vmem:[%s223 + $0x148] sm:$0xf]
        %v310 = vld [vmem:[%s223 + $0x14c] sm:$0xf]
        %v311 = vld [vmem:[%s223 + $0x150] sm:$0xf]
        %v312 = vld [vmem:[%s223 + $0x154] sm:$0xf]
        %v313 = vld [vmem:[%s223 + $0x158] sm:$0xf]
        %v314 = vld [vmem:[%s223 + $0x15c] sm:$0xf]
        %v315 = vld [vmem:[%s223 + $0x160] sm:$0xf]
        %v316 = vld [vmem:[%s223 + $0x164] sm:$0xf]
        %v317 = vld [vmem:[%s223 + $0x168] sm:$0xf]
        %v318 = vld [vmem:[%s223 + $0x16c] sm:$0xf]
        %v319 = vld [vmem:[%s223 + $0x170] sm:$0xf]
        %v320 = vld [vmem:[%s223 + $0x174] sm:$0xf]
        %v321 = vld [vmem:[%s223 + $0x178] sm:$0xf]
        %v322 = vld [vmem:[%s223 + $0x17c] sm:$0xf]
        %v323 = vld [vmem:[%s223 + $0x180] sm:$0xf]
        %v324 = vld [vmem:[%s223 + $0x184] sm:$0xf]
        %v325 = vld [vmem:[%s223 + $0x188] sm:$0xf]
        %v326 = vld [vmem:[%s223 + $0x18c] sm:$0xf]
        %v327 = vld [vmem:[%s223 + $0x190] sm:$0xf]
        %v328 = vld [vmem:[%s223 + $0x194] sm:$0xf]
        %v329 = vld [vmem:[%s223 + $0x198] sm:$0xf]
        %v330 = vld [vmem:[%s223 + $0x19c] sm:$0xf]
        %v331 = vld [vmem:[%s223 + $0x1a0] sm:$0xf]
        %v332 = vld [vmem:[%s223 + $0x1a4] sm:$0xf]
        %v333 = vld [vmem:[%s223 + $0x1a8] sm:$0xf]
        %v334 = vld [vmem:[%s223 + $0x1ac] sm:$0xf]
        %v335 = vld [vmem:[%s223 + $0x1b0] sm:$0xf]
        %v336 = vld [vmem:[%s223 + $0x1b4] sm:$0xf]
        %v337 = vld [vmem:[%s223 + $0x1b8] sm:$0xf]
        %v338 = vld [vmem:[%s223 + $0x1bc] sm:$0xf]
        %v339 = vld [vmem:[%s223 + $0x1c0] sm:$0xf]
        %v340 = vld [vmem:[%s223 + $0x1c4] sm:$0xf]
        %v341 = vld [vmem:[%s223 + $0x1c8] sm:$0xf]
        %v342 = vld [vmem:[%s223 + $0x1cc] sm:$0xf]
        %v343 = vld [vmem:[%s223 + $0x1d0] sm:$0xf]
        %v344 = vld [vmem:[%s223 + $0x1d4] sm:$0xf]
        %v345 = vld [vmem:[%s223 + $0x1d8] sm:$0xf]
        %v346 = vld [vmem:[%s223 + $0x1dc] sm:$0xf]
        %v347 = vld [vmem:[%s223 + $0x1e0] sm:$0xf]
        %v348 = vld [vmem:[%s223 + $0x1e4] sm:$0xf]
        %v349 = vld [vmem:[%s223 + $0x1e8] sm:$0xf]
        %v350 = vld [vmem:[%s223 + $0x1ec] sm:$0xf]
        %v351 = vld [vmem:[%s223 + $0x1f0] sm:$0xf]
        %v352 = vld [vmem:[%s223 + $0x1f4] sm:$0xf]
        %v353 = vld [vmem:[%s223 + $0x1f8] sm:$0xf]
        %v354 = vld [vmem:[%s223 + $0x1fc] sm:$0xf]
        %v355 = vld [vmem:[%s1] sm:$0x7]
        %v356 = vld [vmem:[%s2] sm:$0x1]
        %v358 = vlaneseq
        %v359 = vshrl.u32 %v358, 7
        %v360 = vsub.s32 0, %v359
        %v361 = vrot.slane %v356, %v360
        %v491 = vunpack.c.l.b16 %v227
        %v492 = vunpack.c.l.b16 %v228
        %v493 = vunpack.c.l.b16 %v229
        %v494 = vunpack.c.l.b16 %v230
        %v495 = vunpack.c.l.b16 %v231
        %v496 = vunpack.c.l.b16 %v232
        %v497 = vunpack.c.l.b16 %v233
        %v498 = vunpack.c.l.b16 %v234
        %v499 = vunpack.c.l.b16 %v235
        %v500 = vunpack.c.l.b16 %v236
        %v501 = vunpack.c.l.b16 %v237
        %v502 = vunpack.c.l.b16 %v238
        %v503 = vunpack.c.l.b16 %v239
        %v504 = vunpack.c.l.b16 %v240
        %v505 = vunpack.c.l.b16 %v241
        %v506 = vunpack.c.l.b16 %v242
        %v507 = vunpack.c.l.b16 %v243
        %v508 = vunpack.c.l.b16 %v244
        %v509 = vunpack.c.l.b16 %v245
        %v510 = vunpack.c.l.b16 %v246
        %v511 = vunpack.c.l.b16 %v247
        %v512 = vunpack.c.l.b16 %v248
        %v513 = vunpack.c.l.b16 %v249
        %v514 = vunpack.c.l.b16 %v250
        %v515 = vunpack.c.l.b16 %v251
        %v516 = vunpack.c.l.b16 %v252
        %v517 = vunpack.c.l.b16 %v253
        %v518 = vunpack.c.l.b16 %v254
        %v519 = vunpack.c.l.b16 %v255
        %v520 = vunpack.c.l.b16 %v256
        %v521 = vunpack.c.l.b16 %v257
        %v522 = vunpack.c.l.b16 %v258
        %v523 = vunpack.c.l.b16 %v259
        %v524 = vunpack.c.l.b16 %v260
        %v525 = vunpack.c.l.b16 %v261
        %v526 = vunpack.c.l.b16 %v262
        %v527 = vunpack.c.l.b16 %v263
        %v528 = vunpack.c.l.b16 %v264
        %v529 = vunpack.c.l.b16 %v265
        %v530 = vunpack.c.l.b16 %v266
        %v531 = vunpack.c.l.b16 %v267
        %v532 = vunpack.c.l.b16 %v268
        %v533 = vunpack.c.l.b16 %v269
        %v534 = vunpack.c.l.b16 %v270
        %v535 = vunpack.c.l.b16 %v271
        %v536 = vunpack.c.l.b16 %v272
        %v537 = vunpack.c.l.b16 %v273
        %v538 = vunpack.c.l.b16 %v274
        %v539 = vunpack.c.l.b16 %v275
        %v540 = vunpack.c.l.b16 %v276
        %v541 = vunpack.c.l.b16 %v277
        %v542 = vunpack.c.l.b16 %v278
        %v543 = vunpack.c.l.b16 %v279
        %v544 = vunpack.c.l.b16 %v280
        %v545 = vunpack.c.l.b16 %v281
        %v546 = vunpack.c.l.b16 %v282
        %v547 = vunpack.c.l.b16 %v283
        %v548 = vunpack.c.l.b16 %v284
        %v549 = vunpack.c.l.b16 %v285
        %v550 = vunpack.c.l.b16 %v286
        %v551 = vunpack.c.l.b16 %v287
        %v552 = vunpack.c.l.b16 %v288
        %v553 = vunpack.c.l.b16 %v289
        %v554 = vunpack.c.l.b16 %v290
        %v555 = vunpack.c.l.b16 %v291
        %v556 = vunpack.c.l.b16 %v292
        %v557 = vunpack.c.l.b16 %v293
        %v558 = vunpack.c.l.b16 %v294
        %v559 = vunpack.c.l.b16 %v295
        %v560 = vunpack.c.l.b16 %v296
        %v561 = vunpack.c.l.b16 %v297
        %v562 = vunpack.c.l.b16 %v298
        %v563 = vunpack.c.l.b16 %v299
        %v564 = vunpack.c.l.b16 %v300
        %v565 = vunpack.c.l.b16 %v301
        %v566 = vunpack.c.l.b16 %v302
        %v567 = vunpack.c.l.b16 %v303
        %v568 = vunpack.c.l.b16 %v304
        %v569 = vunpack.c.l.b16 %v305
        %v570 = vunpack.c.l.b16 %v306
        %v571 = vunpack.c.l.b16 %v307
        %v572 = vunpack.c.l.b16 %v308
        %v573 = vunpack.c.l.b16 %v309
        %v574 = vunpack.c.l.b16 %v310
        %v575 = vunpack.c.l.b16 %v311
        %v576 = vunpack.c.l.b16 %v312
        %v577 = vunpack.c.l.b16 %v313
        %v578 = vunpack.c.l.b16 %v314
        %v579 = vunpack.c.l.b16 %v315
        %v580 = vunpack.c.l.b16 %v316
        %v581 = vunpack.c.l.b16 %v317
        %v582 = vunpack.c.l.b16 %v318
        %v583 = vunpack.c.l.b16 %v319
        %v584 = vunpack.c.l.b16 %v320
        %v585 = vunpack.c.l.b16 %v321
        %v586 = vunpack.c.l.b16 %v322
        %v587 = vunpack.c.l.b16 %v323
        %v588 = vunpack.c.l.b16 %v324
        %v589 = vunpack.c.l.b16 %v325
        %v590 = vunpack.c.l.b16 %v326
        %v591 = vunpack.c.l.b16 %v327
        %v592 = vunpack.c.l.b16 %v328
        %v593 = vunpack.c.l.b16 %v329
        %v594 = vunpack.c.l.b16 %v330
        %v595 = vunpack.c.l.b16 %v331
        %v596 = vunpack.c.l.b16 %v332
        %v597 = vunpack.c.l.b16 %v333
        %v598 = vunpack.c.l.b16 %v334
        %v599 = vunpack.c.l.b16 %v335
        %v600 = vunpack.c.l.b16 %v336
        %v601 = vunpack.c.l.b16 %v337
        %v602 = vunpack.c.l.b16 %v338
        %v603 = vunpack.c.l.b16 %v339
        %v604 = vunpack.c.l.b16 %v340
        %v605 = vunpack.c.l.b16 %v341
        %v606 = vunpack.c.l.b16 %v342
        %v607 = vunpack.c.l.b16 %v343
        %v608 = vunpack.c.l.b16 %v344
        %v609 = vunpack.c.l.b16 %v345
        %v610 = vunpack.c.l.b16 %v346
        %v611 = vunpack.c.l.b16 %v347
        %v612 = vunpack.c.l.b16 %v348
        %v613 = vunpack.c.l.b16 %v349
        %v614 = vunpack.c.l.b16 %v350
        %v615 = vunpack.c.l.b16 %v351
        %v616 = vunpack.c.l.b16 %v352
        %v617 = vunpack.c.l.b16 %v353
        %v618 = vunpack.c.l.b16 %v354
        %v619 = vpack.c.b16 %v492, %v491
        %v620 = vpack.c.b16 %v494, %v493
        %v621 = vpack.c.b16 %v496, %v495
        %v622 = vpack.c.b16 %v498, %v497
        %v623 = vpack.c.b16 %v500, %v499
        %v624 = vpack.c.b16 %v502, %v501
        %v625 = vpack.c.b16 %v504, %v503
        %v626 = vpack.c.b16 %v506, %v505
        %v627 = vpack.c.b16 %v508, %v507
        %v628 = vpack.c.b16 %v510, %v509
        %v629 = vpack.c.b16 %v512, %v511
        %v630 = vpack.c.b16 %v514, %v513
        %v631 = vpack.c.b16 %v516, %v515
        %v632 = vpack.c.b16 %v518, %v517
        %v633 = vpack.c.b16 %v520, %v519
        %v634 = vpack.c.b16 %v522, %v521
        %v635 = vpack.c.b16 %v524, %v523
        %v636 = vpack.c.b16 %v526, %v525
        %v637 = vpack.c.b16 %v528, %v527
        %v638 = vpack.c.b16 %v530, %v529
        %v639 = vpack.c.b16 %v532, %v531
        %v640 = vpack.c.b16 %v534, %v533
        %v641 = vpack.c.b16 %v536, %v535
        %v642 = vpack.c.b16 %v538, %v537
        %v643 = vpack.c.b16 %v540, %v539
        %v644 = vpack.c.b16 %v542, %v541
        %v645 = vpack.c.b16 %v544, %v543
        %v646 = vpack.c.b16 %v546, %v545
        %v647 = vpack.c.b16 %v548, %v547
        %v648 = vpack.c.b16 %v550, %v549
        %v649 = vpack.c.b16 %v552, %v551
        %v650 = vpack.c.b16 %v554, %v553
        %v651 = vpack.c.b16 %v556, %v555
        %v652 = vpack.c.b16 %v558, %v557
        %v653 = vpack.c.b16 %v560, %v559
        %v654 = vpack.c.b16 %v562, %v561
        %v655 = vpack.c.b16 %v564, %v563
        %v656 = vpack.c.b16 %v566, %v565
        %v657 = vpack.c.b16 %v568, %v567
        %v658 = vpack.c.b16 %v570, %v569
        %v659 = vpack.c.b16 %v572, %v571
        %v660 = vpack.c.b16 %v574, %v573
        %v661 = vpack.c.b16 %v576, %v575
        %v662 = vpack.c.b16 %v578, %v577
        %v663 = vpack.c.b16 %v580, %v579
        %v664 = vpack.c.b16 %v582, %v581
        %v665 = vpack.c.b16 %v584, %v583
        %v666 = vpack.c.b16 %v586, %v585
        %v667 = vpack.c.b16 %v588, %v587
        %v668 = vpack.c.b16 %v590, %v589
        %v669 = vpack.c.b16 %v592, %v591
        %v670 = vpack.c.b16 %v594, %v593
        %v671 = vpack.c.b16 %v596, %v595
        %v672 = vpack.c.b16 %v598, %v597
        %v673 = vpack.c.b16 %v600, %v599
        %v674 = vpack.c.b16 %v602, %v601
        %v675 = vpack.c.b16 %v604, %v603
        %v676 = vpack.c.b16 %v606, %v605
        %v677 = vpack.c.b16 %v608, %v607
        %v678 = vpack.c.b16 %v610, %v609
        %v679 = vpack.c.b16 %v612, %v611
        %v680 = vpack.c.b16 %v614, %v613
        %v681 = vpack.c.b16 %v616, %v615
        %v682 = vpack.c.b16 %v618, %v617
        %vm683 = vcmask 48128
        %v685 = vsel %vm683, %v619, 0
        %v688 = vsel %vm683, %v620, 0
        %v691 = vsel %vm683, %v621, 0
        %v694 = vsel %vm683, %v622, 0
        %v697 = vsel %vm683, %v623, 0
        %v700 = vsel %vm683, %v624, 0
        %v703 = vsel %vm683, %v625, 0
        %v706 = vsel %vm683, %v626, 0
        %v709 = vsel %vm683, %v627, 0
        %v712 = vsel %vm683, %v628, 0
        %v715 = vsel %vm683, %v629, 0
        %v718 = vsel %vm683, %v630, 0
        %v721 = vsel %vm683, %v631, 0
        %v724 = vsel %vm683, %v632, 0
        %v727 = vsel %vm683, %v633, 0
        %v730 = vsel %vm683, %v634, 0
        %v733 = vsel %vm683, %v635, 0
        %v736 = vsel %vm683, %v636, 0
        %v739 = vsel %vm683, %v637, 0
        %v742 = vsel %vm683, %v638, 0
        %v745 = vsel %vm683, %v639, 0
        %v748 = vsel %vm683, %v640, 0
        %v751 = vsel %vm683, %v641, 0
        %v754 = vsel %vm683, %v642, 0
        %v757 = vsel %vm683, %v643, 0
        %v760 = vsel %vm683, %v644, 0
        %v763 = vsel %vm683, %v645, 0
        %v766 = vsel %vm683, %v646, 0
        %v769 = vsel %vm683, %v647, 0
        %v772 = vsel %vm683, %v648, 0
        %v775 = vsel %vm683, %v649, 0
        %v778 = vsel %vm683, %v650, 0
        %v781 = vsel %vm683, %v651, 0
        %v784 = vsel %vm683, %v652, 0
        %v787 = vsel %vm683, %v653, 0
        %v790 = vsel %vm683, %v654, 0
        %v793 = vsel %vm683, %v655, 0
        %v796 = vsel %vm683, %v656, 0
        %v799 = vsel %vm683, %v657, 0
        %v802 = vsel %vm683, %v658, 0
        %v805 = vsel %vm683, %v659, 0
        %v808 = vsel %vm683, %v660, 0
        %v811 = vsel %vm683, %v661, 0
        %v814 = vsel %vm683, %v662, 0
        %v817 = vsel %vm683, %v663, 0
        %v820 = vsel %vm683, %v664, 0
        %v823 = vsel %vm683, %v665, 0
        %v826 = vsel %vm683, %v666, 0
        %v829 = vsel %vm683, %v667, 0
        %v832 = vsel %vm683, %v668, 0
        %v835 = vsel %vm683, %v669, 0
        %v838 = vsel %vm683, %v670, 0
        %v841 = vsel %vm683, %v671, 0
        %v844 = vsel %vm683, %v672, 0
        %v847 = vsel %vm683, %v673, 0
        %v850 = vsel %vm683, %v674, 0
        %v853 = vsel %vm683, %v675, 0
        %v856 = vsel %vm683, %v676, 0
        %v859 = vsel %vm683, %v677, 0
        %v862 = vsel %vm683, %v678, 0
        %v865 = vsel %vm683, %v679, 0
        %v868 = vsel %vm683, %v680, 0
        %v871 = vsel %vm683, %v681, 0
        %v874 = vsel %vm683, %v682, 0
        %vm876 = vcmask 1042432
        %v878 = vsel %vm876, %v355, 0
        %880 = vmatprep.subr.bf16.mxu0 0
        %881 = vmatpush1.bf16.msra.mxu0 %v878
        %882 = vmatprep.subr.bf16.mxu0 0
        %883 = vmatpush1.bf16.msra.mxu0 0
        %884 = vmatprep.subr.bf16.mxu0 0
        %885 = vmatpush1.bf16.msra.mxu0 0
        %886 = vmatprep.subr.bf16.mxu0 0
        %887 = vmatpush1.bf16.msra.mxu0 0
        %888 = vmatprep.subr.bf16.mxu0 0
        %889 = vmatpush1.bf16.msra.mxu0 0
        %890 = vmatprep.subr.bf16.mxu0 0
        %891 = vmatpush1.bf16.msra.mxu0 0
        %892 = vmatprep.subr.bf16.mxu0 0
        %893 = vmatpush1.bf16.msra.mxu0 0
        %894 = vmatprep.subr.bf16.mxu0 0
        %895 = vmatpush1.bf16.msra.mxu0 0
        %896 = vmatprep.subr.bf16.mxu0 0
        %897 = vmatpush1.bf16.msra.mxu0 0
        %898 = vmatprep.subr.bf16.mxu0 0
        %899 = vmatpush1.bf16.msra.mxu0 0
        %900 = vmatprep.subr.bf16.mxu0 0
        %901 = vmatpush1.bf16.msra.mxu0 0
        %902 = vmatprep.subr.bf16.mxu0 0
        %903 = vmatpush1.bf16.msra.mxu0 0
        %904 = vmatprep.subr.bf16.mxu0 0
        %905 = vmatpush1.bf16.msra.mxu0 0
        %906 = vmatprep.subr.bf16.mxu0 0
        %907 = vmatpush1.bf16.msra.mxu0 0
        %908 = vmatprep.subr.bf16.mxu0 0
        %909 = vmatpush1.bf16.msra.mxu0 0
        %910 = vmatprep.subr.bf16.mxu0 0
        %911 = vmatpush1.bf16.msra.mxu0 0
        %912 = vmatprep.mubr.bf16.mxu0 0
        %913 = vmatmul.mubr.bf16.gmra.mrb[0].mxu0 %v685
        %v914 = vpop.f32.mrb[0].mxu0
        %v915 = vadd.f32 %v361, %v914
        %v916 = vpop.f32.mrb[0].mxu0
        %v917 = vpop.f32.mrb[0].mxu0
        %v918 = vadd.f32 %v361, %v917
        %v919 = vpop.f32.mrb[0].mxu0
        %920 = vmatprep.mubr.bf16.mxu0 0
        %921 = vmatmul.mubr.bf16.gmra.mrb[0].mxu0 %v688
        %v922 = vpop.f32.mrb[0].mxu0
        %v923 = vadd.f32 %v361, %v922
        %v924 = vpop.f32.mrb[0].mxu0
        %v925 = vpop.f32.mrb[0].mxu0
        %v926 = vadd.f32 %v361, %v925
        %v927 = vpop.f32.mrb[0].mxu0
        %928 = vmatprep.mubr.bf16.mxu0 0
        %929 = vmatmul.mubr.bf16.gmra.mrb[0].mxu0 %v691
        %v930 = vpop.f32.mrb[0].mxu0
        %v931 = vadd.f32 %v361, %v930
        %v932 = vpop.f32.mrb[0].mxu0
        %v933 = vpop.f32.mrb[0].mxu0
        %v934 = vadd.f32 %v361, %v933
        %v935 = vpop.f32.mrb[0].mxu0
        %936 = vmatprep.mubr.bf16.mxu0 0
        %937 = vmatmul.mubr.bf16.gmra.mrb[0].mxu0 %v694
        %v938 = vpop.f32.mrb[0].mxu0
        %v939 = vadd.f32 %v361, %v938
        %v940 = vpop.f32.mrb[0].mxu0
        %v941 = vpop.f32.mrb[0].mxu0
        %v942 = vadd.f32 %v361, %v941
        %v943 = vpop.f32.mrb[0].mxu0
        %944 = vmatprep.mubr.bf16.mxu0 0
        %945 = vmatmul.mubr.bf16.gmra.mrb[0].mxu0 %v697
        %v946 = vpop.f32.mrb[0].mxu0
        %v947 = vadd.f32 %v361, %v946
        %v948 = vpop.f32.mrb[0].mxu0
        %v949 = vpop.f32.mrb[0].mxu0
        %v950 = vadd.f32 %v361, %v949
        %v951 = vpop.f32.mrb[0].mxu0
        %952 = vmatprep.mubr.bf16.mxu0 0
        %953 = vmatmul.mubr.bf16.gmra.mrb[0].mxu0 %v700
        %v954 = vpop.f32.mrb[0].mxu0
        %v955 = vadd.f32 %v361, %v954
        %v956 = vpop.f32.mrb[0].mxu0
        %v957 = vpop.f32.mrb[0].mxu0
        %v958 = vadd.f32 %v361, %v957
        %v959 = vpop.f32.mrb[0].mxu0
        %960 = vmatprep.mubr.bf16.mxu0 0
        %961 = vmatmul.mubr.bf16.gmra.mrb[0].mxu0 %v703
        %v962 = vpop.f32.mrb[0].mxu0
        %v963 = vadd.f32 %v361, %v962
        %v964 = vpop.f32.mrb[0].mxu0
        %v965 = vpop.f32.mrb[0].mxu0
        %v966 = vadd.f32 %v361, %v965
        %v967 = vpop.f32.mrb[0].mxu0
        %968 = vmatprep.mubr.bf16.mxu0 0
        %969 = vmatmul.mubr.bf16.gmra.mrb[0].mxu0 %v706
        %v970 = vpop.f32.mrb[0].mxu0
        %v971 = vadd.f32 %v361, %v970
        %v972 = vpop.f32.mrb[0].mxu0
        %v973 = vpop.f32.mrb[0].mxu0
        %v974 = vadd.f32 %v361, %v973
        %v975 = vpop.f32.mrb[0].mxu0
        %976 = vmatprep.mubr.bf16.mxu0 0
        %977 = vmatmul.mubr.bf16.gmra.mrb[0].mxu0 %v709
        %v978 = vpop.f32.mrb[0].mxu0
        %v979 = vadd.f32 %v361, %v978
        %v980 = vpop.f32.mrb[0].mxu0
        %v981 = vpop.f32.mrb[0].mxu0
        %v982 = vadd.f32 %v361, %v981
        %v983 = vpop.f32.mrb[0].mxu0
        %984 = vmatprep.mubr.bf16.mxu0 0
        %985 = vmatmul.mubr.bf16.gmra.mrb[0].mxu0 %v712
        %v986 = vpop.f32.mrb[0].mxu0
        %v987 = vadd.f32 %v361, %v986
        %v988 = vpop.f32.mrb[0].mxu0
        %v989 = vpop.f32.mrb[0].mxu0
        %v990 = vadd.f32 %v361, %v989
        %v991 = vpop.f32.mrb[0].mxu0
        %992 = vmatprep.mubr.bf16.mxu0 0
        %993 = vmatmul.mubr.bf16.gmra.mrb[0].mxu0 %v715
        %v994 = vpop.f32.mrb[0].mxu0
        %v995 = vadd.f32 %v361, %v994
        %v996 = vpop.f32.mrb[0].mxu0
        %v997 = vpop.f32.mrb[0].mxu0
        %v998 = vadd.f32 %v361, %v997
        %v999 = vpop.f32.mrb[0].mxu0
        %1000 = vmatprep.mubr.bf16.mxu0 0
        %1001 = vmatmul.mubr.bf16.gmra.mrb[0].mxu0 %v718
        %v1002 = vpop.f32.mrb[0].mxu0
        %v1003 = vadd.f32 %v361, %v1002
        %v1004 = vpop.f32.mrb[0].mxu0
        %v1005 = vpop.f32.mrb[0].mxu0
        %v1006 = vadd.f32 %v361, %v1005
        %v1007 = vpop.f32.mrb[0].mxu0
        %1008 = vmatprep.mubr.bf16.mxu0 0
        %1009 = vmatmul.mubr.bf16.gmra.mrb[0].mxu0 %v721
        %v1010 = vpop.f32.mrb[0].mxu0
        %v1011 = vadd.f32 %v361, %v1010
        %v1012 = vpop.f32.mrb[0].mxu0
        %v1013 = vpop.f32.mrb[0].mxu0
        %v1014 = vadd.f32 %v361, %v1013
        %v1015 = vpop.f32.mrb[0].mxu0
        %1016 = vmatprep.mubr.bf16.mxu0 0
        %1017 = vmatmul.mubr.bf16.gmra.mrb[0].mxu0 %v724
        %v1018 = vpop.f32.mrb[0].mxu0
        %v1019 = vadd.f32 %v361, %v1018
        %v1020 = vpop.f32.mrb[0].mxu0
        %v1021 = vpop.f32.mrb[0].mxu0
        %v1022 = vadd.f32 %v361, %v1021
        %v1023 = vpop.f32.mrb[0].mxu0
        %1024 = vmatprep.mubr.bf16.mxu0 0
        %1025 = vmatmul.mubr.bf16.gmra.mrb[0].mxu0 %v727
        %v1026 = vpop.f32.mrb[0].mxu0
        %v1027 = vadd.f32 %v361, %v1026
        %v1028 = vpop.f32.mrb[0].mxu0
        %v1029 = vpop.f32.mrb[0].mxu0
        %v1030 = vadd.f32 %v361, %v1029
        %v1031 = vpop.f32.mrb[0].mxu0
        %1032 = vmatprep.mubr.bf16.mxu0 0
        %1033 = vmatmul.mubr.bf16.gmra.mrb[0].mxu0 %v730
        %v1034 = vpop.f32.mrb[0].mxu0
        %v1035 = vadd.f32 %v361, %v1034
        %v1036 = vpop.f32.mrb[0].mxu0
        %v1037 = vpop.f32.mrb[0].mxu0
        %v1038 = vadd.f32 %v361, %v1037
        %v1039 = vpop.f32.mrb[0].mxu0
        %1040 = vmatprep.mubr.bf16.mxu0 0
        %1041 = vmatmul.mubr.bf16.gmra.mrb[0].mxu0 %v733
        %v1042 = vpop.f32.mrb[0].mxu0
        %v1043 = vadd.f32 %v361, %v1042
        %v1044 = vpop.f32.mrb[0].mxu0
        %v1045 = vpop.f32.mrb[0].mxu0
        %v1046 = vadd.f32 %v361, %v1045
        %v1047 = vpop.f32.mrb[0].mxu0
        %1048 = vmatprep.mubr.bf16.mxu0 0
        %1049 = vmatmul.mubr.bf16.gmra.mrb[0].mxu0 %v736
        %v1050 = vpop.f32.mrb[0].mxu0
        %v1051 = vadd.f32 %v361, %v1050
        %v1052 = vpop.f32.mrb[0].mxu0
        %v1053 = vpop.f32.mrb[0].mxu0
        %v1054 = vadd.f32 %v361, %v1053
        %v1055 = vpop.f32.mrb[0].mxu0
        %1056 = vmatprep.mubr.bf16.mxu0 0
        %1057 = vmatmul.mubr.bf16.gmra.mrb[0].mxu0 %v739
        %v1058 = vpop.f32.mrb[0].mxu0
        %v1059 = vadd.f32 %v361, %v1058
        %v1060 = vpop.f32.mrb[0].mxu0
        %v1061 = vpop.f32.mrb[0].mxu0
        %v1062 = vadd.f32 %v361, %v1061
        %v1063 = vpop.f32.mrb[0].mxu0
        %1064 = vmatprep.mubr.bf16.mxu0 0
        %1065 = vmatmul.mubr.bf16.gmra.mrb[0].mxu0 %v742
        %v1066 = vpop.f32.mrb[0].mxu0
        %v1067 = vadd.f32 %v361, %v1066
        %v1068 = vpop.f32.mrb[0].mxu0
        %v1069 = vpop.f32.mrb[0].mxu0
        %v1070 = vadd.f32 %v361, %v1069
        %v1071 = vpop.f32.mrb[0].mxu0
        %1072 = vmatprep.mubr.bf16.mxu0 0
        %1073 = vmatmul.mubr.bf16.gmra.mrb[0].mxu0 %v745
        %v1074 = vpop.f32.mrb[0].mxu0
        %v1075 = vadd.f32 %v361, %v1074
        %v1076 = vpop.f32.mrb[0].mxu0
        %v1077 = vpop.f32.mrb[0].mxu0
        %v1078 = vadd.f32 %v361, %v1077
        %v1079 = vpop.f32.mrb[0].mxu0
        %1080 = vmatprep.mubr.bf16.mxu0 0
        %1081 = vmatmul.mubr.bf16.gmra.mrb[0].mxu0 %v748
        %v1082 = vpop.f32.mrb[0].mxu0
        %v1083 = vadd.f32 %v361, %v1082
        %v1084 = vpop.f32.mrb[0].mxu0
        %v1085 = vpop.f32.mrb[0].mxu0
        %v1086 = vadd.f32 %v361, %v1085
        %v1087 = vpop.f32.mrb[0].mxu0
        %1088 = vmatprep.mubr.bf16.mxu0 0
        %1089 = vmatmul.mubr.bf16.gmra.mrb[0].mxu0 %v751
        %v1090 = vpop.f32.mrb[0].mxu0
        %v1091 = vadd.f32 %v361, %v1090
        %v1092 = vpop.f32.mrb[0].mxu0
        %v1093 = vpop.f32.mrb[0].mxu0
        %v1094 = vadd.f32 %v361, %v1093
        %v1095 = vpop.f32.mrb[0].mxu0
        %1096 = vmatprep.mubr.bf16.mxu0 0
        %1097 = vmatmul.mubr.bf16.gmra.mrb[0].mxu0 %v754
        %v1098 = vpop.f32.mrb[0].mxu0
        %v1099 = vadd.f32 %v361, %v1098
        %v1100 = vpop.f32.mrb[0].mxu0
        %v1101 = vpop.f32.mrb[0].mxu0
        %v1102 = vadd.f32 %v361, %v1101
        %v1103 = vpop.f32.mrb[0].mxu0
        %1104 = vmatprep.mubr.bf16.mxu0 0
        %1105 = vmatmul.mubr.bf16.gmra.mrb[0].mxu0 %v757
        %v1106 = vpop.f32.mrb[0].mxu0
        %v1107 = vadd.f32 %v361, %v1106
        %v1108 = vpop.f32.mrb[0].mxu0
        %v1109 = vpop.f32.mrb[0].mxu0
        %v1110 = vadd.f32 %v361, %v1109
        %v1111 = vpop.f32.mrb[0].mxu0
        %1112 = vmatprep.mubr.bf16.mxu0 0
        %1113 = vmatmul.mubr.bf16.gmra.mrb[0].mxu0 %v760
        %v1114 = vpop.f32.mrb[0].mxu0
        %v1115 = vadd.f32 %v361, %v1114
        %v1116 = vpop.f32.mrb[0].mxu0
        %v1117 = vpop.f32.mrb[0].mxu0
        %v1118 = vadd.f32 %v361, %v1117
        %v1119 = vpop.f32.mrb[0].mxu0
        %1120 = vmatprep.mubr.bf16.mxu0 0
        %1121 = vmatmul.mubr.bf16.gmra.mrb[0].mxu0 %v763
        %v1122 = vpop.f32.mrb[0].mxu0
        %v1123 = vadd.f32 %v361, %v1122
        %v1124 = vpop.f32.mrb[0].mxu0
        %v1125 = vpop.f32.mrb[0].mxu0
        %v1126 = vadd.f32 %v361, %v1125
        %v1127 = vpop.f32.mrb[0].mxu0
        %1128 = vmatprep.mubr.bf16.mxu0 0
        %1129 = vmatmul.mubr.bf16.gmra.mrb[0].mxu0 %v766
        %v1130 = vpop.f32.mrb[0].mxu0
        %v1131 = vadd.f32 %v361, %v1130
        %v1132 = vpop.f32.mrb[0].mxu0
        %v1133 = vpop.f32.mrb[0].mxu0
        %v1134 = vadd.f32 %v361, %v1133
        %v1135 = vpop.f32.mrb[0].mxu0
        %1136 = vmatprep.mubr.bf16.mxu0 0
        %1137 = vmatmul.mubr.bf16.gmra.mrb[0].mxu0 %v769
        %v1138 = vpop.f32.mrb[0].mxu0
        %v1139 = vadd.f32 %v361, %v1138
        %v1140 = vpop.f32.mrb[0].mxu0
        %v1141 = vpop.f32.mrb[0].mxu0
        %v1142 = vadd.f32 %v361, %v1141
        %v1143 = vpop.f32.mrb[0].mxu0
        %1144 = vmatprep.mubr.bf16.mxu0 0
        %1145 = vmatmul.mubr.bf16.gmra.mrb[0].mxu0 %v772
        %v1146 = vpop.f32.mrb[0].mxu0
        %v1147 = vadd.f32 %v361, %v1146
        %v1148 = vpop.f32.mrb[0].mxu0
        %v1149 = vpop.f32.mrb[0].mxu0
        %v1150 = vadd.f32 %v361, %v1149
        %v1151 = vpop.f32.mrb[0].mxu0
        %1152 = vmatprep.mubr.bf16.mxu0 0
        %1153 = vmatmul.mubr.bf16.gmra.mrb[0].mxu0 %v775
        %v1154 = vpop.f32.mrb[0].mxu0
        %v1155 = vadd.f32 %v361, %v1154
        %v1156 = vpop.f32.mrb[0].mxu0
        %v1157 = vpop.f32.mrb[0].mxu0
        %v1158 = vadd.f32 %v361, %v1157
        %v1159 = vpop.f32.mrb[0].mxu0
        %1160 = vmatprep.mubr.bf16.mxu0 0
        %1161 = vmatmul.mubr.bf16.gmra.mrb[0].mxu0 %v778
        %v1162 = vpop.f32.mrb[0].mxu0
        %v1163 = vadd.f32 %v361, %v1162
        %v1164 = vpop.f32.mrb[0].mxu0
        %v1165 = vpop.f32.mrb[0].mxu0
        %v1166 = vadd.f32 %v361, %v1165
        %v1167 = vpop.f32.mrb[0].mxu0
        %1168 = vmatprep.mubr.bf16.mxu0 0
        %1169 = vmatmul.mubr.bf16.gmra.mrb[0].mxu0 %v781
        %v1170 = vpop.f32.mrb[0].mxu0
        %v1171 = vadd.f32 %v361, %v1170
        %v1172 = vpop.f32.mrb[0].mxu0
        %v1173 = vpop.f32.mrb[0].mxu0
        %v1174 = vadd.f32 %v361, %v1173
        %v1175 = vpop.f32.mrb[0].mxu0
        %1176 = vmatprep.mubr.bf16.mxu0 0
        %1177 = vmatmul.mubr.bf16.gmra.mrb[0].mxu0 %v784
        %v1178 = vpop.f32.mrb[0].mxu0
        %v1179 = vadd.f32 %v361, %v1178
        %v1180 = vpop.f32.mrb[0].mxu0
        %v1181 = vpop.f32.mrb[0].mxu0
        %v1182 = vadd.f32 %v361, %v1181
        %v1183 = vpop.f32.mrb[0].mxu0
        %1184 = vmatprep.mubr.bf16.mxu0 0
        %1185 = vmatmul.mubr.bf16.gmra.mrb[0].mxu0 %v787
        %v1186 = vpop.f32.mrb[0].mxu0
        %v1187 = vadd.f32 %v361, %v1186
        %v1188 = vpop.f32.mrb[0].mxu0
        %v1189 = vpop.f32.mrb[0].mxu0
        %v1190 = vadd.f32 %v361, %v1189
        %v1191 = vpop.f32.mrb[0].mxu0
        %1192 = vmatprep.mubr.bf16.mxu0 0
        %1193 = vmatmul.mubr.bf16.gmra.mrb[0].mxu0 %v790
        %v1194 = vpop.f32.mrb[0].mxu0
        %v1195 = vadd.f32 %v361, %v1194
        %v1196 = vpop.f32.mrb[0].mxu0
        %v1197 = vpop.f32.mrb[0].mxu0
        %v1198 = vadd.f32 %v361, %v1197
        %v1199 = vpop.f32.mrb[0].mxu0
        %1200 = vmatprep.mubr.bf16.mxu0 0
        %1201 = vmatmul.mubr.bf16.gmra.mrb[0].mxu0 %v793
        %v1202 = vpop.f32.mrb[0].mxu0
        %v1203 = vadd.f32 %v361, %v1202
        %v1204 = vpop.f32.mrb[0].mxu0
        %v1205 = vpop.f32.mrb[0].mxu0
        %v1206 = vadd.f32 %v361, %v1205
        %v1207 = vpop.f32.mrb[0].mxu0
        %1208 = vmatprep.mubr.bf16.mxu0 0
        %1209 = vmatmul.mubr.bf16.gmra.mrb[0].mxu0 %v796
        %v1210 = vpop.f32.mrb[0].mxu0
        %v1211 = vadd.f32 %v361, %v1210
        %v1212 = vpop.f32.mrb[0].mxu0
        %v1213 = vpop.f32.mrb[0].mxu0
        %v1214 = vadd.f32 %v361, %v1213
        %v1215 = vpop.f32.mrb[0].mxu0
        %1216 = vmatprep.mubr.bf16.mxu0 0
        %1217 = vmatmul.mubr.bf16.gmra.mrb[0].mxu0 %v799
        %v1218 = vpop.f32.mrb[0].mxu0
        %v1219 = vadd.f32 %v361, %v1218
        %v1220 = vpop.f32.mrb[0].mxu0
        %v1221 = vpop.f32.mrb[0].mxu0
        %v1222 = vadd.f32 %v361, %v1221
        %v1223 = vpop.f32.mrb[0].mxu0
        %1224 = vmatprep.mubr.bf16.mxu0 0
        %1225 = vmatmul.mubr.bf16.gmra.mrb[0].mxu0 %v802
        %v1226 = vpop.f32.mrb[0].mxu0
        %v1227 = vadd.f32 %v361, %v1226
        %v1228 = vpop.f32.mrb[0].mxu0
        %v1229 = vpop.f32.mrb[0].mxu0
        %v1230 = vadd.f32 %v361, %v1229
        %v1231 = vpop.f32.mrb[0].mxu0
        %1232 = vmatprep.mubr.bf16.mxu0 0
        %1233 = vmatmul.mubr.bf16.gmra.mrb[0].mxu0 %v805
        %v1234 = vpop.f32.mrb[0].mxu0
        %v1235 = vadd.f32 %v361, %v1234
        %v1236 = vpop.f32.mrb[0].mxu0
        %v1237 = vpop.f32.mrb[0].mxu0
        %v1238 = vadd.f32 %v361, %v1237
        %v1239 = vpop.f32.mrb[0].mxu0
        %1240 = vmatprep.mubr.bf16.mxu0 0
        %1241 = vmatmul.mubr.bf16.gmra.mrb[0].mxu0 %v808
        %v1242 = vpop.f32.mrb[0].mxu0
        %v1243 = vadd.f32 %v361, %v1242
        %v1244 = vpop.f32.mrb[0].mxu0
        %v1245 = vpop.f32.mrb[0].mxu0
        %v1246 = vadd.f32 %v361, %v1245
        %v1247 = vpop.f32.mrb[0].mxu0
        %1248 = vmatprep.mubr.bf16.mxu0 0
        %1249 = vmatmul.mubr.bf16.gmra.mrb[0].mxu0 %v811
        %v1250 = vpop.f32.mrb[0].mxu0
        %v1251 = vadd.f32 %v361, %v1250
        %v1252 = vpop.f32.mrb[0].mxu0
        %v1253 = vpop.f32.mrb[0].mxu0
        %v1254 = vadd.f32 %v361, %v1253
        %v1255 = vpop.f32.mrb[0].mxu0
        %1256 = vmatprep.mubr.bf16.mxu0 0
        %1257 = vmatmul.mubr.bf16.gmra.mrb[0].mxu0 %v814
        %v1258 = vpop.f32.mrb[0].mxu0
        %v1259 = vadd.f32 %v361, %v1258
        %v1260 = vpop.f32.mrb[0].mxu0
        %v1261 = vpop.f32.mrb[0].mxu0
        %v1262 = vadd.f32 %v361, %v1261
        %v1263 = vpop.f32.mrb[0].mxu0
        %1264 = vmatprep.mubr.bf16.mxu0 0
        %1265 = vmatmul.mubr.bf16.gmra.mrb[0].mxu0 %v817
        %v1266 = vpop.f32.mrb[0].mxu0
        %v1267 = vadd.f32 %v361, %v1266
        %v1268 = vpop.f32.mrb[0].mxu0
        %v1269 = vpop.f32.mrb[0].mxu0
        %v1270 = vadd.f32 %v361, %v1269
        %v1271 = vpop.f32.mrb[0].mxu0
        %1272 = vmatprep.mubr.bf16.mxu0 0
        %1273 = vmatmul.mubr.bf16.gmra.mrb[0].mxu0 %v820
        %v1274 = vpop.f32.mrb[0].mxu0
        %v1275 = vadd.f32 %v361, %v1274
        %v1276 = vpop.f32.mrb[0].mxu0
        %v1277 = vpop.f32.mrb[0].mxu0
        %v1278 = vadd.f32 %v361, %v1277
        %v1279 = vpop.f32.mrb[0].mxu0
        %1280 = vmatprep.mubr.bf16.mxu0 0
        %1281 = vmatmul.mubr.bf16.gmra.mrb[0].mxu0 %v823
        %v1282 = vpop.f32.mrb[0].mxu0
        %v1283 = vadd.f32 %v361, %v1282
        %v1284 = vpop.f32.mrb[0].mxu0
        %v1285 = vpop.f32.mrb[0].mxu0
        %v1286 = vadd.f32 %v361, %v1285
        %v1287 = vpop.f32.mrb[0].mxu0
        %1288 = vmatprep.mubr.bf16.mxu0 0
        %1289 = vmatmul.mubr.bf16.gmra.mrb[0].mxu0 %v826
        %v1290 = vpop.f32.mrb[0].mxu0
        %v1291 = vadd.f32 %v361, %v1290
        %v1292 = vpop.f32.mrb[0].mxu0
        %v1293 = vpop.f32.mrb[0].mxu0
        %v1294 = vadd.f32 %v361, %v1293
        %v1295 = vpop.f32.mrb[0].mxu0
        %1296 = vmatprep.mubr.bf16.mxu0 0
        %1297 = vmatmul.mubr.bf16.gmra.mrb[0].mxu0 %v829
        %v1298 = vpop.f32.mrb[0].mxu0
        %v1299 = vadd.f32 %v361, %v1298
        %v1300 = vpop.f32.mrb[0].mxu0
        %v1301 = vpop.f32.mrb[0].mxu0
        %v1302 = vadd.f32 %v361, %v1301
        %v1303 = vpop.f32.mrb[0].mxu0
        %1304 = vmatprep.mubr.bf16.mxu0 0
        %1305 = vmatmul.mubr.bf16.gmra.mrb[0].mxu0 %v832
        %v1306 = vpop.f32.mrb[0].mxu0
        %v1307 = vadd.f32 %v361, %v1306
        %v1308 = vpop.f32.mrb[0].mxu0
        %v1309 = vpop.f32.mrb[0].mxu0
        %v1310 = vadd.f32 %v361, %v1309
        %v1311 = vpop.f32.mrb[0].mxu0
        %1312 = vmatprep.mubr.bf16.mxu0 0
        %1313 = vmatmul.mubr.bf16.gmra.mrb[0].mxu0 %v835
        %v1314 = vpop.f32.mrb[0].mxu0
        %v1315 = vadd.f32 %v361, %v1314
        %v1316 = vpop.f32.mrb[0].mxu0
        %v1317 = vpop.f32.mrb[0].mxu0
        %v1318 = vadd.f32 %v361, %v1317
        %v1319 = vpop.f32.mrb[0].mxu0
        %1320 = vmatprep.mubr.bf16.mxu0 0
        %1321 = vmatmul.mubr.bf16.gmra.mrb[0].mxu0 %v838
        %v1322 = vpop.f32.mrb[0].mxu0
        %v1323 = vadd.f32 %v361, %v1322
        %v1324 = vpop.f32.mrb[0].mxu0
        %v1325 = vpop.f32.mrb[0].mxu0
        %v1326 = vadd.f32 %v361, %v1325
        %v1327 = vpop.f32.mrb[0].mxu0
        %1328 = vmatprep.mubr.bf16.mxu0 0
        %1329 = vmatmul.mubr.bf16.gmra.mrb[0].mxu0 %v841
        %v1330 = vpop.f32.mrb[0].mxu0
        %v1331 = vadd.f32 %v361, %v1330
        %v1332 = vpop.f32.mrb[0].mxu0
        %v1333 = vpop.f32.mrb[0].mxu0
        %v1334 = vadd.f32 %v361, %v1333
        %v1335 = vpop.f32.mrb[0].mxu0
        %1336 = vmatprep.mubr.bf16.mxu0 0
        %1337 = vmatmul.mubr.bf16.gmra.mrb[0].mxu0 %v844
        %v1338 = vpop.f32.mrb[0].mxu0
        %v1339 = vadd.f32 %v361, %v1338
        %v1340 = vpop.f32.mrb[0].mxu0
        %v1341 = vpop.f32.mrb[0].mxu0
        %v1342 = vadd.f32 %v361, %v1341
        %v1343 = vpop.f32.mrb[0].mxu0
        %1344 = vmatprep.mubr.bf16.mxu0 0
        %1345 = vmatmul.mubr.bf16.gmra.mrb[0].mxu0 %v847
        %v1346 = vpop.f32.mrb[0].mxu0
        %v1347 = vadd.f32 %v361, %v1346
        %v1348 = vpop.f32.mrb[0].mxu0
        %v1349 = vpop.f32.mrb[0].mxu0
        %v1350 = vadd.f32 %v361, %v1349
        %v1351 = vpop.f32.mrb[0].mxu0
        %1352 = vmatprep.mubr.bf16.mxu0 0
        %1353 = vmatmul.mubr.bf16.gmra.mrb[0].mxu0 %v850
        %v1354 = vpop.f32.mrb[0].mxu0
        %v1355 = vadd.f32 %v361, %v1354
        %v1356 = vpop.f32.mrb[0].mxu0
        %v1357 = vpop.f32.mrb[0].mxu0
        %v1358 = vadd.f32 %v361, %v1357
        %v1359 = vpop.f32.mrb[0].mxu0
        %1360 = vmatprep.mubr.bf16.mxu0 0
        %1361 = vmatmul.mubr.bf16.gmra.mrb[0].mxu0 %v853
        %v1362 = vpop.f32.mrb[0].mxu0
        %v1363 = vadd.f32 %v361, %v1362
        %v1364 = vpop.f32.mrb[0].mxu0
        %v1365 = vpop.f32.mrb[0].mxu0
        %v1366 = vadd.f32 %v361, %v1365
        %v1367 = vpop.f32.mrb[0].mxu0
        %1368 = vmatprep.mubr.bf16.mxu0 0
        %1369 = vmatmul.mubr.bf16.gmra.mrb[0].mxu0 %v856
        %v1370 = vpop.f32.mrb[0].mxu0
        %v1371 = vadd.f32 %v361, %v1370
        %v1372 = vpop.f32.mrb[0].mxu0
        %v1373 = vpop.f32.mrb[0].mxu0
        %v1374 = vadd.f32 %v361, %v1373
        %v1375 = vpop.f32.mrb[0].mxu0
        %1376 = vmatprep.mubr.bf16.mxu0 0
        %1377 = vmatmul.mubr.bf16.gmra.mrb[0].mxu0 %v859
        %v1378 = vpop.f32.mrb[0].mxu0
        %v1379 = vadd.f32 %v361, %v1378
        %v1380 = vpop.f32.mrb[0].mxu0
        %v1381 = vpop.f32.mrb[0].mxu0
        %v1382 = vadd.f32 %v361, %v1381
        %v1383 = vpop.f32.mrb[0].mxu0
        %1384 = vmatprep.mubr.bf16.mxu0 0
        %1385 = vmatmul.mubr.bf16.gmra.mrb[0].mxu0 %v862
        %v1386 = vpop.f32.mrb[0].mxu0
        %v1387 = vadd.f32 %v361, %v1386
        %v1388 = vpop.f32.mrb[0].mxu0
        %v1389 = vpop.f32.mrb[0].mxu0
        %v1390 = vadd.f32 %v361, %v1389
        %v1391 = vpop.f32.mrb[0].mxu0
        %1392 = vmatprep.mubr.bf16.mxu0 0
        %1393 = vmatmul.mubr.bf16.gmra.mrb[0].mxu0 %v865
        %v1394 = vpop.f32.mrb[0].mxu0
        %v1395 = vadd.f32 %v361, %v1394
        %v1396 = vpop.f32.mrb[0].mxu0
        %v1397 = vpop.f32.mrb[0].mxu0
        %v1398 = vadd.f32 %v361, %v1397
        %v1399 = vpop.f32.mrb[0].mxu0
        %1400 = vmatprep.mubr.bf16.mxu0 0
        %1401 = vmatmul.mubr.bf16.gmra.mrb[0].mxu0 %v868
        %v1402 = vpop.f32.mrb[0].mxu0
        %v1403 = vadd.f32 %v361, %v1402
        %v1404 = vpop.f32.mrb[0].mxu0
        %v1405 = vpop.f32.mrb[0].mxu0
        %v1406 = vadd.f32 %v361, %v1405
        %v1407 = vpop.f32.mrb[0].mxu0
        %1408 = vmatprep.mubr.bf16.mxu0 0
        %1409 = vmatmul.mubr.bf16.gmra.mrb[0].mxu0 %v871
        %v1410 = vpop.f32.mrb[0].mxu0
        %v1411 = vadd.f32 %v361, %v1410
        %v1412 = vpop.f32.mrb[0].mxu0
        %v1413 = vpop.f32.mrb[0].mxu0
        %v1414 = vadd.f32 %v361, %v1413
        %v1415 = vpop.f32.mrb[0].mxu0
        %1416 = vmatprep.mubr.bf16.mxu0 0
        %1417 = vmatmul.mubr.bf16.gmra.mrb[0].mxu0 %v874
        %v1418 = vpop.f32.mrb[0].mxu0
        %v1419 = vadd.f32 %v361, %v1418
        %v1420 = vpop.f32.mrb[0].mxu0
        %v1421 = vpop.f32.mrb[0].mxu0
        %v1422 = vadd.f32 %v361, %v1421
        %v1423 = vpop.f32.mrb[0].mxu0
        %1424 = vdwg.mxu0
        %v1425 = vmax.f32 %v915, 0.0
        %v1426 = vmax.f32 %v918, 0.0
        %v1427 = vmax.f32 %v923, 0.0
        %v1428 = vmax.f32 %v926, 0.0
        %v1429 = vmax.f32 %v931, 0.0
        %v1430 = vmax.f32 %v934, 0.0
        %v1431 = vmax.f32 %v939, 0.0
        %v1432 = vmax.f32 %v942, 0.0
        %v1433 = vmax.f32 %v947, 0.0
        %v1434 = vmax.f32 %v950, 0.0
        %v1435 = vmax.f32 %v955, 0.0
        %v1436 = vmax.f32 %v958, 0.0
        %v1437 = vmax.f32 %v963, 0.0
        %v1438 = vmax.f32 %v966, 0.0
        %v1439 = vmax.f32 %v971, 0.0
        %v1440 = vmax.f32 %v974, 0.0
        %v1441 = vmax.f32 %v979, 0.0
        %v1442 = vmax.f32 %v982, 0.0
        %v1443 = vmax.f32 %v987, 0.0
        %v1444 = vmax.f32 %v990, 0.0
        %v1445 = vmax.f32 %v995, 0.0
        %v1446 = vmax.f32 %v998, 0.0
        %v1447 = vmax.f32 %v1003, 0.0
        %v1448 = vmax.f32 %v1006, 0.0
        %v1449 = vmax.f32 %v1011, 0.0
        %v1450 = vmax.f32 %v1014, 0.0
        %v1451 = vmax.f32 %v1019, 0.0
        %v1452 = vmax.f32 %v1022, 0.0
        %v1453 = vmax.f32 %v1027, 0.0
        %v1454 = vmax.f32 %v1030, 0.0
        %v1455 = vmax.f32 %v1035, 0.0
        %v1456 = vmax.f32 %v1038, 0.0
        %v1457 = vmax.f32 %v1043, 0.0
        %v1458 = vmax.f32 %v1046, 0.0
        %v1459 = vmax.f32 %v1051, 0.0
        %v1460 = vmax.f32 %v1054, 0.0
        %v1461 = vmax.f32 %v1059, 0.0
        %v1462 = vmax.f32 %v1062, 0.0
        %v1463 = vmax.f32 %v1067, 0.0
        %v1464 = vmax.f32 %v1070, 0.0
        %v1465 = vmax.f32 %v1075, 0.0
        %v1466 = vmax.f32 %v1078, 0.0
        %v1467 = vmax.f32 %v1083, 0.0
        %v1468 = vmax.f32 %v1086, 0.0
        %v1469 = vmax.f32 %v1091, 0.0
        %v1470 = vmax.f32 %v1094, 0.0
        %v1471 = vmax.f32 %v1099, 0.0
        %v1472 = vmax.f32 %v1102, 0.0
        %v1473 = vmax.f32 %v1107, 0.0
        %v1474 = vmax.f32 %v1110, 0.0
        %v1475 = vmax.f32 %v1115, 0.0
        %v1476 = vmax.f32 %v1118, 0.0
        %v1477 = vmax.f32 %v1123, 0.0
        %v1478 = vmax.f32 %v1126, 0.0
        %v1479 = vmax.f32 %v1131, 0.0
        %v1480 = vmax.f32 %v1134, 0.0
        %v1481 = vmax.f32 %v1139, 0.0
        %v1482 = vmax.f32 %v1142, 0.0
        %v1483 = vmax.f32 %v1147, 0.0
        %v1484 = vmax.f32 %v1150, 0.0
        %v1485 = vmax.f32 %v1155, 0.0
        %v1486 = vmax.f32 %v1158, 0.0
        %v1487 = vmax.f32 %v1163, 0.0
        %v1488 = vmax.f32 %v1166, 0.0
        %v1489 = vmax.f32 %v1171, 0.0
        %v1490 = vmax.f32 %v1174, 0.0
        %v1491 = vmax.f32 %v1179, 0.0
        %v1492 = vmax.f32 %v1182, 0.0
        %v1493 = vmax.f32 %v1187, 0.0
        %v1494 = vmax.f32 %v1190, 0.0
        %v1495 = vmax.f32 %v1195, 0.0
        %v1496 = vmax.f32 %v1198, 0.0
        %v1497 = vmax.f32 %v1203, 0.0
        %v1498 = vmax.f32 %v1206, 0.0
        %v1499 = vmax.f32 %v1211, 0.0
        %v1500 = vmax.f32 %v1214, 0.0
        %v1501 = vmax.f32 %v1219, 0.0
        %v1502 = vmax.f32 %v1222, 0.0
        %v1503 = vmax.f32 %v1227, 0.0
        %v1504 = vmax.f32 %v1230, 0.0
        %v1505 = vmax.f32 %v1235, 0.0
        %v1506 = vmax.f32 %v1238, 0.0
        %v1507 = vmax.f32 %v1243, 0.0
        %v1508 = vmax.f32 %v1246, 0.0
        %v1509 = vmax.f32 %v1251, 0.0
        %v1510 = vmax.f32 %v1254, 0.0
        %v1511 = vmax.f32 %v1259, 0.0
        %v1512 = vmax.f32 %v1262, 0.0
        %v1513 = vmax.f32 %v1267, 0.0
        %v1514 = vmax.f32 %v1270, 0.0
        %v1515 = vmax.f32 %v1275, 0.0
        %v1516 = vmax.f32 %v1278, 0.0
        %v1517 = vmax.f32 %v1283, 0.0
        %v1518 = vmax.f32 %v1286, 0.0
        %v1519 = vmax.f32 %v1291, 0.0
        %v1520 = vmax.f32 %v1294, 0.0
        %v1521 = vmax.f32 %v1299, 0.0
        %v1522 = vmax.f32 %v1302, 0.0
        %v1523 = vmax.f32 %v1307, 0.0
        %v1524 = vmax.f32 %v1310, 0.0
        %v1525 = vmax.f32 %v1315, 0.0
        %v1526 = vmax.f32 %v1318, 0.0
        %v1527 = vmax.f32 %v1323, 0.0
        %v1528 = vmax.f32 %v1326, 0.0
        %v1529 = vmax.f32 %v1331, 0.0
        %v1530 = vmax.f32 %v1334, 0.0
        %v1531 = vmax.f32 %v1339, 0.0
        %v1532 = vmax.f32 %v1342, 0.0
        %v1533 = vmax.f32 %v1347, 0.0
        %v1534 = vmax.f32 %v1350, 0.0
        %v1535 = vmax.f32 %v1355, 0.0
        %v1536 = vmax.f32 %v1358, 0.0
        %v1537 = vmax.f32 %v1363, 0.0
        %v1538 = vmax.f32 %v1366, 0.0
        %v1539 = vmax.f32 %v1371, 0.0
        %v1540 = vmax.f32 %v1374, 0.0
        %v1541 = vmax.f32 %v1379, 0.0
        %v1542 = vmax.f32 %v1382, 0.0
        %v1543 = vmax.f32 %v1387, 0.0
        %v1544 = vmax.f32 %v1390, 0.0
        %v1545 = vmax.f32 %v1395, 0.0
        %v1546 = vmax.f32 %v1398, 0.0
        %v1547 = vmax.f32 %v1403, 0.0
        %v1548 = vmax.f32 %v1406, 0.0
        %v1549 = vmax.f32 %v1411, 0.0
        %v1550 = vmax.f32 %v1414, 0.0
        %v1551 = vmax.f32 %v1419, 0.0
        %v1552 = vmax.f32 %v1422, 0.0
        %v1553 = vand.u32 2147483647, %v915
        %v1554 = vand.u32 2147483647, %v918
        %v1555 = vand.u32 2147483647, %v923
        %v1556 = vand.u32 2147483647, %v926
        %v1557 = vand.u32 2147483647, %v931
        %v1558 = vand.u32 2147483647, %v934
        %v1559 = vand.u32 2147483647, %v939
        %v1560 = vand.u32 2147483647, %v942
        %v1561 = vand.u32 2147483647, %v947
        %v1562 = vand.u32 2147483647, %v950
        %v1563 = vand.u32 2147483647, %v955
        %v1564 = vand.u32 2147483647, %v958
        %v1565 = vand.u32 2147483647, %v963
        %v1566 = vand.u32 2147483647, %v966
        %v1567 = vand.u32 2147483647, %v971
        %v1568 = vand.u32 2147483647, %v974
        %v1569 = vand.u32 2147483647, %v979
        %v1570 = vand.u32 2147483647, %v982
        %v1571 = vand.u32 2147483647, %v987
        %v1572 = vand.u32 2147483647, %v990
        %v1573 = vand.u32 2147483647, %v995
        %v1574 = vand.u32 2147483647, %v998
        %v1575 = vand.u32 2147483647, %v1003
        %v1576 = vand.u32 2147483647, %v1006
        %v1577 = vand.u32 2147483647, %v1011
        %v1578 = vand.u32 2147483647, %v1014
        %v1579 = vand.u32 2147483647, %v1019
        %v1580 = vand.u32 2147483647, %v1022
        %v1581 = vand.u32 2147483647, %v1027
        %v1582 = vand.u32 2147483647, %v1030
        %v1583 = vand.u32 2147483647, %v1035
        %v1584 = vand.u32 2147483647, %v1038
        %v1585 = vand.u32 2147483647, %v1043
        %v1586 = vand.u32 2147483647, %v1046
        %v1587 = vand.u32 2147483647, %v1051
        %v1588 = vand.u32 2147483647, %v1054
        %v1589 = vand.u32 2147483647, %v1059
        %v1590 = vand.u32 2147483647, %v1062
        %v1591 = vand.u32 2147483647, %v1067
        %v1592 = vand.u32 2147483647, %v1070
        %v1593 = vand.u32 2147483647, %v1075
        %v1594 = vand.u32 2147483647, %v1078
        %v1595 = vand.u32 2147483647, %v1083
        %v1596 = vand.u32 2147483647, %v1086
        %v1597 = vand.u32 2147483647, %v1091
        %v1598 = vand.u32 2147483647, %v1094
        %v1599 = vand.u32 2147483647, %v1099
        %v1600 = vand.u32 2147483647, %v1102
        %v1601 = vand.u32 2147483647, %v1107
        %v1602 = vand.u32 2147483647, %v1110
        %v1603 = vand.u32 2147483647, %v1115
        %v1604 = vand.u32 2147483647, %v1118
        %v1605 = vand.u32 2147483647, %v1123
        %v1606 = vand.u32 2147483647, %v1126
        %v1607 = vand.u32 2147483647, %v1131
        %v1608 = vand.u32 2147483647, %v1134
        %v1609 = vand.u32 2147483647, %v1139
        %v1610 = vand.u32 2147483647, %v1142
        %v1611 = vand.u32 2147483647, %v1147
        %v1612 = vand.u32 2147483647, %v1150
        %v1613 = vand.u32 2147483647, %v1155
        %v1614 = vand.u32 2147483647, %v1158
        %v1615 = vand.u32 2147483647, %v1163
        %v1616 = vand.u32 2147483647, %v1166
        %v1617 = vand.u32 2147483647, %v1171
        %v1618 = vand.u32 2147483647, %v1174
        %v1619 = vand.u32 2147483647, %v1179
        %v1620 = vand.u32 2147483647, %v1182
        %v1621 = vand.u32 2147483647, %v1187
        %v1622 = vand.u32 2147483647, %v1190
        %v1623 = vand.u32 2147483647, %v1195
        %v1624 = vand.u32 2147483647, %v1198
        %v1625 = vand.u32 2147483647, %v1203
        %v1626 = vand.u32 2147483647, %v1206
        %v1627 = vand.u32 2147483647, %v1211
        %v1628 = vand.u32 2147483647, %v1214
        %v1629 = vand.u32 2147483647, %v1219
        %v1630 = vand.u32 2147483647, %v1222
        %v1631 = vand.u32 2147483647, %v1227
        %v1632 = vand.u32 2147483647, %v1230
        %v1633 = vand.u32 2147483647, %v1235
        %v1634 = vand.u32 2147483647, %v1238
        %v1635 = vand.u32 2147483647, %v1243
        %v1636 = vand.u32 2147483647, %v1246
        %v1637 = vand.u32 2147483647, %v1251
        %v1638 = vand.u32 2147483647, %v1254
        %v1639 = vand.u32 2147483647, %v1259
        %v1640 = vand.u32 2147483647, %v1262
        %v1641 = vand.u32 2147483647, %v1267
        %v1642 = vand.u32 2147483647, %v1270
        %v1643 = vand.u32 2147483647, %v1275
        %v1644 = vand.u32 2147483647, %v1278
        %v1645 = vand.u32 2147483647, %v1283
        %v1646 = vand.u32 2147483647, %v1286
        %v1647 = vand.u32 2147483647, %v1291
        %v1648 = vand.u32 2147483647, %v1294
        %v1649 = vand.u32 2147483647, %v1299
        %v1650 = vand.u32 2147483647, %v1302
        %v1651 = vand.u32 2147483647, %v1307
        %v1652 = vand.u32 2147483647, %v1310
        %v1653 = vand.u32 2147483647, %v1315
        %v1654 = vand.u32 2147483647, %v1318
        %v1655 = vand.u32 2147483647, %v1323
        %v1656 = vand.u32 2147483647, %v1326
        %v1657 = vand.u32 2147483647, %v1331
        %v1658 = vand.u32 2147483647, %v1334
        %v1659 = vand.u32 2147483647, %v1339
        %v1660 = vand.u32 2147483647, %v1342
        %v1661 = vand.u32 2147483647, %v1347
        %v1662 = vand.u32 2147483647, %v1350
        %v1663 = vand.u32 2147483647, %v1355
        %v1664 = vand.u32 2147483647, %v1358
        %v1665 = vand.u32 2147483647, %v1363
        %v1666 = vand.u32 2147483647, %v1366
        %v1667 = vand.u32 2147483647, %v1371
        %v1668 = vand.u32 2147483647, %v1374
        %v1669 = vand.u32 2147483647, %v1379
        %v1670 = vand.u32 2147483647, %v1382
        %v1671 = vand.u32 2147483647, %v1387
        %v1672 = vand.u32 2147483647, %v1390
        %v1673 = vand.u32 2147483647, %v1395
        %v1674 = vand.u32 2147483647, %v1398
        %v1675 = vand.u32 2147483647, %v1403
        %v1676 = vand.u32 2147483647, %v1406
        %v1677 = vand.u32 2147483647, %v1411
        %v1678 = vand.u32 2147483647, %v1414
        %v1679 = vand.u32 2147483647, %v1419
        %v1680 = vand.u32 2147483647, %v1422
        %v1681 = vsub.f32 0.0, %v1553
        %v1682 = vsub.f32 0.0, %v1554
        %v1683 = vsub.f32 0.0, %v1555
        %v1684 = vsub.f32 0.0, %v1556
        %v1685 = vsub.f32 0.0, %v1557
        %v1686 = vsub.f32 0.0, %v1558
        %v1687 = vsub.f32 0.0, %v1559
        %v1688 = vsub.f32 0.0, %v1560
        %v1689 = vsub.f32 0.0, %v1561
        %v1690 = vsub.f32 0.0, %v1562
        %v1691 = vsub.f32 0.0, %v1563
        %v1692 = vsub.f32 0.0, %v1564
        %v1693 = vsub.f32 0.0, %v1565
        %v1694 = vsub.f32 0.0, %v1566
        %v1695 = vsub.f32 0.0, %v1567
        %v1696 = vsub.f32 0.0, %v1568
        %v1697 = vsub.f32 0.0, %v1569
        %v1698 = vsub.f32 0.0, %v1570
        %v1699 = vsub.f32 0.0, %v1571
        %v1700 = vsub.f32 0.0, %v1572
        %v1701 = vsub.f32 0.0, %v1573
        %v1702 = vsub.f32 0.0, %v1574
        %v1703 = vsub.f32 0.0, %v1575
        %v1704 = vsub.f32 0.0, %v1576
        %v1705 = vsub.f32 0.0, %v1577
        %v1706 = vsub.f32 0.0, %v1578
        %v1707 = vsub.f32 0.0, %v1579
        %v1708 = vsub.f32 0.0, %v1580
        %v1709 = vsub.f32 0.0, %v1581
        %v1710 = vsub.f32 0.0, %v1582
        %v1711 = vsub.f32 0.0, %v1583
        %v1712 = vsub.f32 0.0, %v1584
        %v1713 = vsub.f32 0.0, %v1585
        %v1714 = vsub.f32 0.0, %v1586
        %v1715 = vsub.f32 0.0, %v1587
        %v1716 = vsub.f32 0.0, %v1588
        %v1717 = vsub.f32 0.0, %v1589
        %v1718 = vsub.f32 0.0, %v1590
        %v1719 = vsub.f32 0.0, %v1591
        %v1720 = vsub.f32 0.0, %v1592
        %v1721 = vsub.f32 0.0, %v1593
        %v1722 = vsub.f32 0.0, %v1594
        %v1723 = vsub.f32 0.0, %v1595
        %v1724 = vsub.f32 0.0, %v1596
        %v1725 = vsub.f32 0.0, %v1597
        %v1726 = vsub.f32 0.0, %v1598
        %v1727 = vsub.f32 0.0, %v1599
        %v1728 = vsub.f32 0.0, %v1600
        %v1729 = vsub.f32 0.0, %v1601
        %v1730 = vsub.f32 0.0, %v1602
        %v1731 = vsub.f32 0.0, %v1603
        %v1732 = vsub.f32 0.0, %v1604
        %v1733 = vsub.f32 0.0, %v1605
        %v1734 = vsub.f32 0.0, %v1606
        %v1735 = vsub.f32 0.0, %v1607
        %v1736 = vsub.f32 0.0, %v1608
        %v1737 = vsub.f32 0.0, %v1609
        %v1738 = vsub.f32 0.0, %v1610
        %v1739 = vsub.f32 0.0, %v1611
        %v1740 = vsub.f32 0.0, %v1612
        %v1741 = vsub.f32 0.0, %v1613
        %v1742 = vsub.f32 0.0, %v1614
        %v1743 = vsub.f32 0.0, %v1615
        %v1744 = vsub.f32 0.0, %v1616
        %v1745 = vsub.f32 0.0, %v1617
        %v1746 = vsub.f32 0.0, %v1618
        %v1747 = vsub.f32 0.0, %v1619
        %v1748 = vsub.f32 0.0, %v1620
        %v1749 = vsub.f32 0.0, %v1621
        %v1750 = vsub.f32 0.0, %v1622
        %v1751 = vsub.f32 0.0, %v1623
        %v1752 = vsub.f32 0.0, %v1624
        %v1753 = vsub.f32 0.0, %v1625
        %v1754 = vsub.f32 0.0, %v1626
        %v1755 = vsub.f32 0.0, %v1627
        %v1756 = vsub.f32 0.0, %v1628
        %v1757 = vsub.f32 0.0, %v1629
        %v1758 = vsub.f32 0.0, %v1630
        %v1759 = vsub.f32 0.0, %v1631
        %v1760 = vsub.f32 0.0, %v1632
        %v1761 = vsub.f32 0.0, %v1633
        %v1762 = vsub.f32 0.0, %v1634
        %v1763 = vsub.f32 0.0, %v1635
        %v1764 = vsub.f32 0.0, %v1636
        %v1765 = vsub.f32 0.0, %v1637
        %v1766 = vsub.f32 0.0, %v1638
        %v1767 = vsub.f32 0.0, %v1639
        %v1768 = vsub.f32 0.0, %v1640
        %v1769 = vsub.f32 0.0, %v1641
        %v1770 = vsub.f32 0.0, %v1642
        %v1771 = vsub.f32 0.0, %v1643
        %v1772 = vsub.f32 0.0, %v1644
        %v1773 = vsub.f32 0.0, %v1645
        %v1774 = vsub.f32 0.0, %v1646
        %v1775 = vsub.f32 0.0, %v1647
        %v1776 = vsub.f32 0.0, %v1648
        %v1777 = vsub.f32 0.0, %v1649
        %v1778 = vsub.f32 0.0, %v1650
        %v1779 = vsub.f32 0.0, %v1651
        %v1780 = vsub.f32 0.0, %v1652
        %v1781 = vsub.f32 0.0, %v1653
        %v1782 = vsub.f32 0.0, %v1654
        %v1783 = vsub.f32 0.0, %v1655
        %v1784 = vsub.f32 0.0, %v1656
        %v1785 = vsub.f32 0.0, %v1657
        %v1786 = vsub.f32 0.0, %v1658
        %v1787 = vsub.f32 0.0, %v1659
        %v1788 = vsub.f32 0.0, %v1660
        %v1789 = vsub.f32 0.0, %v1661
        %v1790 = vsub.f32 0.0, %v1662
        %v1791 = vsub.f32 0.0, %v1663
        %v1792 = vsub.f32 0.0, %v1664
        %v1793 = vsub.f32 0.0, %v1665
        %v1794 = vsub.f32 0.0, %v1666
        %v1795 = vsub.f32 0.0, %v1667
        %v1796 = vsub.f32 0.0, %v1668
        %v1797 = vsub.f32 0.0, %v1669
        %v1798 = vsub.f32 0.0, %v1670
        %v1799 = vsub.f32 0.0, %v1671
        %v1800 = vsub.f32 0.0, %v1672
        %v1801 = vsub.f32 0.0, %v1673
        %v1802 = vsub.f32 0.0, %v1674
        %v1803 = vsub.f32 0.0, %v1675
        %v1804 = vsub.f32 0.0, %v1676
        %v1805 = vsub.f32 0.0, %v1677
        %v1806 = vsub.f32 0.0, %v1678
        %v1807 = vsub.f32 0.0, %v1679
        %v1808 = vsub.f32 0.0, %v1680
        %v1809 = vmul.f32 %v1681, 1.442695
        %v1810 = vpow.pop %v1809
        %v1811 = vmul.f32 %v1682, 1.442695
        %v1812 = vpow.pop %v1811
        %v1813 = vmul.f32 %v1683, 1.442695
        %v1814 = vpow.pop %v1813
        %v1815 = vmul.f32 %v1684, 1.442695
        %v1816 = vpow.pop %v1815
        %v1817 = vmul.f32 %v1685, 1.442695
        %v1818 = vpow.pop %v1817
        %v1819 = vmul.f32 %v1686, 1.442695
        %v1820 = vpow.pop %v1819
        %v1821 = vmul.f32 %v1687, 1.442695
        %v1822 = vpow.pop %v1821
        %v1823 = vmul.f32 %v1688, 1.442695
        %v1824 = vpow.pop %v1823
        %v1825 = vmul.f32 %v1689, 1.442695
        %v1826 = vpow.pop %v1825
        %v1827 = vmul.f32 %v1690, 1.442695
        %v1828 = vpow.pop %v1827
        %v1829 = vmul.f32 %v1691, 1.442695
        %v1830 = vpow.pop %v1829
        %v1831 = vmul.f32 %v1692, 1.442695
        %v1832 = vpow.pop %v1831
        %v1833 = vmul.f32 %v1693, 1.442695
        %v1834 = vpow.pop %v1833
        %v1835 = vmul.f32 %v1694, 1.442695
        %v1836 = vpow.pop %v1835
        %v1837 = vmul.f32 %v1695, 1.442695
        %v1838 = vpow.pop %v1837
        %v1839 = vmul.f32 %v1696, 1.442695
        %v1840 = vpow.pop %v1839
        %v1841 = vmul.f32 %v1697, 1.442695
        %v1842 = vpow.pop %v1841
        %v1843 = vmul.f32 %v1698, 1.442695
        %v1844 = vpow.pop %v1843
        %v1845 = vmul.f32 %v1699, 1.442695
        %v1846 = vpow.pop %v1845
        %v1847 = vmul.f32 %v1700, 1.442695
        %v1848 = vpow.pop %v1847
        %v1849 = vmul.f32 %v1701, 1.442695
        %v1850 = vpow.pop %v1849
        %v1851 = vmul.f32 %v1702, 1.442695
        %v1852 = vpow.pop %v1851
        %v1853 = vmul.f32 %v1703, 1.442695
        %v1854 = vpow.pop %v1853
        %v1855 = vmul.f32 %v1704, 1.442695
        %v1856 = vpow.pop %v1855
        %v1857 = vmul.f32 %v1705, 1.442695
        %v1858 = vpow.pop %v1857
        %v1859 = vmul.f32 %v1706, 1.442695
        %v1860 = vpow.pop %v1859
        %v1861 = vmul.f32 %v1707, 1.442695
        %v1862 = vpow.pop %v1861
        %v1863 = vmul.f32 %v1708, 1.442695
        %v1864 = vpow.pop %v1863
        %v1865 = vmul.f32 %v1709, 1.442695
        %v1866 = vpow.pop %v1865
        %v1867 = vmul.f32 %v1710, 1.442695
        %v1868 = vpow.pop %v1867
        %v1869 = vmul.f32 %v1711, 1.442695
        %v1870 = vpow.pop %v1869
        %v1871 = vmul.f32 %v1712, 1.442695
        %v1872 = vpow.pop %v1871
        %v1873 = vmul.f32 %v1713, 1.442695
        %v1874 = vpow.pop %v1873
        %v1875 = vmul.f32 %v1714, 1.442695
        %v1876 = vpow.pop %v1875
        %v1877 = vmul.f32 %v1715, 1.442695
        %v1878 = vpow.pop %v1877
        %v1879 = vmul.f32 %v1716, 1.442695
        %v1880 = vpow.pop %v1879
        %v1881 = vmul.f32 %v1717, 1.442695
        %v1882 = vpow.pop %v1881
        %v1883 = vmul.f32 %v1718, 1.442695
        %v1884 = vpow.pop %v1883
        %v1885 = vmul.f32 %v1719, 1.442695
        %v1886 = vpow.pop %v1885
        %v1887 = vmul.f32 %v1720, 1.442695
        %v1888 = vpow.pop %v1887
        %v1889 = vmul.f32 %v1721, 1.442695
        %v1890 = vpow.pop %v1889
        %v1891 = vmul.f32 %v1722, 1.442695
        %v1892 = vpow.pop %v1891
        %v1893 = vmul.f32 %v1723, 1.442695
        %v1894 = vpow.pop %v1893
        %v1895 = vmul.f32 %v1724, 1.442695
        %v1896 = vpow.pop %v1895
        %v1897 = vmul.f32 %v1725, 1.442695
        %v1898 = vpow.pop %v1897
        %v1899 = vmul.f32 %v1726, 1.442695
        %v1900 = vpow.pop %v1899
        %v1901 = vmul.f32 %v1727, 1.442695
        %v1902 = vpow.pop %v1901
        %v1903 = vmul.f32 %v1728, 1.442695
        %v1904 = vpow.pop %v1903
        %v1905 = vmul.f32 %v1729, 1.442695
        %v1906 = vpow.pop %v1905
        %v1907 = vmul.f32 %v1730, 1.442695
        %v1908 = vpow.pop %v1907
        %v1909 = vmul.f32 %v1731, 1.442695
        %v1910 = vpow.pop %v1909
        %v1911 = vmul.f32 %v1732, 1.442695
        %v1912 = vpow.pop %v1911
        %v1913 = vmul.f32 %v1733, 1.442695
        %v1914 = vpow.pop %v1913
        %v1915 = vmul.f32 %v1734, 1.442695
        %v1916 = vpow.pop %v1915
        %v1917 = vmul.f32 %v1735, 1.442695
        %v1918 = vpow.pop %v1917
        %v1919 = vmul.f32 %v1736, 1.442695
        %v1920 = vpow.pop %v1919
        %v1921 = vmul.f32 %v1737, 1.442695
        %v1922 = vpow.pop %v1921
        %v1923 = vmul.f32 %v1738, 1.442695
        %v1924 = vpow.pop %v1923
        %v1925 = vmul.f32 %v1739, 1.442695
        %v1926 = vpow.pop %v1925
        %v1927 = vmul.f32 %v1740, 1.442695
        %v1928 = vpow.pop %v1927
        %v1929 = vmul.f32 %v1741, 1.442695
        %v1930 = vpow.pop %v1929
        %v1931 = vmul.f32 %v1742, 1.442695
        %v1932 = vpow.pop %v1931
        %v1933 = vmul.f32 %v1743, 1.442695
        %v1934 = vpow.pop %v1933
        %v1935 = vmul.f32 %v1744, 1.442695
        %v1936 = vpow.pop %v1935
        %v1937 = vmul.f32 %v1745, 1.442695
        %v1938 = vpow.pop %v1937
        %v1939 = vmul.f32 %v1746, 1.442695
        %v1940 = vpow.pop %v1939
        %v1941 = vmul.f32 %v1747, 1.442695
        %v1942 = vpow.pop %v1941
        %v1943 = vmul.f32 %v1748, 1.442695
        %v1944 = vpow.pop %v1943
        %v1945 = vmul.f32 %v1749, 1.442695
        %v1946 = vpow.pop %v1945
        %v1947 = vmul.f32 %v1750, 1.442695
        %v1948 = vpow.pop %v1947
        %v1949 = vmul.f32 %v1751, 1.442695
        %v1950 = vpow.pop %v1949
        %v1951 = vmul.f32 %v1752, 1.442695
        %v1952 = vpow.pop %v1951
        %v1953 = vmul.f32 %v1753, 1.442695
        %v1954 = vpow.pop %v1953
        %v1955 = vmul.f32 %v1754, 1.442695
        %v1956 = vpow.pop %v1955
        %v1957 = vmul.f32 %v1755, 1.442695
        %v1958 = vpow.pop %v1957
        %v1959 = vmul.f32 %v1756, 1.442695
        %v1960 = vpow.pop %v1959
        %v1961 = vmul.f32 %v1757, 1.442695
        %v1962 = vpow.pop %v1961
        %v1963 = vmul.f32 %v1758, 1.442695
        %v1964 = vpow.pop %v1963
        %v1965 = vmul.f32 %v1759, 1.442695
        %v1966 = vpow.pop %v1965
        %v1967 = vmul.f32 %v1760, 1.442695
        %v1968 = vpow.pop %v1967
        %v1969 = vmul.f32 %v1761, 1.442695
        %v1970 = vpow.pop %v1969
        %v1971 = vmul.f32 %v1762, 1.442695
        %v1972 = vpow.pop %v1971
        %v1973 = vmul.f32 %v1763, 1.442695
        %v1974 = vpow.pop %v1973
        %v1975 = vmul.f32 %v1764, 1.442695
        %v1976 = vpow.pop %v1975
        %v1977 = vmul.f32 %v1765, 1.442695
        %v1978 = vpow.pop %v1977
        %v1979 = vmul.f32 %v1766, 1.442695
        %v1980 = vpow.pop %v1979
        %v1981 = vmul.f32 %v1767, 1.442695
        %v1982 = vpow.pop %v1981
        %v1983 = vmul.f32 %v1768, 1.442695
        %v1984 = vpow.pop %v1983
        %v1985 = vmul.f32 %v1769, 1.442695
        %v1986 = vpow.pop %v1985
        %v1987 = vmul.f32 %v1770, 1.442695
        %v1988 = vpow.pop %v1987
        %v1989 = vmul.f32 %v1771, 1.442695
        %v1990 = vpow.pop %v1989
        %v1991 = vmul.f32 %v1772, 1.442695
        %v1992 = vpow.pop %v1991
        %v1993 = vmul.f32 %v1773, 1.442695
        %v1994 = vpow.pop %v1993
        %v1995 = vmul.f32 %v1774, 1.442695
        %v1996 = vpow.pop %v1995
        %v1997 = vmul.f32 %v1775, 1.442695
        %v1998 = vpow.pop %v1997
        %v1999 = vmul.f32 %v1776, 1.442695
        %v2000 = vpow.pop %v1999
        %v2001 = vmul.f32 %v1777, 1.442695
        %v2002 = vpow.pop %v2001
        %v2003 = vmul.f32 %v1778, 1.442695
        %v2004 = vpow.pop %v2003
        %v2005 = vmul.f32 %v1779, 1.442695
        %v2006 = vpow.pop %v2005
        %v2007 = vmul.f32 %v1780, 1.442695
        %v2008 = vpow.pop %v2007
        %v2009 = vmul.f32 %v1781, 1.442695
        %v2010 = vpow.pop %v2009
        %v2011 = vmul.f32 %v1782, 1.442695
        %v2012 = vpow.pop %v2011
        %v2013 = vmul.f32 %v1783, 1.442695
        %v2014 = vpow.pop %v2013
        %v2015 = vmul.f32 %v1784, 1.442695
        %v2016 = vpow.pop %v2015
        %v2017 = vmul.f32 %v1785, 1.442695
        %v2018 = vpow.pop %v2017
        %v2019 = vmul.f32 %v1786, 1.442695
        %v2020 = vpow.pop %v2019
        %v2021 = vmul.f32 %v1787, 1.442695
        %v2022 = vpow.pop %v2021
        %v2023 = vmul.f32 %v1788, 1.442695
        %v2024 = vpow.pop %v2023
        %v2025 = vmul.f32 %v1789, 1.442695
        %v2026 = vpow.pop %v2025
        %v2027 = vmul.f32 %v1790, 1.442695
        %v2028 = vpow.pop %v2027
        %v2029 = vmul.f32 %v1791, 1.442695
        %v2030 = vpow.pop %v2029
        %v2031 = vmul.f32 %v1792, 1.442695
        %v2032 = vpow.pop %v2031
        %v2033 = vmul.f32 %v1793, 1.442695
        %v2034 = vpow.pop %v2033
        %v2035 = vmul.f32 %v1794, 1.442695
        %v2036 = vpow.pop %v2035
        %v2037 = vmul.f32 %v1795, 1.442695
        %v2038 = vpow.pop %v2037
        %v2039 = vmul.f32 %v1796, 1.442695
        %v2040 = vpow.pop %v2039
        %v2041 = vmul.f32 %v1797, 1.442695
        %v2042 = vpow.pop %v2041
        %v2043 = vmul.f32 %v1798, 1.442695
        %v2044 = vpow.pop %v2043
        %v2045 = vmul.f32 %v1799, 1.442695
        %v2046 = vpow.pop %v2045
        %v2047 = vmul.f32 %v1800, 1.442695
        %v2048 = vpow.pop %v2047
        %v2049 = vmul.f32 %v1801, 1.442695
        %v2050 = vpow.pop %v2049
        %v2051 = vmul.f32 %v1802, 1.442695
        %v2052 = vpow.pop %v2051
        %v2053 = vmul.f32 %v1803, 1.442695
        %v2054 = vpow.pop %v2053
        %v2055 = vmul.f32 %v1804, 1.442695
        %v2056 = vpow.pop %v2055
        %v2057 = vmul.f32 %v1805, 1.442695
        %v2058 = vpow.pop %v2057
        %v2059 = vmul.f32 %v1806, 1.442695
        %v2060 = vpow.pop %v2059
        %v2061 = vmul.f32 %v1807, 1.442695
        %v2062 = vpow.pop %v2061
        %v2063 = vmul.f32 %v1808, 1.442695
        %v2064 = vpow.pop %v2063
        %v2065 = vadd.f32 %v1810, 1.0
        %v2066 = vlog2.pop %v2065
        %v2067 = vmul.f32 %v2066, 0.6931472
        %v2068 = vmul.f32 -0.5, %v1810
        %v2069 = vadd.f32 %v2068, 1.0
        %v2070 = vmul.f32 %v2069, %v1810
        %v2071 = vand.u32 2147483647, %v1810
        %vm2072 = vcmp.lt.f32.partialorder %v2071, 0.0004427343
        %v2073 = vsel %vm2072, %v2070, %v2067
        %v2074 = vadd.f32 %v1812, 1.0
        %v2075 = vlog2.pop %v2074
        %v2076 = vmul.f32 %v2075, 0.6931472
        %v2077 = vmul.f32 -0.5, %v1812
        %v2078 = vadd.f32 %v2077, 1.0
        %v2079 = vmul.f32 %v2078, %v1812
        %v2080 = vand.u32 2147483647, %v1812
        %vm2081 = vcmp.lt.f32.partialorder %v2080, 0.0004427343
        %v2082 = vsel %vm2081, %v2079, %v2076
        %v2083 = vadd.f32 %v1814, 1.0
        %v2084 = vlog2.pop %v2083
        %v2085 = vmul.f32 %v2084, 0.6931472
        %v2086 = vmul.f32 -0.5, %v1814
        %v2087 = vadd.f32 %v2086, 1.0
        %v2088 = vmul.f32 %v2087, %v1814
        %v2089 = vand.u32 2147483647, %v1814
        %vm2090 = vcmp.lt.f32.partialorder %v2089, 0.0004427343
        %v2091 = vsel %vm2090, %v2088, %v2085
        %v2092 = vadd.f32 %v1816, 1.0
        %v2093 = vlog2.pop %v2092
        %v2094 = vmul.f32 %v2093, 0.6931472
        %v2095 = vmul.f32 -0.5, %v1816
        %v2096 = vadd.f32 %v2095, 1.0
        %v2097 = vmul.f32 %v2096, %v1816
        %v2098 = vand.u32 2147483647, %v1816
        %vm2099 = vcmp.lt.f32.partialorder %v2098, 0.0004427343
        %v2100 = vsel %vm2099, %v2097, %v2094
        %v2101 = vadd.f32 %v1818, 1.0
        %v2102 = vlog2.pop %v2101
        %v2103 = vmul.f32 %v2102, 0.6931472
        %v2104 = vmul.f32 -0.5, %v1818
        %v2105 = vadd.f32 %v2104, 1.0
        %v2106 = vmul.f32 %v2105, %v1818
        %v2107 = vand.u32 2147483647, %v1818
        %vm2108 = vcmp.lt.f32.partialorder %v2107, 0.0004427343
        %v2109 = vsel %vm2108, %v2106, %v2103
        %v2110 = vadd.f32 %v1820, 1.0
        %v2111 = vlog2.pop %v2110
        %v2112 = vmul.f32 %v2111, 0.6931472
        %v2113 = vmul.f32 -0.5, %v1820
        %v2114 = vadd.f32 %v2113, 1.0
        %v2115 = vmul.f32 %v2114, %v1820
        %v2116 = vand.u32 2147483647, %v1820
        %vm2117 = vcmp.lt.f32.partialorder %v2116, 0.0004427343
        %v2118 = vsel %vm2117, %v2115, %v2112
        %v2119 = vadd.f32 %v1822, 1.0
        %v2120 = vlog2.pop %v2119
        %v2121 = vmul.f32 %v2120, 0.6931472
        %v2122 = vmul.f32 -0.5, %v1822
        %v2123 = vadd.f32 %v2122, 1.0
        %v2124 = vmul.f32 %v2123, %v1822
        %v2125 = vand.u32 2147483647, %v1822
        %vm2126 = vcmp.lt.f32.partialorder %v2125, 0.0004427343
        %v2127 = vsel %vm2126, %v2124, %v2121
        %v2128 = vadd.f32 %v1824, 1.0
        %v2129 = vlog2.pop %v2128
        %v2130 = vmul.f32 %v2129, 0.6931472
        %v2131 = vmul.f32 -0.5, %v1824
        %v2132 = vadd.f32 %v2131, 1.0
        %v2133 = vmul.f32 %v2132, %v1824
        %v2134 = vand.u32 2147483647, %v1824
        %vm2135 = vcmp.lt.f32.partialorder %v2134, 0.0004427343
        %v2136 = vsel %vm2135, %v2133, %v2130
        %v2137 = vadd.f32 %v1826, 1.0
        %v2138 = vlog2.pop %v2137
        %v2139 = vmul.f32 %v2138, 0.6931472
        %v2140 = vmul.f32 -0.5, %v1826
        %v2141 = vadd.f32 %v2140, 1.0
        %v2142 = vmul.f32 %v2141, %v1826
        %v2143 = vand.u32 2147483647, %v1826
        %vm2144 = vcmp.lt.f32.partialorder %v2143, 0.0004427343
        %v2145 = vsel %vm2144, %v2142, %v2139
        %v2146 = vadd.f32 %v1828, 1.0
        %v2147 = vlog2.pop %v2146
        %v2148 = vmul.f32 %v2147, 0.6931472
        %v2149 = vmul.f32 -0.5, %v1828
        %v2150 = vadd.f32 %v2149, 1.0
        %v2151 = vmul.f32 %v2150, %v1828
        %v2152 = vand.u32 2147483647, %v1828
        %vm2153 = vcmp.lt.f32.partialorder %v2152, 0.0004427343
        %v2154 = vsel %vm2153, %v2151, %v2148
        %v2155 = vadd.f32 %v1830, 1.0
        %v2156 = vlog2.pop %v2155
        %v2157 = vmul.f32 %v2156, 0.6931472
        %v2158 = vmul.f32 -0.5, %v1830
        %v2159 = vadd.f32 %v2158, 1.0
        %v2160 = vmul.f32 %v2159, %v1830
        %v2161 = vand.u32 2147483647, %v1830
        %vm2162 = vcmp.lt.f32.partialorder %v2161, 0.0004427343
        %v2163 = vsel %vm2162, %v2160, %v2157
        %v2164 = vadd.f32 %v1832, 1.0
        %v2165 = vlog2.pop %v2164
        %v2166 = vmul.f32 %v2165, 0.6931472
        %v2167 = vmul.f32 -0.5, %v1832
        %v2168 = vadd.f32 %v2167, 1.0
        %v2169 = vmul.f32 %v2168, %v1832
        %v2170 = vand.u32 2147483647, %v1832
        %vm2171 = vcmp.lt.f32.partialorder %v2170, 0.0004427343
        %v2172 = vsel %vm2171, %v2169, %v2166
        %v2173 = vadd.f32 %v1834, 1.0
        %v2174 = vlog2.pop %v2173
        %v2175 = vmul.f32 %v2174, 0.6931472
        %v2176 = vmul.f32 -0.5, %v1834
        %v2177 = vadd.f32 %v2176, 1.0
        %v2178 = vmul.f32 %v2177, %v1834
        %v2179 = vand.u32 2147483647, %v1834
        %vm2180 = vcmp.lt.f32.partialorder %v2179, 0.0004427343
        %v2181 = vsel %vm2180, %v2178, %v2175
        %v2182 = vadd.f32 %v1836, 1.0
        %v2183 = vlog2.pop %v2182
        %v2184 = vmul.f32 %v2183, 0.6931472
        %v2185 = vmul.f32 -0.5, %v1836
        %v2186 = vadd.f32 %v2185, 1.0
        %v2187 = vmul.f32 %v2186, %v1836
        %v2188 = vand.u32 2147483647, %v1836
        %vm2189 = vcmp.lt.f32.partialorder %v2188, 0.0004427343
        %v2190 = vsel %vm2189, %v2187, %v2184
        %v2191 = vadd.f32 %v1838, 1.0
        %v2192 = vlog2.pop %v2191
        %v2193 = vmul.f32 %v2192, 0.6931472
        %v2194 = vmul.f32 -0.5, %v1838
        %v2195 = vadd.f32 %v2194, 1.0
        %v2196 = vmul.f32 %v2195, %v1838
        %v2197 = vand.u32 2147483647, %v1838
        %vm2198 = vcmp.lt.f32.partialorder %v2197, 0.0004427343
        %v2199 = vsel %vm2198, %v2196, %v2193
        %v2200 = vadd.f32 %v1840, 1.0
        %v2201 = vlog2.pop %v2200
        %v2202 = vmul.f32 %v2201, 0.6931472
        %v2203 = vmul.f32 -0.5, %v1840
        %v2204 = vadd.f32 %v2203, 1.0
        %v2205 = vmul.f32 %v2204, %v1840
        %v2206 = vand.u32 2147483647, %v1840
        %vm2207 = vcmp.lt.f32.partialorder %v2206, 0.0004427343
        %v2208 = vsel %vm2207, %v2205, %v2202
        %v2209 = vadd.f32 %v1842, 1.0
        %v2210 = vlog2.pop %v2209
        %v2211 = vmul.f32 %v2210, 0.6931472
        %v2212 = vmul.f32 -0.5, %v1842
        %v2213 = vadd.f32 %v2212, 1.0
        %v2214 = vmul.f32 %v2213, %v1842
        %v2215 = vand.u32 2147483647, %v1842
        %vm2216 = vcmp.lt.f32.partialorder %v2215, 0.0004427343
        %v2217 = vsel %vm2216, %v2214, %v2211
        %v2218 = vadd.f32 %v1844, 1.0
        %v2219 = vlog2.pop %v2218
        %v2220 = vmul.f32 %v2219, 0.6931472
        %v2221 = vmul.f32 -0.5, %v1844
        %v2222 = vadd.f32 %v2221, 1.0
        %v2223 = vmul.f32 %v2222, %v1844
        %v2224 = vand.u32 2147483647, %v1844
        %vm2225 = vcmp.lt.f32.partialorder %v2224, 0.0004427343
        %v2226 = vsel %vm2225, %v2223, %v2220
        %v2227 = vadd.f32 %v1846, 1.0
        %v2228 = vlog2.pop %v2227
        %v2229 = vmul.f32 %v2228, 0.6931472
        %v2230 = vmul.f32 -0.5, %v1846
        %v2231 = vadd.f32 %v2230, 1.0
        %v2232 = vmul.f32 %v2231, %v1846
        %v2233 = vand.u32 2147483647, %v1846
        %vm2234 = vcmp.lt.f32.partialorder %v2233, 0.0004427343
        %v2235 = vsel %vm2234, %v2232, %v2229
        %v2236 = vadd.f32 %v1848, 1.0
        %v2237 = vlog2.pop %v2236
        %v2238 = vmul.f32 %v2237, 0.6931472
        %v2239 = vmul.f32 -0.5, %v1848
        %v2240 = vadd.f32 %v2239, 1.0
        %v2241 = vmul.f32 %v2240, %v1848
        %v2242 = vand.u32 2147483647, %v1848
        %vm2243 = vcmp.lt.f32.partialorder %v2242, 0.0004427343
        %v2244 = vsel %vm2243, %v2241, %v2238
        %v2245 = vadd.f32 %v1850, 1.0
        %v2246 = vlog2.pop %v2245
        %v2247 = vmul.f32 %v2246, 0.6931472
        %v2248 = vmul.f32 -0.5, %v1850
        %v2249 = vadd.f32 %v2248, 1.0
        %v2250 = vmul.f32 %v2249, %v1850
        %v2251 = vand.u32 2147483647, %v1850
        %vm2252 = vcmp.lt.f32.partialorder %v2251, 0.0004427343
        %v2253 = vsel %vm2252, %v2250, %v2247
        %v2254 = vadd.f32 %v1852, 1.0
        %v2255 = vlog2.pop %v2254
        %v2256 = vmul.f32 %v2255, 0.6931472
        %v2257 = vmul.f32 -0.5, %v1852
        %v2258 = vadd.f32 %v2257, 1.0
        %v2259 = vmul.f32 %v2258, %v1852
        %v2260 = vand.u32 2147483647, %v1852
        %vm2261 = vcmp.lt.f32.partialorder %v2260, 0.0004427343
        %v2262 = vsel %vm2261, %v2259, %v2256
        %v2263 = vadd.f32 %v1854, 1.0
        %v2264 = vlog2.pop %v2263
        %v2265 = vmul.f32 %v2264, 0.6931472
        %v2266 = vmul.f32 -0.5, %v1854
        %v2267 = vadd.f32 %v2266, 1.0
        %v2268 = vmul.f32 %v2267, %v1854
        %v2269 = vand.u32 2147483647, %v1854
        %vm2270 = vcmp.lt.f32.partialorder %v2269, 0.0004427343
        %v2271 = vsel %vm2270, %v2268, %v2265
        %v2272 = vadd.f32 %v1856, 1.0
        %v2273 = vlog2.pop %v2272
        %v2274 = vmul.f32 %v2273, 0.6931472
        %v2275 = vmul.f32 -0.5, %v1856
        %v2276 = vadd.f32 %v2275, 1.0
        %v2277 = vmul.f32 %v2276, %v1856
        %v2278 = vand.u32 2147483647, %v1856
        %vm2279 = vcmp.lt.f32.partialorder %v2278, 0.0004427343
        %v2280 = vsel %vm2279, %v2277, %v2274
        %v2281 = vadd.f32 %v1858, 1.0
        %v2282 = vlog2.pop %v2281
        %v2283 = vmul.f32 %v2282, 0.6931472
        %v2284 = vmul.f32 -0.5, %v1858
        %v2285 = vadd.f32 %v2284, 1.0
        %v2286 = vmul.f32 %v2285, %v1858
        %v2287 = vand.u32 2147483647, %v1858
        %vm2288 = vcmp.lt.f32.partialorder %v2287, 0.0004427343
        %v2289 = vsel %vm2288, %v2286, %v2283
        %v2290 = vadd.f32 %v1860, 1.0
        %v2291 = vlog2.pop %v2290
        %v2292 = vmul.f32 %v2291, 0.6931472
        %v2293 = vmul.f32 -0.5, %v1860
        %v2294 = vadd.f32 %v2293, 1.0
        %v2295 = vmul.f32 %v2294, %v1860
        %v2296 = vand.u32 2147483647, %v1860
        %vm2297 = vcmp.lt.f32.partialorder %v2296, 0.0004427343
        %v2298 = vsel %vm2297, %v2295, %v2292
        %v2299 = vadd.f32 %v1862, 1.0
        %v2300 = vlog2.pop %v2299
        %v2301 = vmul.f32 %v2300, 0.6931472
        %v2302 = vmul.f32 -0.5, %v1862
        %v2303 = vadd.f32 %v2302, 1.0
        %v2304 = vmul.f32 %v2303, %v1862
        %v2305 = vand.u32 2147483647, %v1862
        %vm2306 = vcmp.lt.f32.partialorder %v2305, 0.0004427343
        %v2307 = vsel %vm2306, %v2304, %v2301
        %v2308 = vadd.f32 %v1864, 1.0
        %v2309 = vlog2.pop %v2308
        %v2310 = vmul.f32 %v2309, 0.6931472
        %v2311 = vmul.f32 -0.5, %v1864
        %v2312 = vadd.f32 %v2311, 1.0
        %v2313 = vmul.f32 %v2312, %v1864
        %v2314 = vand.u32 2147483647, %v1864
        %vm2315 = vcmp.lt.f32.partialorder %v2314, 0.0004427343
        %v2316 = vsel %vm2315, %v2313, %v2310
        %v2317 = vadd.f32 %v1866, 1.0
        %v2318 = vlog2.pop %v2317
        %v2319 = vmul.f32 %v2318, 0.6931472
        %v2320 = vmul.f32 -0.5, %v1866
        %v2321 = vadd.f32 %v2320, 1.0
        %v2322 = vmul.f32 %v2321, %v1866
        %v2323 = vand.u32 2147483647, %v1866
        %vm2324 = vcmp.lt.f32.partialorder %v2323, 0.0004427343
        %v2325 = vsel %vm2324, %v2322, %v2319
        %v2326 = vadd.f32 %v1868, 1.0
        %v2327 = vlog2.pop %v2326
        %v2328 = vmul.f32 %v2327, 0.6931472
        %v2329 = vmul.f32 -0.5, %v1868
        %v2330 = vadd.f32 %v2329, 1.0
        %v2331 = vmul.f32 %v2330, %v1868
        %v2332 = vand.u32 2147483647, %v1868
        %vm2333 = vcmp.lt.f32.partialorder %v2332, 0.0004427343
        %v2334 = vsel %vm2333, %v2331, %v2328
        %v2335 = vadd.f32 %v1870, 1.0
        %v2336 = vlog2.pop %v2335
        %v2337 = vmul.f32 %v2336, 0.6931472
        %v2338 = vmul.f32 -0.5, %v1870
        %v2339 = vadd.f32 %v2338, 1.0
        %v2340 = vmul.f32 %v2339, %v1870
        %v2341 = vand.u32 2147483647, %v1870
        %vm2342 = vcmp.lt.f32.partialorder %v2341, 0.0004427343
        %v2343 = vsel %vm2342, %v2340, %v2337
        %v2344 = vadd.f32 %v1872, 1.0
        %v2345 = vlog2.pop %v2344
        %v2346 = vmul.f32 %v2345, 0.6931472
        %v2347 = vmul.f32 -0.5, %v1872
        %v2348 = vadd.f32 %v2347, 1.0
        %v2349 = vmul.f32 %v2348, %v1872
        %v2350 = vand.u32 2147483647, %v1872
        %vm2351 = vcmp.lt.f32.partialorder %v2350, 0.0004427343
        %v2352 = vsel %vm2351, %v2349, %v2346
        %v2353 = vadd.f32 %v1874, 1.0
        %v2354 = vlog2.pop %v2353
        %v2355 = vmul.f32 %v2354, 0.6931472
        %v2356 = vmul.f32 -0.5, %v1874
        %v2357 = vadd.f32 %v2356, 1.0
        %v2358 = vmul.f32 %v2357, %v1874
        %v2359 = vand.u32 2147483647, %v1874
        %vm2360 = vcmp.lt.f32.partialorder %v2359, 0.0004427343
        %v2361 = vsel %vm2360, %v2358, %v2355
        %v2362 = vadd.f32 %v1876, 1.0
        %v2363 = vlog2.pop %v2362
        %v2364 = vmul.f32 %v2363, 0.6931472
        %v2365 = vmul.f32 -0.5, %v1876
        %v2366 = vadd.f32 %v2365, 1.0
        %v2367 = vmul.f32 %v2366, %v1876
        %v2368 = vand.u32 2147483647, %v1876
        %vm2369 = vcmp.lt.f32.partialorder %v2368, 0.0004427343
        %v2370 = vsel %vm2369, %v2367, %v2364
        %v2371 = vadd.f32 %v1878, 1.0
        %v2372 = vlog2.pop %v2371
        %v2373 = vmul.f32 %v2372, 0.6931472
        %v2374 = vmul.f32 -0.5, %v1878
        %v2375 = vadd.f32 %v2374, 1.0
        %v2376 = vmul.f32 %v2375, %v1878
        %v2377 = vand.u32 2147483647, %v1878
        %vm2378 = vcmp.lt.f32.partialorder %v2377, 0.0004427343
        %v2379 = vsel %vm2378, %v2376, %v2373
        %v2380 = vadd.f32 %v1880, 1.0
        %v2381 = vlog2.pop %v2380
        %v2382 = vmul.f32 %v2381, 0.6931472
        %v2383 = vmul.f32 -0.5, %v1880
        %v2384 = vadd.f32 %v2383, 1.0
        %v2385 = vmul.f32 %v2384, %v1880
        %v2386 = vand.u32 2147483647, %v1880
        %vm2387 = vcmp.lt.f32.partialorder %v2386, 0.0004427343
        %v2388 = vsel %vm2387, %v2385, %v2382
        %v2389 = vadd.f32 %v1882, 1.0
        %v2390 = vlog2.pop %v2389
        %v2391 = vmul.f32 %v2390, 0.6931472
        %v2392 = vmul.f32 -0.5, %v1882
        %v2393 = vadd.f32 %v2392, 1.0
        %v2394 = vmul.f32 %v2393, %v1882
        %v2395 = vand.u32 2147483647, %v1882
        %vm2396 = vcmp.lt.f32.partialorder %v2395, 0.0004427343
        %v2397 = vsel %vm2396, %v2394, %v2391
        %v2398 = vadd.f32 %v1884, 1.0
        %v2399 = vlog2.pop %v2398
        %v2400 = vmul.f32 %v2399, 0.6931472
        %v2401 = vmul.f32 -0.5, %v1884
        %v2402 = vadd.f32 %v2401, 1.0
        %v2403 = vmul.f32 %v2402, %v1884
        %v2404 = vand.u32 2147483647, %v1884
        %vm2405 = vcmp.lt.f32.partialorder %v2404, 0.0004427343
        %v2406 = vsel %vm2405, %v2403, %v2400
        %v2407 = vadd.f32 %v1886, 1.0
        %v2408 = vlog2.pop %v2407
        %v2409 = vmul.f32 %v2408, 0.6931472
        %v2410 = vmul.f32 -0.5, %v1886
        %v2411 = vadd.f32 %v2410, 1.0
        %v2412 = vmul.f32 %v2411, %v1886
        %v2413 = vand.u32 2147483647, %v1886
        %vm2414 = vcmp.lt.f32.partialorder %v2413, 0.0004427343
        %v2415 = vsel %vm2414, %v2412, %v2409
        %v2416 = vadd.f32 %v1888, 1.0
        %v2417 = vlog2.pop %v2416
        %v2418 = vmul.f32 %v2417, 0.6931472
        %v2419 = vmul.f32 -0.5, %v1888
        %v2420 = vadd.f32 %v2419, 1.0
        %v2421 = vmul.f32 %v2420, %v1888
        %v2422 = vand.u32 2147483647, %v1888
        %vm2423 = vcmp.lt.f32.partialorder %v2422, 0.0004427343
        %v2424 = vsel %vm2423, %v2421, %v2418
        %v2425 = vadd.f32 %v1890, 1.0
        %v2426 = vlog2.pop %v2425
        %v2427 = vmul.f32 %v2426, 0.6931472
        %v2428 = vmul.f32 -0.5, %v1890
        %v2429 = vadd.f32 %v2428, 1.0
        %v2430 = vmul.f32 %v2429, %v1890
        %v2431 = vand.u32 2147483647, %v1890
        %vm2432 = vcmp.lt.f32.partialorder %v2431, 0.0004427343
        %v2433 = vsel %vm2432, %v2430, %v2427
        %v2434 = vadd.f32 %v1892, 1.0
        %v2435 = vlog2.pop %v2434
        %v2436 = vmul.f32 %v2435, 0.6931472
        %v2437 = vmul.f32 -0.5, %v1892
        %v2438 = vadd.f32 %v2437, 1.0
        %v2439 = vmul.f32 %v2438, %v1892
        %v2440 = vand.u32 2147483647, %v1892
        %vm2441 = vcmp.lt.f32.partialorder %v2440, 0.0004427343
        %v2442 = vsel %vm2441, %v2439, %v2436
        %v2443 = vadd.f32 %v1894, 1.0
        %v2444 = vlog2.pop %v2443
        %v2445 = vmul.f32 %v2444, 0.6931472
        %v2446 = vmul.f32 -0.5, %v1894
        %v2447 = vadd.f32 %v2446, 1.0
        %v2448 = vmul.f32 %v2447, %v1894
        %v2449 = vand.u32 2147483647, %v1894
        %vm2450 = vcmp.lt.f32.partialorder %v2449, 0.0004427343
        %v2451 = vsel %vm2450, %v2448, %v2445
        %v2452 = vadd.f32 %v1896, 1.0
        %v2453 = vlog2.pop %v2452
        %v2454 = vmul.f32 %v2453, 0.6931472
        %v2455 = vmul.f32 -0.5, %v1896
        %v2456 = vadd.f32 %v2455, 1.0
        %v2457 = vmul.f32 %v2456, %v1896
        %v2458 = vand.u32 2147483647, %v1896
        %vm2459 = vcmp.lt.f32.partialorder %v2458, 0.0004427343
        %v2460 = vsel %vm2459, %v2457, %v2454
        %v2461 = vadd.f32 %v1898, 1.0
        %v2462 = vlog2.pop %v2461
        %v2463 = vmul.f32 %v2462, 0.6931472
        %v2464 = vmul.f32 -0.5, %v1898
        %v2465 = vadd.f32 %v2464, 1.0
        %v2466 = vmul.f32 %v2465, %v1898
        %v2467 = vand.u32 2147483647, %v1898
        %vm2468 = vcmp.lt.f32.partialorder %v2467, 0.0004427343
        %v2469 = vsel %vm2468, %v2466, %v2463
        %v2470 = vadd.f32 %v1900, 1.0
        %v2471 = vlog2.pop %v2470
        %v2472 = vmul.f32 %v2471, 0.6931472
        %v2473 = vmul.f32 -0.5, %v1900
        %v2474 = vadd.f32 %v2473, 1.0
        %v2475 = vmul.f32 %v2474, %v1900
        %v2476 = vand.u32 2147483647, %v1900
        %vm2477 = vcmp.lt.f32.partialorder %v2476, 0.0004427343
        %v2478 = vsel %vm2477, %v2475, %v2472
        %v2479 = vadd.f32 %v1902, 1.0
        %v2480 = vlog2.pop %v2479
        %v2481 = vmul.f32 %v2480, 0.6931472
        %v2482 = vmul.f32 -0.5, %v1902
        %v2483 = vadd.f32 %v2482, 1.0
        %v2484 = vmul.f32 %v2483, %v1902
        %v2485 = vand.u32 2147483647, %v1902
        %vm2486 = vcmp.lt.f32.partialorder %v2485, 0.0004427343
        %v2487 = vsel %vm2486, %v2484, %v2481
        %v2488 = vadd.f32 %v1904, 1.0
        %v2489 = vlog2.pop %v2488
        %v2490 = vmul.f32 %v2489, 0.6931472
        %v2491 = vmul.f32 -0.5, %v1904
        %v2492 = vadd.f32 %v2491, 1.0
        %v2493 = vmul.f32 %v2492, %v1904
        %v2494 = vand.u32 2147483647, %v1904
        %vm2495 = vcmp.lt.f32.partialorder %v2494, 0.0004427343
        %v2496 = vsel %vm2495, %v2493, %v2490
        %v2497 = vadd.f32 %v1906, 1.0
        %v2498 = vlog2.pop %v2497
        %v2499 = vmul.f32 %v2498, 0.6931472
        %v2500 = vmul.f32 -0.5, %v1906
        %v2501 = vadd.f32 %v2500, 1.0
        %v2502 = vmul.f32 %v2501, %v1906
        %v2503 = vand.u32 2147483647, %v1906
        %vm2504 = vcmp.lt.f32.partialorder %v2503, 0.0004427343
        %v2505 = vsel %vm2504, %v2502, %v2499
        %v2506 = vadd.f32 %v1908, 1.0
        %v2507 = vlog2.pop %v2506
        %v2508 = vmul.f32 %v2507, 0.6931472
        %v2509 = vmul.f32 -0.5, %v1908
        %v2510 = vadd.f32 %v2509, 1.0
        %v2511 = vmul.f32 %v2510, %v1908
        %v2512 = vand.u32 2147483647, %v1908
        %vm2513 = vcmp.lt.f32.partialorder %v2512, 0.0004427343
        %v2514 = vsel %vm2513, %v2511, %v2508
        %v2515 = vadd.f32 %v1910, 1.0
        %v2516 = vlog2.pop %v2515
        %v2517 = vmul.f32 %v2516, 0.6931472
        %v2518 = vmul.f32 -0.5, %v1910
        %v2519 = vadd.f32 %v2518, 1.0
        %v2520 = vmul.f32 %v2519, %v1910
        %v2521 = vand.u32 2147483647, %v1910
        %vm2522 = vcmp.lt.f32.partialorder %v2521, 0.0004427343
        %v2523 = vsel %vm2522, %v2520, %v2517
        %v2524 = vadd.f32 %v1912, 1.0
        %v2525 = vlog2.pop %v2524
        %v2526 = vmul.f32 %v2525, 0.6931472
        %v2527 = vmul.f32 -0.5, %v1912
        %v2528 = vadd.f32 %v2527, 1.0
        %v2529 = vmul.f32 %v2528, %v1912
        %v2530 = vand.u32 2147483647, %v1912
        %vm2531 = vcmp.lt.f32.partialorder %v2530, 0.0004427343
        %v2532 = vsel %vm2531, %v2529, %v2526
        %v2533 = vadd.f32 %v1914, 1.0
        %v2534 = vlog2.pop %v2533
        %v2535 = vmul.f32 %v2534, 0.6931472
        %v2536 = vmul.f32 -0.5, %v1914
        %v2537 = vadd.f32 %v2536, 1.0
        %v2538 = vmul.f32 %v2537, %v1914
        %v2539 = vand.u32 2147483647, %v1914
        %vm2540 = vcmp.lt.f32.partialorder %v2539, 0.0004427343
        %v2541 = vsel %vm2540, %v2538, %v2535
        %v2542 = vadd.f32 %v1916, 1.0
        %v2543 = vlog2.pop %v2542
        %v2544 = vmul.f32 %v2543, 0.6931472
        %v2545 = vmul.f32 -0.5, %v1916
        %v2546 = vadd.f32 %v2545, 1.0
        %v2547 = vmul.f32 %v2546, %v1916
        %v2548 = vand.u32 2147483647, %v1916
        %vm2549 = vcmp.lt.f32.partialorder %v2548, 0.0004427343
        %v2550 = vsel %vm2549, %v2547, %v2544
        %v2551 = vadd.f32 %v1918, 1.0
        %v2552 = vlog2.pop %v2551
        %v2553 = vmul.f32 %v2552, 0.6931472
        %v2554 = vmul.f32 -0.5, %v1918
        %v2555 = vadd.f32 %v2554, 1.0
        %v2556 = vmul.f32 %v2555, %v1918
        %v2557 = vand.u32 2147483647, %v1918
        %vm2558 = vcmp.lt.f32.partialorder %v2557, 0.0004427343
        %v2559 = vsel %vm2558, %v2556, %v2553
        %v2560 = vadd.f32 %v1920, 1.0
        %v2561 = vlog2.pop %v2560
        %v2562 = vmul.f32 %v2561, 0.6931472
        %v2563 = vmul.f32 -0.5, %v1920
        %v2564 = vadd.f32 %v2563, 1.0
        %v2565 = vmul.f32 %v2564, %v1920
        %v2566 = vand.u32 2147483647, %v1920
        %vm2567 = vcmp.lt.f32.partialorder %v2566, 0.0004427343
        %v2568 = vsel %vm2567, %v2565, %v2562
        %v2569 = vadd.f32 %v1922, 1.0
        %v2570 = vlog2.pop %v2569
        %v2571 = vmul.f32 %v2570, 0.6931472
        %v2572 = vmul.f32 -0.5, %v1922
        %v2573 = vadd.f32 %v2572, 1.0
        %v2574 = vmul.f32 %v2573, %v1922
        %v2575 = vand.u32 2147483647, %v1922
        %vm2576 = vcmp.lt.f32.partialorder %v2575, 0.0004427343
        %v2577 = vsel %vm2576, %v2574, %v2571
        %v2578 = vadd.f32 %v1924, 1.0
        %v2579 = vlog2.pop %v2578
        %v2580 = vmul.f32 %v2579, 0.6931472
        %v2581 = vmul.f32 -0.5, %v1924
        %v2582 = vadd.f32 %v2581, 1.0
        %v2583 = vmul.f32 %v2582, %v1924
        %v2584 = vand.u32 2147483647, %v1924
        %vm2585 = vcmp.lt.f32.partialorder %v2584, 0.0004427343
        %v2586 = vsel %vm2585, %v2583, %v2580
        %v2587 = vadd.f32 %v1926, 1.0
        %v2588 = vlog2.pop %v2587
        %v2589 = vmul.f32 %v2588, 0.6931472
        %v2590 = vmul.f32 -0.5, %v1926
        %v2591 = vadd.f32 %v2590, 1.0
        %v2592 = vmul.f32 %v2591, %v1926
        %v2593 = vand.u32 2147483647, %v1926
        %vm2594 = vcmp.lt.f32.partialorder %v2593, 0.0004427343
        %v2595 = vsel %vm2594, %v2592, %v2589
        %v2596 = vadd.f32 %v1928, 1.0
        %v2597 = vlog2.pop %v2596
        %v2598 = vmul.f32 %v2597, 0.6931472
        %v2599 = vmul.f32 -0.5, %v1928
        %v2600 = vadd.f32 %v2599, 1.0
        %v2601 = vmul.f32 %v2600, %v1928
        %v2602 = vand.u32 2147483647, %v1928
        %vm2603 = vcmp.lt.f32.partialorder %v2602, 0.0004427343
        %v2604 = vsel %vm2603, %v2601, %v2598
        %v2605 = vadd.f32 %v1930, 1.0
        %v2606 = vlog2.pop %v2605
        %v2607 = vmul.f32 %v2606, 0.6931472
        %v2608 = vmul.f32 -0.5, %v1930
        %v2609 = vadd.f32 %v2608, 1.0
        %v2610 = vmul.f32 %v2609, %v1930
        %v2611 = vand.u32 2147483647, %v1930
        %vm2612 = vcmp.lt.f32.partialorder %v2611, 0.0004427343
        %v2613 = vsel %vm2612, %v2610, %v2607
        %v2614 = vadd.f32 %v1932, 1.0
        %v2615 = vlog2.pop %v2614
        %v2616 = vmul.f32 %v2615, 0.6931472
        %v2617 = vmul.f32 -0.5, %v1932
        %v2618 = vadd.f32 %v2617, 1.0
        %v2619 = vmul.f32 %v2618, %v1932
        %v2620 = vand.u32 2147483647, %v1932
        %vm2621 = vcmp.lt.f32.partialorder %v2620, 0.0004427343
        %v2622 = vsel %vm2621, %v2619, %v2616
        %v2623 = vadd.f32 %v1934, 1.0
        %v2624 = vlog2.pop %v2623
        %v2625 = vmul.f32 %v2624, 0.6931472
        %v2626 = vmul.f32 -0.5, %v1934
        %v2627 = vadd.f32 %v2626, 1.0
        %v2628 = vmul.f32 %v2627, %v1934
        %v2629 = vand.u32 2147483647, %v1934
        %vm2630 = vcmp.lt.f32.partialorder %v2629, 0.0004427343
        %v2631 = vsel %vm2630, %v2628, %v2625
        %v2632 = vadd.f32 %v1936, 1.0
        %v2633 = vlog2.pop %v2632
        %v2634 = vmul.f32 %v2633, 0.6931472
        %v2635 = vmul.f32 -0.5, %v1936
        %v2636 = vadd.f32 %v2635, 1.0
        %v2637 = vmul.f32 %v2636, %v1936
        %v2638 = vand.u32 2147483647, %v1936
        %vm2639 = vcmp.lt.f32.partialorder %v2638, 0.0004427343
        %v2640 = vsel %vm2639, %v2637, %v2634
        %v2641 = vadd.f32 %v1938, 1.0
        %v2642 = vlog2.pop %v2641
        %v2643 = vmul.f32 %v2642, 0.6931472
        %v2644 = vmul.f32 -0.5, %v1938
        %v2645 = vadd.f32 %v2644, 1.0
        %v2646 = vmul.f32 %v2645, %v1938
        %v2647 = vand.u32 2147483647, %v1938
        %vm2648 = vcmp.lt.f32.partialorder %v2647, 0.0004427343
        %v2649 = vsel %vm2648, %v2646, %v2643
        %v2650 = vadd.f32 %v1940, 1.0
        %v2651 = vlog2.pop %v2650
        %v2652 = vmul.f32 %v2651, 0.6931472
        %v2653 = vmul.f32 -0.5, %v1940
        %v2654 = vadd.f32 %v2653, 1.0
        %v2655 = vmul.f32 %v2654, %v1940
        %v2656 = vand.u32 2147483647, %v1940
        %vm2657 = vcmp.lt.f32.partialorder %v2656, 0.0004427343
        %v2658 = vsel %vm2657, %v2655, %v2652
        %v2659 = vadd.f32 %v1942, 1.0
        %v2660 = vlog2.pop %v2659
        %v2661 = vmul.f32 %v2660, 0.6931472
        %v2662 = vmul.f32 -0.5, %v1942
        %v2663 = vadd.f32 %v2662, 1.0
        %v2664 = vmul.f32 %v2663, %v1942
        %v2665 = vand.u32 2147483647, %v1942
        %vm2666 = vcmp.lt.f32.partialorder %v2665, 0.0004427343
        %v2667 = vsel %vm2666, %v2664, %v2661
        %v2668 = vadd.f32 %v1944, 1.0
        %v2669 = vlog2.pop %v2668
        %v2670 = vmul.f32 %v2669, 0.6931472
        %v2671 = vmul.f32 -0.5, %v1944
        %v2672 = vadd.f32 %v2671, 1.0
        %v2673 = vmul.f32 %v2672, %v1944
        %v2674 = vand.u32 2147483647, %v1944
        %vm2675 = vcmp.lt.f32.partialorder %v2674, 0.0004427343
        %v2676 = vsel %vm2675, %v2673, %v2670
        %v2677 = vadd.f32 %v1946, 1.0
        %v2678 = vlog2.pop %v2677
        %v2679 = vmul.f32 %v2678, 0.6931472
        %v2680 = vmul.f32 -0.5, %v1946
        %v2681 = vadd.f32 %v2680, 1.0
        %v2682 = vmul.f32 %v2681, %v1946
        %v2683 = vand.u32 2147483647, %v1946
        %vm2684 = vcmp.lt.f32.partialorder %v2683, 0.0004427343
        %v2685 = vsel %vm2684, %v2682, %v2679
        %v2686 = vadd.f32 %v1948, 1.0
        %v2687 = vlog2.pop %v2686
        %v2688 = vmul.f32 %v2687, 0.6931472
        %v2689 = vmul.f32 -0.5, %v1948
        %v2690 = vadd.f32 %v2689, 1.0
        %v2691 = vmul.f32 %v2690, %v1948
        %v2692 = vand.u32 2147483647, %v1948
        %vm2693 = vcmp.lt.f32.partialorder %v2692, 0.0004427343
        %v2694 = vsel %vm2693, %v2691, %v2688
        %v2695 = vadd.f32 %v1950, 1.0
        %v2696 = vlog2.pop %v2695
        %v2697 = vmul.f32 %v2696, 0.6931472
        %v2698 = vmul.f32 -0.5, %v1950
        %v2699 = vadd.f32 %v2698, 1.0
        %v2700 = vmul.f32 %v2699, %v1950
        %v2701 = vand.u32 2147483647, %v1950
        %vm2702 = vcmp.lt.f32.partialorder %v2701, 0.0004427343
        %v2703 = vsel %vm2702, %v2700, %v2697
        %v2704 = vadd.f32 %v1952, 1.0
        %v2705 = vlog2.pop %v2704
        %v2706 = vmul.f32 %v2705, 0.6931472
        %v2707 = vmul.f32 -0.5, %v1952
        %v2708 = vadd.f32 %v2707, 1.0
        %v2709 = vmul.f32 %v2708, %v1952
        %v2710 = vand.u32 2147483647, %v1952
        %vm2711 = vcmp.lt.f32.partialorder %v2710, 0.0004427343
        %v2712 = vsel %vm2711, %v2709, %v2706
        %v2713 = vadd.f32 %v1954, 1.0
        %v2714 = vlog2.pop %v2713
        %v2715 = vmul.f32 %v2714, 0.6931472
        %v2716 = vmul.f32 -0.5, %v1954
        %v2717 = vadd.f32 %v2716, 1.0
        %v2718 = vmul.f32 %v2717, %v1954
        %v2719 = vand.u32 2147483647, %v1954
        %vm2720 = vcmp.lt.f32.partialorder %v2719, 0.0004427343
        %v2721 = vsel %vm2720, %v2718, %v2715
        %v2722 = vadd.f32 %v1956, 1.0
        %v2723 = vlog2.pop %v2722
        %v2724 = vmul.f32 %v2723, 0.6931472
        %v2725 = vmul.f32 -0.5, %v1956
        %v2726 = vadd.f32 %v2725, 1.0
        %v2727 = vmul.f32 %v2726, %v1956
        %v2728 = vand.u32 2147483647, %v1956
        %vm2729 = vcmp.lt.f32.partialorder %v2728, 0.0004427343
        %v2730 = vsel %vm2729, %v2727, %v2724
        %v2731 = vadd.f32 %v1958, 1.0
        %v2732 = vlog2.pop %v2731
        %v2733 = vmul.f32 %v2732, 0.6931472
        %v2734 = vmul.f32 -0.5, %v1958
        %v2735 = vadd.f32 %v2734, 1.0
        %v2736 = vmul.f32 %v2735, %v1958
        %v2737 = vand.u32 2147483647, %v1958
        %vm2738 = vcmp.lt.f32.partialorder %v2737, 0.0004427343
        %v2739 = vsel %vm2738, %v2736, %v2733
        %v2740 = vadd.f32 %v1960, 1.0
        %v2741 = vlog2.pop %v2740
        %v2742 = vmul.f32 %v2741, 0.6931472
        %v2743 = vmul.f32 -0.5, %v1960
        %v2744 = vadd.f32 %v2743, 1.0
        %v2745 = vmul.f32 %v2744, %v1960
        %v2746 = vand.u32 2147483647, %v1960
        %vm2747 = vcmp.lt.f32.partialorder %v2746, 0.0004427343
        %v2748 = vsel %vm2747, %v2745, %v2742
        %v2749 = vadd.f32 %v1962, 1.0
        %v2750 = vlog2.pop %v2749
        %v2751 = vmul.f32 %v2750, 0.6931472
        %v2752 = vmul.f32 -0.5, %v1962
        %v2753 = vadd.f32 %v2752, 1.0
        %v2754 = vmul.f32 %v2753, %v1962
        %v2755 = vand.u32 2147483647, %v1962
        %vm2756 = vcmp.lt.f32.partialorder %v2755, 0.0004427343
        %v2757 = vsel %vm2756, %v2754, %v2751
        %v2758 = vadd.f32 %v1964, 1.0
        %v2759 = vlog2.pop %v2758
        %v2760 = vmul.f32 %v2759, 0.6931472
        %v2761 = vmul.f32 -0.5, %v1964
        %v2762 = vadd.f32 %v2761, 1.0
        %v2763 = vmul.f32 %v2762, %v1964
        %v2764 = vand.u32 2147483647, %v1964
        %vm2765 = vcmp.lt.f32.partialorder %v2764, 0.0004427343
        %v2766 = vsel %vm2765, %v2763, %v2760
        %v2767 = vadd.f32 %v1966, 1.0
        %v2768 = vlog2.pop %v2767
        %v2769 = vmul.f32 %v2768, 0.6931472
        %v2770 = vmul.f32 -0.5, %v1966
        %v2771 = vadd.f32 %v2770, 1.0
        %v2772 = vmul.f32 %v2771, %v1966
        %v2773 = vand.u32 2147483647, %v1966
        %vm2774 = vcmp.lt.f32.partialorder %v2773, 0.0004427343
        %v2775 = vsel %vm2774, %v2772, %v2769
        %v2776 = vadd.f32 %v1968, 1.0
        %v2777 = vlog2.pop %v2776
        %v2778 = vmul.f32 %v2777, 0.6931472
        %v2779 = vmul.f32 -0.5, %v1968
        %v2780 = vadd.f32 %v2779, 1.0
        %v2781 = vmul.f32 %v2780, %v1968
        %v2782 = vand.u32 2147483647, %v1968
        %vm2783 = vcmp.lt.f32.partialorder %v2782, 0.0004427343
        %v2784 = vsel %vm2783, %v2781, %v2778
        %v2785 = vadd.f32 %v1970, 1.0
        %v2786 = vlog2.pop %v2785
        %v2787 = vmul.f32 %v2786, 0.6931472
        %v2788 = vmul.f32 -0.5, %v1970
        %v2789 = vadd.f32 %v2788, 1.0
        %v2790 = vmul.f32 %v2789, %v1970
        %v2791 = vand.u32 2147483647, %v1970
        %vm2792 = vcmp.lt.f32.partialorder %v2791, 0.0004427343
        %v2793 = vsel %vm2792, %v2790, %v2787
        %v2794 = vadd.f32 %v1972, 1.0
        %v2795 = vlog2.pop %v2794
        %v2796 = vmul.f32 %v2795, 0.6931472
        %v2797 = vmul.f32 -0.5, %v1972
        %v2798 = vadd.f32 %v2797, 1.0
        %v2799 = vmul.f32 %v2798, %v1972
        %v2800 = vand.u32 2147483647, %v1972
        %vm2801 = vcmp.lt.f32.partialorder %v2800, 0.0004427343
        %v2802 = vsel %vm2801, %v2799, %v2796
        %v2803 = vadd.f32 %v1974, 1.0
        %v2804 = vlog2.pop %v2803
        %v2805 = vmul.f32 %v2804, 0.6931472
        %v2806 = vmul.f32 -0.5, %v1974
        %v2807 = vadd.f32 %v2806, 1.0
        %v2808 = vmul.f32 %v2807, %v1974
        %v2809 = vand.u32 2147483647, %v1974
        %vm2810 = vcmp.lt.f32.partialorder %v2809, 0.0004427343
        %v2811 = vsel %vm2810, %v2808, %v2805
        %v2812 = vadd.f32 %v1976, 1.0
        %v2813 = vlog2.pop %v2812
        %v2814 = vmul.f32 %v2813, 0.6931472
        %v2815 = vmul.f32 -0.5, %v1976
        %v2816 = vadd.f32 %v2815, 1.0
        %v2817 = vmul.f32 %v2816, %v1976
        %v2818 = vand.u32 2147483647, %v1976
        %vm2819 = vcmp.lt.f32.partialorder %v2818, 0.0004427343
        %v2820 = vsel %vm2819, %v2817, %v2814
        %v2821 = vadd.f32 %v1978, 1.0
        %v2822 = vlog2.pop %v2821
        %v2823 = vmul.f32 %v2822, 0.6931472
        %v2824 = vmul.f32 -0.5, %v1978
        %v2825 = vadd.f32 %v2824, 1.0
        %v2826 = vmul.f32 %v2825, %v1978
        %v2827 = vand.u32 2147483647, %v1978
        %vm2828 = vcmp.lt.f32.partialorder %v2827, 0.0004427343
        %v2829 = vsel %vm2828, %v2826, %v2823
        %v2830 = vadd.f32 %v1980, 1.0
        %v2831 = vlog2.pop %v2830
        %v2832 = vmul.f32 %v2831, 0.6931472
        %v2833 = vmul.f32 -0.5, %v1980
        %v2834 = vadd.f32 %v2833, 1.0
        %v2835 = vmul.f32 %v2834, %v1980
        %v2836 = vand.u32 2147483647, %v1980
        %vm2837 = vcmp.lt.f32.partialorder %v2836, 0.0004427343
        %v2838 = vsel %vm2837, %v2835, %v2832
        %v2839 = vadd.f32 %v1982, 1.0
        %v2840 = vlog2.pop %v2839
        %v2841 = vmul.f32 %v2840, 0.6931472
        %v2842 = vmul.f32 -0.5, %v1982
        %v2843 = vadd.f32 %v2842, 1.0
        %v2844 = vmul.f32 %v2843, %v1982
        %v2845 = vand.u32 2147483647, %v1982
        %vm2846 = vcmp.lt.f32.partialorder %v2845, 0.0004427343
        %v2847 = vsel %vm2846, %v2844, %v2841
        %v2848 = vadd.f32 %v1984, 1.0
        %v2849 = vlog2.pop %v2848
        %v2850 = vmul.f32 %v2849, 0.6931472
        %v2851 = vmul.f32 -0.5, %v1984
        %v2852 = vadd.f32 %v2851, 1.0
        %v2853 = vmul.f32 %v2852, %v1984
        %v2854 = vand.u32 2147483647, %v1984
        %vm2855 = vcmp.lt.f32.partialorder %v2854, 0.0004427343
        %v2856 = vsel %vm2855, %v2853, %v2850
        %v2857 = vadd.f32 %v1986, 1.0
        %v2858 = vlog2.pop %v2857
        %v2859 = vmul.f32 %v2858, 0.6931472
        %v2860 = vmul.f32 -0.5, %v1986
        %v2861 = vadd.f32 %v2860, 1.0
        %v2862 = vmul.f32 %v2861, %v1986
        %v2863 = vand.u32 2147483647, %v1986
        %vm2864 = vcmp.lt.f32.partialorder %v2863, 0.0004427343
        %v2865 = vsel %vm2864, %v2862, %v2859
        %v2866 = vadd.f32 %v1988, 1.0
        %v2867 = vlog2.pop %v2866
        %v2868 = vmul.f32 %v2867, 0.6931472
        %v2869 = vmul.f32 -0.5, %v1988
        %v2870 = vadd.f32 %v2869, 1.0
        %v2871 = vmul.f32 %v2870, %v1988
        %v2872 = vand.u32 2147483647, %v1988
        %vm2873 = vcmp.lt.f32.partialorder %v2872, 0.0004427343
        %v2874 = vsel %vm2873, %v2871, %v2868
        %v2875 = vadd.f32 %v1990, 1.0
        %v2876 = vlog2.pop %v2875
        %v2877 = vmul.f32 %v2876, 0.6931472
        %v2878 = vmul.f32 -0.5, %v1990
        %v2879 = vadd.f32 %v2878, 1.0
        %v2880 = vmul.f32 %v2879, %v1990
        %v2881 = vand.u32 2147483647, %v1990
        %vm2882 = vcmp.lt.f32.partialorder %v2881, 0.0004427343
        %v2883 = vsel %vm2882, %v2880, %v2877
        %v2884 = vadd.f32 %v1992, 1.0
        %v2885 = vlog2.pop %v2884
        %v2886 = vmul.f32 %v2885, 0.6931472
        %v2887 = vmul.f32 -0.5, %v1992
        %v2888 = vadd.f32 %v2887, 1.0
        %v2889 = vmul.f32 %v2888, %v1992
        %v2890 = vand.u32 2147483647, %v1992
        %vm2891 = vcmp.lt.f32.partialorder %v2890, 0.0004427343
        %v2892 = vsel %vm2891, %v2889, %v2886
        %v2893 = vadd.f32 %v1994, 1.0
        %v2894 = vlog2.pop %v2893
        %v2895 = vmul.f32 %v2894, 0.6931472
        %v2896 = vmul.f32 -0.5, %v1994
        %v2897 = vadd.f32 %v2896, 1.0
        %v2898 = vmul.f32 %v2897, %v1994
        %v2899 = vand.u32 2147483647, %v1994
        %vm2900 = vcmp.lt.f32.partialorder %v2899, 0.0004427343
        %v2901 = vsel %vm2900, %v2898, %v2895
        %v2902 = vadd.f32 %v1996, 1.0
        %v2903 = vlog2.pop %v2902
        %v2904 = vmul.f32 %v2903, 0.6931472
        %v2905 = vmul.f32 -0.5, %v1996
        %v2906 = vadd.f32 %v2905, 1.0
        %v2907 = vmul.f32 %v2906, %v1996
        %v2908 = vand.u32 2147483647, %v1996
        %vm2909 = vcmp.lt.f32.partialorder %v2908, 0.0004427343
        %v2910 = vsel %vm2909, %v2907, %v2904
        %v2911 = vadd.f32 %v1998, 1.0
        %v2912 = vlog2.pop %v2911
        %v2913 = vmul.f32 %v2912, 0.6931472
        %v2914 = vmul.f32 -0.5, %v1998
        %v2915 = vadd.f32 %v2914, 1.0
        %v2916 = vmul.f32 %v2915, %v1998
        %v2917 = vand.u32 2147483647, %v1998
        %vm2918 = vcmp.lt.f32.partialorder %v2917, 0.0004427343
        %v2919 = vsel %vm2918, %v2916, %v2913
        %v2920 = vadd.f32 %v2000, 1.0
        %v2921 = vlog2.pop %v2920
        %v2922 = vmul.f32 %v2921, 0.6931472
        %v2923 = vmul.f32 -0.5, %v2000
        %v2924 = vadd.f32 %v2923, 1.0
        %v2925 = vmul.f32 %v2924, %v2000
        %v2926 = vand.u32 2147483647, %v2000
        %vm2927 = vcmp.lt.f32.partialorder %v2926, 0.0004427343
        %v2928 = vsel %vm2927, %v2925, %v2922
        %v2929 = vadd.f32 %v2002, 1.0
        %v2930 = vlog2.pop %v2929
        %v2931 = vmul.f32 %v2930, 0.6931472
        %v2932 = vmul.f32 -0.5, %v2002
        %v2933 = vadd.f32 %v2932, 1.0
        %v2934 = vmul.f32 %v2933, %v2002
        %v2935 = vand.u32 2147483647, %v2002
        %vm2936 = vcmp.lt.f32.partialorder %v2935, 0.0004427343
        %v2937 = vsel %vm2936, %v2934, %v2931
        %v2938 = vadd.f32 %v2004, 1.0
        %v2939 = vlog2.pop %v2938
        %v2940 = vmul.f32 %v2939, 0.6931472
        %v2941 = vmul.f32 -0.5, %v2004
        %v2942 = vadd.f32 %v2941, 1.0
        %v2943 = vmul.f32 %v2942, %v2004
        %v2944 = vand.u32 2147483647, %v2004
        %vm2945 = vcmp.lt.f32.partialorder %v2944, 0.0004427343
        %v2946 = vsel %vm2945, %v2943, %v2940
        %v2947 = vadd.f32 %v2006, 1.0
        %v2948 = vlog2.pop %v2947
        %v2949 = vmul.f32 %v2948, 0.6931472
        %v2950 = vmul.f32 -0.5, %v2006
        %v2951 = vadd.f32 %v2950, 1.0
        %v2952 = vmul.f32 %v2951, %v2006
        %v2953 = vand.u32 2147483647, %v2006
        %vm2954 = vcmp.lt.f32.partialorder %v2953, 0.0004427343
        %v2955 = vsel %vm2954, %v2952, %v2949
        %v2956 = vadd.f32 %v2008, 1.0
        %v2957 = vlog2.pop %v2956
        %v2958 = vmul.f32 %v2957, 0.6931472
        %v2959 = vmul.f32 -0.5, %v2008
        %v2960 = vadd.f32 %v2959, 1.0
        %v2961 = vmul.f32 %v2960, %v2008
        %v2962 = vand.u32 2147483647, %v2008
        %vm2963 = vcmp.lt.f32.partialorder %v2962, 0.0004427343
        %v2964 = vsel %vm2963, %v2961, %v2958
        %v2965 = vadd.f32 %v2010, 1.0
        %v2966 = vlog2.pop %v2965
        %v2967 = vmul.f32 %v2966, 0.6931472
        %v2968 = vmul.f32 -0.5, %v2010
        %v2969 = vadd.f32 %v2968, 1.0
        %v2970 = vmul.f32 %v2969, %v2010
        %v2971 = vand.u32 2147483647, %v2010
        %vm2972 = vcmp.lt.f32.partialorder %v2971, 0.0004427343
        %v2973 = vsel %vm2972, %v2970, %v2967
        %v2974 = vadd.f32 %v2012, 1.0
        %v2975 = vlog2.pop %v2974
        %v2976 = vmul.f32 %v2975, 0.6931472
        %v2977 = vmul.f32 -0.5, %v2012
        %v2978 = vadd.f32 %v2977, 1.0
        %v2979 = vmul.f32 %v2978, %v2012
        %v2980 = vand.u32 2147483647, %v2012
        %vm2981 = vcmp.lt.f32.partialorder %v2980, 0.0004427343
        %v2982 = vsel %vm2981, %v2979, %v2976
        %v2983 = vadd.f32 %v2014, 1.0
        %v2984 = vlog2.pop %v2983
        %v2985 = vmul.f32 %v2984, 0.6931472
        %v2986 = vmul.f32 -0.5, %v2014
        %v2987 = vadd.f32 %v2986, 1.0
        %v2988 = vmul.f32 %v2987, %v2014
        %v2989 = vand.u32 2147483647, %v2014
        %vm2990 = vcmp.lt.f32.partialorder %v2989, 0.0004427343
        %v2991 = vsel %vm2990, %v2988, %v2985
        %v2992 = vadd.f32 %v2016, 1.0
        %v2993 = vlog2.pop %v2992
        %v2994 = vmul.f32 %v2993, 0.6931472
        %v2995 = vmul.f32 -0.5, %v2016
        %v2996 = vadd.f32 %v2995, 1.0
        %v2997 = vmul.f32 %v2996, %v2016
        %v2998 = vand.u32 2147483647, %v2016
        %vm2999 = vcmp.lt.f32.partialorder %v2998, 0.0004427343
        %v3000 = vsel %vm2999, %v2997, %v2994
        %v3001 = vadd.f32 %v2018, 1.0
        %v3002 = vlog2.pop %v3001
        %v3003 = vmul.f32 %v3002, 0.6931472
        %v3004 = vmul.f32 -0.5, %v2018
        %v3005 = vadd.f32 %v3004, 1.0
        %v3006 = vmul.f32 %v3005, %v2018
        %v3007 = vand.u32 2147483647, %v2018
        %vm3008 = vcmp.lt.f32.partialorder %v3007, 0.0004427343
        %v3009 = vsel %vm3008, %v3006, %v3003
        %v3010 = vadd.f32 %v2020, 1.0
        %v3011 = vlog2.pop %v3010
        %v3012 = vmul.f32 %v3011, 0.6931472
        %v3013 = vmul.f32 -0.5, %v2020
        %v3014 = vadd.f32 %v3013, 1.0
        %v3015 = vmul.f32 %v3014, %v2020
        %v3016 = vand.u32 2147483647, %v2020
        %vm3017 = vcmp.lt.f32.partialorder %v3016, 0.0004427343
        %v3018 = vsel %vm3017, %v3015, %v3012
        %v3019 = vadd.f32 %v2022, 1.0
        %v3020 = vlog2.pop %v3019
        %v3021 = vmul.f32 %v3020, 0.6931472
        %v3022 = vmul.f32 -0.5, %v2022
        %v3023 = vadd.f32 %v3022, 1.0
        %v3024 = vmul.f32 %v3023, %v2022
        %v3025 = vand.u32 2147483647, %v2022
        %vm3026 = vcmp.lt.f32.partialorder %v3025, 0.0004427343
        %v3027 = vsel %vm3026, %v3024, %v3021
        %v3028 = vadd.f32 %v2024, 1.0
        %v3029 = vlog2.pop %v3028
        %v3030 = vmul.f32 %v3029, 0.6931472
        %v3031 = vmul.f32 -0.5, %v2024
        %v3032 = vadd.f32 %v3031, 1.0
        %v3033 = vmul.f32 %v3032, %v2024
        %v3034 = vand.u32 2147483647, %v2024
        %vm3035 = vcmp.lt.f32.partialorder %v3034, 0.0004427343
        %v3036 = vsel %vm3035, %v3033, %v3030
        %v3037 = vadd.f32 %v2026, 1.0
        %v3038 = vlog2.pop %v3037
        %v3039 = vmul.f32 %v3038, 0.6931472
        %v3040 = vmul.f32 -0.5, %v2026
        %v3041 = vadd.f32 %v3040, 1.0
        %v3042 = vmul.f32 %v3041, %v2026
        %v3043 = vand.u32 2147483647, %v2026
        %vm3044 = vcmp.lt.f32.partialorder %v3043, 0.0004427343
        %v3045 = vsel %vm3044, %v3042, %v3039
        %v3046 = vadd.f32 %v2028, 1.0
        %v3047 = vlog2.pop %v3046
        %v3048 = vmul.f32 %v3047, 0.6931472
        %v3049 = vmul.f32 -0.5, %v2028
        %v3050 = vadd.f32 %v3049, 1.0
        %v3051 = vmul.f32 %v3050, %v2028
        %v3052 = vand.u32 2147483647, %v2028
        %vm3053 = vcmp.lt.f32.partialorder %v3052, 0.0004427343
        %v3054 = vsel %vm3053, %v3051, %v3048
        %v3055 = vadd.f32 %v2030, 1.0
        %v3056 = vlog2.pop %v3055
        %v3057 = vmul.f32 %v3056, 0.6931472
        %v3058 = vmul.f32 -0.5, %v2030
        %v3059 = vadd.f32 %v3058, 1.0
        %v3060 = vmul.f32 %v3059, %v2030
        %v3061 = vand.u32 2147483647, %v2030
        %vm3062 = vcmp.lt.f32.partialorder %v3061, 0.0004427343
        %v3063 = vsel %vm3062, %v3060, %v3057
        %v3064 = vadd.f32 %v2032, 1.0
        %v3065 = vlog2.pop %v3064
        %v3066 = vmul.f32 %v3065, 0.6931472
        %v3067 = vmul.f32 -0.5, %v2032
        %v3068 = vadd.f32 %v3067, 1.0
        %v3069 = vmul.f32 %v3068, %v2032
        %v3070 = vand.u32 2147483647, %v2032
        %vm3071 = vcmp.lt.f32.partialorder %v3070, 0.0004427343
        %v3072 = vsel %vm3071, %v3069, %v3066
        %v3073 = vadd.f32 %v2034, 1.0
        %v3074 = vlog2.pop %v3073
        %v3075 = vmul.f32 %v3074, 0.6931472
        %v3076 = vmul.f32 -0.5, %v2034
        %v3077 = vadd.f32 %v3076, 1.0
        %v3078 = vmul.f32 %v3077, %v2034
        %v3079 = vand.u32 2147483647, %v2034
        %vm3080 = vcmp.lt.f32.partialorder %v3079, 0.0004427343
        %v3081 = vsel %vm3080, %v3078, %v3075
        %v3082 = vadd.f32 %v2036, 1.0
        %v3083 = vlog2.pop %v3082
        %v3084 = vmul.f32 %v3083, 0.6931472
        %v3085 = vmul.f32 -0.5, %v2036
        %v3086 = vadd.f32 %v3085, 1.0
        %v3087 = vmul.f32 %v3086, %v2036
        %v3088 = vand.u32 2147483647, %v2036
        %vm3089 = vcmp.lt.f32.partialorder %v3088, 0.0004427343
        %v3090 = vsel %vm3089, %v3087, %v3084
        %v3091 = vadd.f32 %v2038, 1.0
        %v3092 = vlog2.pop %v3091
        %v3093 = vmul.f32 %v3092, 0.6931472
        %v3094 = vmul.f32 -0.5, %v2038
        %v3095 = vadd.f32 %v3094, 1.0
        %v3096 = vmul.f32 %v3095, %v2038
        %v3097 = vand.u32 2147483647, %v2038
        %vm3098 = vcmp.lt.f32.partialorder %v3097, 0.0004427343
        %v3099 = vsel %vm3098, %v3096, %v3093
        %v3100 = vadd.f32 %v2040, 1.0
        %v3101 = vlog2.pop %v3100
        %v3102 = vmul.f32 %v3101, 0.6931472
        %v3103 = vmul.f32 -0.5, %v2040
        %v3104 = vadd.f32 %v3103, 1.0
        %v3105 = vmul.f32 %v3104, %v2040
        %v3106 = vand.u32 2147483647, %v2040
        %vm3107 = vcmp.lt.f32.partialorder %v3106, 0.0004427343
        %v3108 = vsel %vm3107, %v3105, %v3102
        %v3109 = vadd.f32 %v2042, 1.0
        %v3110 = vlog2.pop %v3109
        %v3111 = vmul.f32 %v3110, 0.6931472
        %v3112 = vmul.f32 -0.5, %v2042
        %v3113 = vadd.f32 %v3112, 1.0
        %v3114 = vmul.f32 %v3113, %v2042
        %v3115 = vand.u32 2147483647, %v2042
        %vm3116 = vcmp.lt.f32.partialorder %v3115, 0.0004427343
        %v3117 = vsel %vm3116, %v3114, %v3111
        %v3118 = vadd.f32 %v2044, 1.0
        %v3119 = vlog2.pop %v3118
        %v3120 = vmul.f32 %v3119, 0.6931472
        %v3121 = vmul.f32 -0.5, %v2044
        %v3122 = vadd.f32 %v3121, 1.0
        %v3123 = vmul.f32 %v3122, %v2044
        %v3124 = vand.u32 2147483647, %v2044
        %vm3125 = vcmp.lt.f32.partialorder %v3124, 0.0004427343
        %v3126 = vsel %vm3125, %v3123, %v3120
        %v3127 = vadd.f32 %v2046, 1.0
        %v3128 = vlog2.pop %v3127
        %v3129 = vmul.f32 %v3128, 0.6931472
        %v3130 = vmul.f32 -0.5, %v2046
        %v3131 = vadd.f32 %v3130, 1.0
        %v3132 = vmul.f32 %v3131, %v2046
        %v3133 = vand.u32 2147483647, %v2046
        %vm3134 = vcmp.lt.f32.partialorder %v3133, 0.0004427343
        %v3135 = vsel %vm3134, %v3132, %v3129
        %v3136 = vadd.f32 %v2048, 1.0
        %v3137 = vlog2.pop %v3136
        %v3138 = vmul.f32 %v3137, 0.6931472
        %v3139 = vmul.f32 -0.5, %v2048
        %v3140 = vadd.f32 %v3139, 1.0
        %v3141 = vmul.f32 %v3140, %v2048
        %v3142 = vand.u32 2147483647, %v2048
        %vm3143 = vcmp.lt.f32.partialorder %v3142, 0.0004427343
        %v3144 = vsel %vm3143, %v3141, %v3138
        %v3145 = vadd.f32 %v2050, 1.0
        %v3146 = vlog2.pop %v3145
        %v3147 = vmul.f32 %v3146, 0.6931472
        %v3148 = vmul.f32 -0.5, %v2050
        %v3149 = vadd.f32 %v3148, 1.0
        %v3150 = vmul.f32 %v3149, %v2050
        %v3151 = vand.u32 2147483647, %v2050
        %vm3152 = vcmp.lt.f32.partialorder %v3151, 0.0004427343
        %v3153 = vsel %vm3152, %v3150, %v3147
        %v3154 = vadd.f32 %v2052, 1.0
        %v3155 = vlog2.pop %v3154
        %v3156 = vmul.f32 %v3155, 0.6931472
        %v3157 = vmul.f32 -0.5, %v2052
        %v3158 = vadd.f32 %v3157, 1.0
        %v3159 = vmul.f32 %v3158, %v2052
        %v3160 = vand.u32 2147483647, %v2052
        %vm3161 = vcmp.lt.f32.partialorder %v3160, 0.0004427343
        %v3162 = vsel %vm3161, %v3159, %v3156
        %v3163 = vadd.f32 %v2054, 1.0
        %v3164 = vlog2.pop %v3163
        %v3165 = vmul.f32 %v3164, 0.6931472
        %v3166 = vmul.f32 -0.5, %v2054
        %v3167 = vadd.f32 %v3166, 1.0
        %v3168 = vmul.f32 %v3167, %v2054
        %v3169 = vand.u32 2147483647, %v2054
        %vm3170 = vcmp.lt.f32.partialorder %v3169, 0.0004427343
        %v3171 = vsel %vm3170, %v3168, %v3165
        %v3172 = vadd.f32 %v2056, 1.0
        %v3173 = vlog2.pop %v3172
        %v3174 = vmul.f32 %v3173, 0.6931472
        %v3175 = vmul.f32 -0.5, %v2056
        %v3176 = vadd.f32 %v3175, 1.0
        %v3177 = vmul.f32 %v3176, %v2056
        %v3178 = vand.u32 2147483647, %v2056
        %vm3179 = vcmp.lt.f32.partialorder %v3178, 0.0004427343
        %v3180 = vsel %vm3179, %v3177, %v3174
        %v3181 = vadd.f32 %v2058, 1.0
        %v3182 = vlog2.pop %v3181
        %v3183 = vmul.f32 %v3182, 0.6931472
        %v3184 = vmul.f32 -0.5, %v2058
        %v3185 = vadd.f32 %v3184, 1.0
        %v3186 = vmul.f32 %v3185, %v2058
        %v3187 = vand.u32 2147483647, %v2058
        %vm3188 = vcmp.lt.f32.partialorder %v3187, 0.0004427343
        %v3189 = vsel %vm3188, %v3186, %v3183
        %v3190 = vadd.f32 %v2060, 1.0
        %v3191 = vlog2.pop %v3190
        %v3192 = vmul.f32 %v3191, 0.6931472
        %v3193 = vmul.f32 -0.5, %v2060
        %v3194 = vadd.f32 %v3193, 1.0
        %v3195 = vmul.f32 %v3194, %v2060
        %v3196 = vand.u32 2147483647, %v2060
        %vm3197 = vcmp.lt.f32.partialorder %v3196, 0.0004427343
        %v3198 = vsel %vm3197, %v3195, %v3192
        %v3199 = vadd.f32 %v2062, 1.0
        %v3200 = vlog2.pop %v3199
        %v3201 = vmul.f32 %v3200, 0.6931472
        %v3202 = vmul.f32 -0.5, %v2062
        %v3203 = vadd.f32 %v3202, 1.0
        %v3204 = vmul.f32 %v3203, %v2062
        %v3205 = vand.u32 2147483647, %v2062
        %vm3206 = vcmp.lt.f32.partialorder %v3205, 0.0004427343
        %v3207 = vsel %vm3206, %v3204, %v3201
        %v3208 = vadd.f32 %v2064, 1.0
        %v3209 = vlog2.pop %v3208
        %v3210 = vmul.f32 %v3209, 0.6931472
        %v3211 = vmul.f32 -0.5, %v2064
        %v3212 = vadd.f32 %v3211, 1.0
        %v3213 = vmul.f32 %v3212, %v2064
        %v3214 = vand.u32 2147483647, %v2064
        %vm3215 = vcmp.lt.f32.partialorder %v3214, 0.0004427343
        %v3216 = vsel %vm3215, %v3213, %v3210
        %v3217 = vadd.f32 %v1425, %v2073
        %v3218 = vadd.f32 %v1426, %v2082
        %v3219 = vadd.f32 %v1427, %v2091
        %v3220 = vadd.f32 %v1428, %v2100
        %v3221 = vadd.f32 %v1429, %v2109
        %v3222 = vadd.f32 %v1430, %v2118
        %v3223 = vadd.f32 %v1431, %v2127
        %v3224 = vadd.f32 %v1432, %v2136
        %v3225 = vadd.f32 %v1433, %v2145
        %v3226 = vadd.f32 %v1434, %v2154
        %v3227 = vadd.f32 %v1435, %v2163
        %v3228 = vadd.f32 %v1436, %v2172
        %v3229 = vadd.f32 %v1437, %v2181
        %v3230 = vadd.f32 %v1438, %v2190
        %v3231 = vadd.f32 %v1439, %v2199
        %v3232 = vadd.f32 %v1440, %v2208
        %v3233 = vadd.f32 %v1441, %v2217
        %v3234 = vadd.f32 %v1442, %v2226
        %v3235 = vadd.f32 %v1443, %v2235
        %v3236 = vadd.f32 %v1444, %v2244
        %v3237 = vadd.f32 %v1445, %v2253
        %v3238 = vadd.f32 %v1446, %v2262
        %v3239 = vadd.f32 %v1447, %v2271
        %v3240 = vadd.f32 %v1448, %v2280
        %v3241 = vadd.f32 %v1449, %v2289
        %v3242 = vadd.f32 %v1450, %v2298
        %v3243 = vadd.f32 %v1451, %v2307
        %v3244 = vadd.f32 %v1452, %v2316
        %v3245 = vadd.f32 %v1453, %v2325
        %v3246 = vadd.f32 %v1454, %v2334
        %v3247 = vadd.f32 %v1455, %v2343
        %v3248 = vadd.f32 %v1456, %v2352
        %v3249 = vadd.f32 %v1457, %v2361
        %v3250 = vadd.f32 %v1458, %v2370
        %v3251 = vadd.f32 %v1459, %v2379
        %v3252 = vadd.f32 %v1460, %v2388
        %v3253 = vadd.f32 %v1461, %v2397
        %v3254 = vadd.f32 %v1462, %v2406
        %v3255 = vadd.f32 %v1463, %v2415
        %v3256 = vadd.f32 %v1464, %v2424
        %v3257 = vadd.f32 %v1465, %v2433
        %v3258 = vadd.f32 %v1466, %v2442
        %v3259 = vadd.f32 %v1467, %v2451
        %v3260 = vadd.f32 %v1468, %v2460
        %v3261 = vadd.f32 %v1469, %v2469
        %v3262 = vadd.f32 %v1470, %v2478
        %v3263 = vadd.f32 %v1471, %v2487
        %v3264 = vadd.f32 %v1472, %v2496
        %v3265 = vadd.f32 %v1473, %v2505
        %v3266 = vadd.f32 %v1474, %v2514
        %v3267 = vadd.f32 %v1475, %v2523
        %v3268 = vadd.f32 %v1476, %v2532
        %v3269 = vadd.f32 %v1477, %v2541
        %v3270 = vadd.f32 %v1478, %v2550
        %v3271 = vadd.f32 %v1479, %v2559
        %v3272 = vadd.f32 %v1480, %v2568
        %v3273 = vadd.f32 %v1481, %v2577
        %v3274 = vadd.f32 %v1482, %v2586
        %v3275 = vadd.f32 %v1483, %v2595
        %v3276 = vadd.f32 %v1484, %v2604
        %v3277 = vadd.f32 %v1485, %v2613
        %v3278 = vadd.f32 %v1486, %v2622
        %v3279 = vadd.f32 %v1487, %v2631
        %v3280 = vadd.f32 %v1488, %v2640
        %v3281 = vadd.f32 %v1489, %v2649
        %v3282 = vadd.f32 %v1490, %v2658
        %v3283 = vadd.f32 %v1491, %v2667
        %v3284 = vadd.f32 %v1492, %v2676
        %v3285 = vadd.f32 %v1493, %v2685
        %v3286 = vadd.f32 %v1494, %v2694
        %v3287 = vadd.f32 %v1495, %v2703
        %v3288 = vadd.f32 %v1496, %v2712
        %v3289 = vadd.f32 %v1497, %v2721
        %v3290 = vadd.f32 %v1498, %v2730
        %v3291 = vadd.f32 %v1499, %v2739
        %v3292 = vadd.f32 %v1500, %v2748
        %v3293 = vadd.f32 %v1501, %v2757
        %v3294 = vadd.f32 %v1502, %v2766
        %v3295 = vadd.f32 %v1503, %v2775
        %v3296 = vadd.f32 %v1504, %v2784
        %v3297 = vadd.f32 %v1505, %v2793
        %v3298 = vadd.f32 %v1506, %v2802
        %v3299 = vadd.f32 %v1507, %v2811
        %v3300 = vadd.f32 %v1508, %v2820
        %v3301 = vadd.f32 %v1509, %v2829
        %v3302 = vadd.f32 %v1510, %v2838
        %v3303 = vadd.f32 %v1511, %v2847
        %v3304 = vadd.f32 %v1512, %v2856
        %v3305 = vadd.f32 %v1513, %v2865
        %v3306 = vadd.f32 %v1514, %v2874
        %v3307 = vadd.f32 %v1515, %v2883
        %v3308 = vadd.f32 %v1516, %v2892
        %v3309 = vadd.f32 %v1517, %v2901
        %v3310 = vadd.f32 %v1518, %v2910
        %v3311 = vadd.f32 %v1519, %v2919
        %v3312 = vadd.f32 %v1520, %v2928
        %v3313 = vadd.f32 %v1521, %v2937
        %v3314 = vadd.f32 %v1522, %v2946
        %v3315 = vadd.f32 %v1523, %v2955
        %v3316 = vadd.f32 %v1524, %v2964
        %v3317 = vadd.f32 %v1525, %v2973
        %v3318 = vadd.f32 %v1526, %v2982
        %v3319 = vadd.f32 %v1527, %v2991
        %v3320 = vadd.f32 %v1528, %v3000
        %v3321 = vadd.f32 %v1529, %v3009
        %v3322 = vadd.f32 %v1530, %v3018
        %v3323 = vadd.f32 %v1531, %v3027
        %v3324 = vadd.f32 %v1532, %v3036
        %v3325 = vadd.f32 %v1533, %v3045
        %v3326 = vadd.f32 %v1534, %v3054
        %v3327 = vadd.f32 %v1535, %v3063
        %v3328 = vadd.f32 %v1536, %v3072
        %v3329 = vadd.f32 %v1537, %v3081
        %v3330 = vadd.f32 %v1538, %v3090
        %v3331 = vadd.f32 %v1539, %v3099
        %v3332 = vadd.f32 %v1540, %v3108
        %v3333 = vadd.f32 %v1541, %v3117
        %v3334 = vadd.f32 %v1542, %v3126
        %v3335 = vadd.f32 %v1543, %v3135
        %v3336 = vadd.f32 %v1544, %v3144
        %v3337 = vadd.f32 %v1545, %v3153
        %v3338 = vadd.f32 %v1546, %v3162
        %v3339 = vadd.f32 %v1547, %v3171
        %v3340 = vadd.f32 %v1548, %v3180
        %v3341 = vadd.f32 %v1549, %v3189
        %v3342 = vadd.f32 %v1550, %v3198
        %v3343 = vadd.f32 %v1551, %v3207
        %v3344 = vadd.f32 %v1552, %v3216
        %v3345 = vpack.c.bf16 %v3218, %v3217
        %v3346 = vpack.c.bf16 %v3220, %v3219
        %v3347 = vpack.c.bf16 %v3222, %v3221
        %v3348 = vpack.c.bf16 %v3224, %v3223
        %v3349 = vpack.c.bf16 %v3226, %v3225
        %v3350 = vpack.c.bf16 %v3228, %v3227
        %v3351 = vpack.c.bf16 %v3230, %v3229
        %v3352 = vpack.c.bf16 %v3232, %v3231
        %v3353 = vpack.c.bf16 %v3234, %v3233
        %v3354 = vpack.c.bf16 %v3236, %v3235
        %v3355 = vpack.c.bf16 %v3238, %v3237
        %v3356 = vpack.c.bf16 %v3240, %v3239
        %v3357 = vpack.c.bf16 %v3242, %v3241
        %v3358 = vpack.c.bf16 %v3244, %v3243
        %v3359 = vpack.c.bf16 %v3246, %v3245
        %v3360 = vpack.c.bf16 %v3248, %v3247
        %v3361 = vpack.c.bf16 %v3250, %v3249
        %v3362 = vpack.c.bf16 %v3252, %v3251
        %v3363 = vpack.c.bf16 %v3254, %v3253
        %v3364 = vpack.c.bf16 %v3256, %v3255
        %v3365 = vpack.c.bf16 %v3258, %v3257
        %v3366 = vpack.c.bf16 %v3260, %v3259
        %v3367 = vpack.c.bf16 %v3262, %v3261
        %v3368 = vpack.c.bf16 %v3264, %v3263
        %v3369 = vpack.c.bf16 %v3266, %v3265
        %v3370 = vpack.c.bf16 %v3268, %v3267
        %v3371 = vpack.c.bf16 %v3270, %v3269
        %v3372 = vpack.c.bf16 %v3272, %v3271
        %v3373 = vpack.c.bf16 %v3274, %v3273
        %v3374 = vpack.c.bf16 %v3276, %v3275
        %v3375 = vpack.c.bf16 %v3278, %v3277
        %v3376 = vpack.c.bf16 %v3280, %v3279
        %v3377 = vpack.c.bf16 %v3282, %v3281
        %v3378 = vpack.c.bf16 %v3284, %v3283
        %v3379 = vpack.c.bf16 %v3286, %v3285
        %v3380 = vpack.c.bf16 %v3288, %v3287
        %v3381 = vpack.c.bf16 %v3290, %v3289
        %v3382 = vpack.c.bf16 %v3292, %v3291
        %v3383 = vpack.c.bf16 %v3294, %v3293
        %v3384 = vpack.c.bf16 %v3296, %v3295
        %v3385 = vpack.c.bf16 %v3298, %v3297
        %v3386 = vpack.c.bf16 %v3300, %v3299
        %v3387 = vpack.c.bf16 %v3302, %v3301
        %v3388 = vpack.c.bf16 %v3304, %v3303
        %v3389 = vpack.c.bf16 %v3306, %v3305
        %v3390 = vpack.c.bf16 %v3308, %v3307
        %v3391 = vpack.c.bf16 %v3310, %v3309
        %v3392 = vpack.c.bf16 %v3312, %v3311
        %v3393 = vpack.c.bf16 %v3314, %v3313
        %v3394 = vpack.c.bf16 %v3316, %v3315
        %v3395 = vpack.c.bf16 %v3318, %v3317
        %v3396 = vpack.c.bf16 %v3320, %v3319
        %v3397 = vpack.c.bf16 %v3322, %v3321
        %v3398 = vpack.c.bf16 %v3324, %v3323
        %v3399 = vpack.c.bf16 %v3326, %v3325
        %v3400 = vpack.c.bf16 %v3328, %v3327
        %v3401 = vpack.c.bf16 %v3330, %v3329
        %v3402 = vpack.c.bf16 %v3332, %v3331
        %v3403 = vpack.c.bf16 %v3334, %v3333
        %v3404 = vpack.c.bf16 %v3336, %v3335
        %v3405 = vpack.c.bf16 %v3338, %v3337
        %v3406 = vpack.c.bf16 %v3340, %v3339
        %v3407 = vpack.c.bf16 %v3342, %v3341
        %v3408 = vpack.c.bf16 %v3344, %v3343
        %v3409 = vld [vmem:[%s3] sm:$0xf]
        %v3410 = vld [vmem:[%s3 + $0x4] sm:$0xf]
        %v3411 = vld [vmem:[%s3 + $0x8] sm:$0xf]
        %v3412 = vld [vmem:[%s3 + $0xc] sm:$0xf]
        %v3413 = vld [vmem:[%s3 + $0x10] sm:$0xf]
        %v3414 = vld [vmem:[%s3 + $0x14] sm:$0xf]
        %v3415 = vld [vmem:[%s3 + $0x18] sm:$0xf]
        %v3416 = vld [vmem:[%s3 + $0x1c] sm:$0xf]
        %v3417 = vld [vmem:[%s4] sm:$0x1]
        %v3419 = vlaneseq
        %v3420 = vshrl.u32 %v3419, 7
        %v3421 = vsub.s32 0, %v3420
        %v3422 = vrot.slane %v3417, %v3421
        %v3432 = vunpack.c.l.b16 %v3409
        %v3433 = vunpack.c.l.b16 %v3410
        %v3434 = vunpack.c.l.b16 %v3411
        %v3435 = vunpack.c.l.b16 %v3412
        %v3436 = vunpack.c.l.b16 %v3413
        %v3437 = vunpack.c.l.b16 %v3414
        %v3438 = vunpack.c.l.b16 %v3415
        %v3439 = vunpack.c.l.b16 %v3416
        %v3440 = vpack.c.b16 %v3433, %v3432
        %v3441 = vpack.c.b16 %v3435, %v3434
        %v3442 = vpack.c.b16 %v3437, %v3436
        %v3443 = vpack.c.b16 %v3439, %v3438
        %vm3448 = vcmask 523264
        %v3450 = vsel %vm3448, %v3345, 0
        %v3453 = vsel %vm3448, %v3346, 0
        %v3456 = vsel %vm3448, %v3347, 0
        %v3459 = vsel %vm3448, %v3348, 0
        %v3462 = vsel %vm3448, %v3349, 0
        %v3465 = vsel %vm3448, %v3350, 0
        %v3468 = vsel %vm3448, %v3351, 0
        %v3471 = vsel %vm3448, %v3352, 0
        %v3474 = vsel %vm3448, %v3353, 0
        %v3477 = vsel %vm3448, %v3354, 0
        %v3480 = vsel %vm3448, %v3355, 0
        %v3483 = vsel %vm3448, %v3356, 0
        %v3486 = vsel %vm3448, %v3357, 0
        %v3489 = vsel %vm3448, %v3358, 0
        %v3492 = vsel %vm3448, %v3359, 0
        %v3495 = vsel %vm3448, %v3360, 0
        %v3498 = vsel %vm3448, %v3361, 0
        %v3501 = vsel %vm3448, %v3362, 0
        %v3504 = vsel %vm3448, %v3363, 0
        %v3507 = vsel %vm3448, %v3364, 0
        %v3510 = vsel %vm3448, %v3365, 0
        %v3513 = vsel %vm3448, %v3366, 0
        %v3516 = vsel %vm3448, %v3367, 0
        %v3519 = vsel %vm3448, %v3368, 0
        %v3522 = vsel %vm3448, %v3369, 0
        %v3525 = vsel %vm3448, %v3370, 0
        %v3528 = vsel %vm3448, %v3371, 0
        %v3531 = vsel %vm3448, %v3372, 0
        %v3534 = vsel %vm3448, %v3373, 0
        %v3537 = vsel %vm3448, %v3374, 0
        %v3540 = vsel %vm3448, %v3375, 0
        %v3543 = vsel %vm3448, %v3376, 0
        %v3546 = vsel %vm3448, %v3377, 0
        %v3549 = vsel %vm3448, %v3378, 0
        %v3552 = vsel %vm3448, %v3379, 0
        %v3555 = vsel %vm3448, %v3380, 0
        %v3558 = vsel %vm3448, %v3381, 0
        %v3561 = vsel %vm3448, %v3382, 0
        %v3564 = vsel %vm3448, %v3383, 0
        %v3567 = vsel %vm3448, %v3384, 0
        %v3570 = vsel %vm3448, %v3385, 0
        %v3573 = vsel %vm3448, %v3386, 0
        %v3576 = vsel %vm3448, %v3387, 0
        %v3579 = vsel %vm3448, %v3388, 0
        %v3582 = vsel %vm3448, %v3389, 0
        %v3585 = vsel %vm3448, %v3390, 0
        %v3588 = vsel %vm3448, %v3391, 0
        %v3591 = vsel %vm3448, %v3392, 0
        %v3594 = vsel %vm3448, %v3393, 0
        %v3597 = vsel %vm3448, %v3394, 0
        %v3600 = vsel %vm3448, %v3395, 0
        %v3603 = vsel %vm3448, %v3396, 0
        %v3606 = vsel %vm3448, %v3397, 0
        %v3609 = vsel %vm3448, %v3398, 0
        %v3612 = vsel %vm3448, %v3399, 0
        %v3615 = vsel %vm3448, %v3400, 0
        %v3618 = vsel %vm3448, %v3401, 0
        %v3621 = vsel %vm3448, %v3402, 0
        %v3624 = vsel %vm3448, %v3403, 0
        %v3627 = vsel %vm3448, %v3404, 0
        %v3630 = vsel %vm3448, %v3405, 0
        %v3633 = vsel %vm3448, %v3406, 0
        %v3636 = vsel %vm3448, %v3407, 0
        %v3639 = vsel %vm3448, %v3408, 0
        %3641 = vmatprep.subr.bf16.mxu0 0
        %3642 = vmatpush1.bf16.msra.mxu0 %v3440
        %3643 = vmatprep.subr.bf16.mxu0 0
        %3644 = vmatpush1.bf16.msra.mxu0 %v3441
        %3645 = vmatprep.subr.bf16.mxu0 0
        %3646 = vmatpush1.bf16.msra.mxu0 %v3442
        %3647 = vmatprep.subr.bf16.mxu0 0
        %3648 = vmatpush1.bf16.msra.mxu0 %v3443
        %3649 = vmatprep.subr.bf16.mxu0 0
        %3650 = vmatpush1.bf16.msra.mxu0 0
        %3651 = vmatprep.subr.bf16.mxu0 0
        %3652 = vmatpush1.bf16.msra.mxu0 0
        %3653 = vmatprep.subr.bf16.mxu0 0
        %3654 = vmatpush1.bf16.msra.mxu0 0
        %3655 = vmatprep.subr.bf16.mxu0 0
        %3656 = vmatpush1.bf16.msra.mxu0 0
        %3657 = vmatprep.subr.bf16.mxu0 0
        %3658 = vmatpush1.bf16.msra.mxu0 0
        %3659 = vmatprep.subr.bf16.mxu0 0
        %3660 = vmatpush1.bf16.msra.mxu0 0
        %3661 = vmatprep.subr.bf16.mxu0 0
        %3662 = vmatpush1.bf16.msra.mxu0 0
        %3663 = vmatprep.subr.bf16.mxu0 0
        %3664 = vmatpush1.bf16.msra.mxu0 0
        %3665 = vmatprep.subr.bf16.mxu0 0
        %3666 = vmatpush1.bf16.msra.mxu0 0
        %3667 = vmatprep.subr.bf16.mxu0 0
        %3668 = vmatpush1.bf16.msra.mxu0 0
        %3669 = vmatprep.subr.bf16.mxu0 0
        %3670 = vmatpush1.bf16.msra.mxu0 0
        %3671 = vmatprep.subr.bf16.mxu0 0
        %3672 = vmatpush1.bf16.msra.mxu0 0
        %3673 = vmatprep.mubr.bf16.mxu0 0
        %3674 = vmatmul.mubr.bf16.gmra.mrb[0].mxu0 %v3450
        %v3675 = vpop.f32.mrb[0].mxu0
        %v3676 = vadd.f32 %v3422, %v3675
        %v3677 = vpop.f32.mrb[0].mxu0
        %v3678 = vpop.f32.mrb[0].mxu0
        %v3679 = vadd.f32 %v3422, %v3678
        %v3680 = vpop.f32.mrb[0].mxu0
        %3681 = vmatprep.mubr.bf16.mxu0 0
        %3682 = vmatmul.mubr.bf16.gmra.mrb[0].mxu0 %v3453
        %v3683 = vpop.f32.mrb[0].mxu0
        %v3684 = vadd.f32 %v3422, %v3683
        %v3685 = vpop.f32.mrb[0].mxu0
        %v3686 = vpop.f32.mrb[0].mxu0
        %v3687 = vadd.f32 %v3422, %v3686
        %v3688 = vpop.f32.mrb[0].mxu0
        %3689 = vmatprep.mubr.bf16.mxu0 0
        %3690 = vmatmul.mubr.bf16.gmra.mrb[0].mxu0 %v3456
        %v3691 = vpop.f32.mrb[0].mxu0
        %v3692 = vadd.f32 %v3422, %v3691
        %v3693 = vpop.f32.mrb[0].mxu0
        %v3694 = vpop.f32.mrb[0].mxu0
        %v3695 = vadd.f32 %v3422, %v3694
        %v3696 = vpop.f32.mrb[0].mxu0
        %3697 = vmatprep.mubr.bf16.mxu0 0
        %3698 = vmatmul.mubr.bf16.gmra.mrb[0].mxu0 %v3459
        %v3699 = vpop.f32.mrb[0].mxu0
        %v3700 = vadd.f32 %v3422, %v3699
        %v3701 = vpop.f32.mrb[0].mxu0
        %v3702 = vpop.f32.mrb[0].mxu0
        %v3703 = vadd.f32 %v3422, %v3702
        %v3704 = vpop.f32.mrb[0].mxu0
        %3705 = vmatprep.mubr.bf16.mxu0 0
        %3706 = vmatmul.mubr.bf16.gmra.mrb[0].mxu0 %v3462
        %v3707 = vpop.f32.mrb[0].mxu0
        %v3708 = vadd.f32 %v3422, %v3707
        %v3709 = vpop.f32.mrb[0].mxu0
        %v3710 = vpop.f32.mrb[0].mxu0
        %v3711 = vadd.f32 %v3422, %v3710
        %v3712 = vpop.f32.mrb[0].mxu0
        %3713 = vmatprep.mubr.bf16.mxu0 0
        %3714 = vmatmul.mubr.bf16.gmra.mrb[0].mxu0 %v3465
        %v3715 = vpop.f32.mrb[0].mxu0
        %v3716 = vadd.f32 %v3422, %v3715
        %v3717 = vpop.f32.mrb[0].mxu0
        %v3718 = vpop.f32.mrb[0].mxu0
        %v3719 = vadd.f32 %v3422, %v3718
        %v3720 = vpop.f32.mrb[0].mxu0
        %3721 = vmatprep.mubr.bf16.mxu0 0
        %3722 = vmatmul.mubr.bf16.gmra.mrb[0].mxu0 %v3468
        %v3723 = vpop.f32.mrb[0].mxu0
        %v3724 = vadd.f32 %v3422, %v3723
        %v3725 = vpop.f32.mrb[0].mxu0
        %v3726 = vpop.f32.mrb[0].mxu0
        %v3727 = vadd.f32 %v3422, %v3726
        %v3728 = vpop.f32.mrb[0].mxu0
        %3729 = vmatprep.mubr.bf16.mxu0 0
        %3730 = vmatmul.mubr.bf16.gmra.mrb[0].mxu0 %v3471
        %v3731 = vpop.f32.mrb[0].mxu0
        %v3732 = vadd.f32 %v3422, %v3731
        %v3733 = vpop.f32.mrb[0].mxu0
        %v3734 = vpop.f32.mrb[0].mxu0
        %v3735 = vadd.f32 %v3422, %v3734
        %v3736 = vpop.f32.mrb[0].mxu0
        %3737 = vmatprep.mubr.bf16.mxu0 0
        %3738 = vmatmul.mubr.bf16.gmra.mrb[0].mxu0 %v3474
        %v3739 = vpop.f32.mrb[0].mxu0
        %v3740 = vadd.f32 %v3422, %v3739
        %v3741 = vpop.f32.mrb[0].mxu0
        %v3742 = vpop.f32.mrb[0].mxu0
        %v3743 = vadd.f32 %v3422, %v3742
        %v3744 = vpop.f32.mrb[0].mxu0
        %3745 = vmatprep.mubr.bf16.mxu0 0
        %3746 = vmatmul.mubr.bf16.gmra.mrb[0].mxu0 %v3477
        %v3747 = vpop.f32.mrb[0].mxu0
        %v3748 = vadd.f32 %v3422, %v3747
        %v3749 = vpop.f32.mrb[0].mxu0
        %v3750 = vpop.f32.mrb[0].mxu0
        %v3751 = vadd.f32 %v3422, %v3750
        %v3752 = vpop.f32.mrb[0].mxu0
        %3753 = vmatprep.mubr.bf16.mxu0 0
        %3754 = vmatmul.mubr.bf16.gmra.mrb[0].mxu0 %v3480
        %v3755 = vpop.f32.mrb[0].mxu0
        %v3756 = vadd.f32 %v3422, %v3755
        %v3757 = vpop.f32.mrb[0].mxu0
        %v3758 = vpop.f32.mrb[0].mxu0
        %v3759 = vadd.f32 %v3422, %v3758
        %v3760 = vpop.f32.mrb[0].mxu0
        %3761 = vmatprep.mubr.bf16.mxu0 0
        %3762 = vmatmul.mubr.bf16.gmra.mrb[0].mxu0 %v3483
        %v3763 = vpop.f32.mrb[0].mxu0
        %v3764 = vadd.f32 %v3422, %v3763
        %v3765 = vpop.f32.mrb[0].mxu0
        %v3766 = vpop.f32.mrb[0].mxu0
        %v3767 = vadd.f32 %v3422, %v3766
        %v3768 = vpop.f32.mrb[0].mxu0
        %3769 = vmatprep.mubr.bf16.mxu0 0
        %3770 = vmatmul.mubr.bf16.gmra.mrb[0].mxu0 %v3486
        %v3771 = vpop.f32.mrb[0].mxu0
        %v3772 = vadd.f32 %v3422, %v3771
        %v3773 = vpop.f32.mrb[0].mxu0
        %v3774 = vpop.f32.mrb[0].mxu0
        %v3775 = vadd.f32 %v3422, %v3774
        %v3776 = vpop.f32.mrb[0].mxu0
        %3777 = vmatprep.mubr.bf16.mxu0 0
        %3778 = vmatmul.mubr.bf16.gmra.mrb[0].mxu0 %v3489
        %v3779 = vpop.f32.mrb[0].mxu0
        %v3780 = vadd.f32 %v3422, %v3779
        %v3781 = vpop.f32.mrb[0].mxu0
        %v3782 = vpop.f32.mrb[0].mxu0
        %v3783 = vadd.f32 %v3422, %v3782
        %v3784 = vpop.f32.mrb[0].mxu0
        %3785 = vmatprep.mubr.bf16.mxu0 0
        %3786 = vmatmul.mubr.bf16.gmra.mrb[0].mxu0 %v3492
        %v3787 = vpop.f32.mrb[0].mxu0
        %v3788 = vadd.f32 %v3422, %v3787
        %v3789 = vpop.f32.mrb[0].mxu0
        %v3790 = vpop.f32.mrb[0].mxu0
        %v3791 = vadd.f32 %v3422, %v3790
        %v3792 = vpop.f32.mrb[0].mxu0
        %3793 = vmatprep.mubr.bf16.mxu0 0
        %3794 = vmatmul.mubr.bf16.gmra.mrb[0].mxu0 %v3495
        %v3795 = vpop.f32.mrb[0].mxu0
        %v3796 = vadd.f32 %v3422, %v3795
        %v3797 = vpop.f32.mrb[0].mxu0
        %v3798 = vpop.f32.mrb[0].mxu0
        %v3799 = vadd.f32 %v3422, %v3798
        %v3800 = vpop.f32.mrb[0].mxu0
        %3801 = vmatprep.mubr.bf16.mxu0 0
        %3802 = vmatmul.mubr.bf16.gmra.mrb[0].mxu0 %v3498
        %v3803 = vpop.f32.mrb[0].mxu0
        %v3804 = vadd.f32 %v3422, %v3803
        %v3805 = vpop.f32.mrb[0].mxu0
        %v3806 = vpop.f32.mrb[0].mxu0
        %v3807 = vadd.f32 %v3422, %v3806
        %v3808 = vpop.f32.mrb[0].mxu0
        %3809 = vmatprep.mubr.bf16.mxu0 0
        %3810 = vmatmul.mubr.bf16.gmra.mrb[0].mxu0 %v3501
        %v3811 = vpop.f32.mrb[0].mxu0
        %v3812 = vadd.f32 %v3422, %v3811
        %v3813 = vpop.f32.mrb[0].mxu0
        %v3814 = vpop.f32.mrb[0].mxu0
        %v3815 = vadd.f32 %v3422, %v3814
        %v3816 = vpop.f32.mrb[0].mxu0
        %3817 = vmatprep.mubr.bf16.mxu0 0
        %3818 = vmatmul.mubr.bf16.gmra.mrb[0].mxu0 %v3504
        %v3819 = vpop.f32.mrb[0].mxu0
        %v3820 = vadd.f32 %v3422, %v3819
        %v3821 = vpop.f32.mrb[0].mxu0
        %v3822 = vpop.f32.mrb[0].mxu0
        %v3823 = vadd.f32 %v3422, %v3822
        %v3824 = vpop.f32.mrb[0].mxu0
        %3825 = vmatprep.mubr.bf16.mxu0 0
        %3826 = vmatmul.mubr.bf16.gmra.mrb[0].mxu0 %v3507
        %v3827 = vpop.f32.mrb[0].mxu0
        %v3828 = vadd.f32 %v3422, %v3827
        %v3829 = vpop.f32.mrb[0].mxu0
        %v3830 = vpop.f32.mrb[0].mxu0
        %v3831 = vadd.f32 %v3422, %v3830
        %v3832 = vpop.f32.mrb[0].mxu0
        %3833 = vmatprep.mubr.bf16.mxu0 0
        %3834 = vmatmul.mubr.bf16.gmra.mrb[0].mxu0 %v3510
        %v3835 = vpop.f32.mrb[0].mxu0
        %v3836 = vadd.f32 %v3422, %v3835
        %v3837 = vpop.f32.mrb[0].mxu0
        %v3838 = vpop.f32.mrb[0].mxu0
        %v3839 = vadd.f32 %v3422, %v3838
        %v3840 = vpop.f32.mrb[0].mxu0
        %3841 = vmatprep.mubr.bf16.mxu0 0
        %3842 = vmatmul.mubr.bf16.gmra.mrb[0].mxu0 %v3513
        %v3843 = vpop.f32.mrb[0].mxu0
        %v3844 = vadd.f32 %v3422, %v3843
        %v3845 = vpop.f32.mrb[0].mxu0
        %v3846 = vpop.f32.mrb[0].mxu0
        %v3847 = vadd.f32 %v3422, %v3846
        %v3848 = vpop.f32.mrb[0].mxu0
        %3849 = vmatprep.mubr.bf16.mxu0 0
        %3850 = vmatmul.mubr.bf16.gmra.mrb[0].mxu0 %v3516
        %v3851 = vpop.f32.mrb[0].mxu0
        %v3852 = vadd.f32 %v3422, %v3851
        %v3853 = vpop.f32.mrb[0].mxu0
        %v3854 = vpop.f32.mrb[0].mxu0
        %v3855 = vadd.f32 %v3422, %v3854
        %v3856 = vpop.f32.mrb[0].mxu0
        %3857 = vmatprep.mubr.bf16.mxu0 0
        %3858 = vmatmul.mubr.bf16.gmra.mrb[0].mxu0 %v3519
        %v3859 = vpop.f32.mrb[0].mxu0
        %v3860 = vadd.f32 %v3422, %v3859
        %v3861 = vpop.f32.mrb[0].mxu0
        %v3862 = vpop.f32.mrb[0].mxu0
        %v3863 = vadd.f32 %v3422, %v3862
        %v3864 = vpop.f32.mrb[0].mxu0
        %3865 = vmatprep.mubr.bf16.mxu0 0
        %3866 = vmatmul.mubr.bf16.gmra.mrb[0].mxu0 %v3522
        %v3867 = vpop.f32.mrb[0].mxu0
        %v3868 = vadd.f32 %v3422, %v3867
        %v3869 = vpop.f32.mrb[0].mxu0
        %v3870 = vpop.f32.mrb[0].mxu0
        %v3871 = vadd.f32 %v3422, %v3870
        %v3872 = vpop.f32.mrb[0].mxu0
        %3873 = vmatprep.mubr.bf16.mxu0 0
        %3874 = vmatmul.mubr.bf16.gmra.mrb[0].mxu0 %v3525
        %v3875 = vpop.f32.mrb[0].mxu0
        %v3876 = vadd.f32 %v3422, %v3875
        %v3877 = vpop.f32.mrb[0].mxu0
        %v3878 = vpop.f32.mrb[0].mxu0
        %v3879 = vadd.f32 %v3422, %v3878
        %v3880 = vpop.f32.mrb[0].mxu0
        %3881 = vmatprep.mubr.bf16.mxu0 0
        %3882 = vmatmul.mubr.bf16.gmra.mrb[0].mxu0 %v3528
        %v3883 = vpop.f32.mrb[0].mxu0
        %v3884 = vadd.f32 %v3422, %v3883
        %v3885 = vpop.f32.mrb[0].mxu0
        %v3886 = vpop.f32.mrb[0].mxu0
        %v3887 = vadd.f32 %v3422, %v3886
        %v3888 = vpop.f32.mrb[0].mxu0
        %3889 = vmatprep.mubr.bf16.mxu0 0
        %3890 = vmatmul.mubr.bf16.gmra.mrb[0].mxu0 %v3531
        %v3891 = vpop.f32.mrb[0].mxu0
        %v3892 = vadd.f32 %v3422, %v3891
        %v3893 = vpop.f32.mrb[0].mxu0
        %v3894 = vpop.f32.mrb[0].mxu0
        %v3895 = vadd.f32 %v3422, %v3894
        %v3896 = vpop.f32.mrb[0].mxu0
        %3897 = vmatprep.mubr.bf16.mxu0 0
        %3898 = vmatmul.mubr.bf16.gmra.mrb[0].mxu0 %v3534
        %v3899 = vpop.f32.mrb[0].mxu0
        %v3900 = vadd.f32 %v3422, %v3899
        %v3901 = vpop.f32.mrb[0].mxu0
        %v3902 = vpop.f32.mrb[0].mxu0
        %v3903 = vadd.f32 %v3422, %v3902
        %v3904 = vpop.f32.mrb[0].mxu0
        %3905 = vmatprep.mubr.bf16.mxu0 0
        %3906 = vmatmul.mubr.bf16.gmra.mrb[0].mxu0 %v3537
        %v3907 = vpop.f32.mrb[0].mxu0
        %v3908 = vadd.f32 %v3422, %v3907
        %v3909 = vpop.f32.mrb[0].mxu0
        %v3910 = vpop.f32.mrb[0].mxu0
        %v3911 = vadd.f32 %v3422, %v3910
        %v3912 = vpop.f32.mrb[0].mxu0
        %3913 = vmatprep.mubr.bf16.mxu0 0
        %3914 = vmatmul.mubr.bf16.gmra.mrb[0].mxu0 %v3540
        %v3915 = vpop.f32.mrb[0].mxu0
        %v3916 = vadd.f32 %v3422, %v3915
        %v3917 = vpop.f32.mrb[0].mxu0
        %v3918 = vpop.f32.mrb[0].mxu0
        %v3919 = vadd.f32 %v3422, %v3918
        %v3920 = vpop.f32.mrb[0].mxu0
        %3921 = vmatprep.mubr.bf16.mxu0 0
        %3922 = vmatmul.mubr.bf16.gmra.mrb[0].mxu0 %v3543
        %v3923 = vpop.f32.mrb[0].mxu0
        %v3924 = vadd.f32 %v3422, %v3923
        %v3925 = vpop.f32.mrb[0].mxu0
        %v3926 = vpop.f32.mrb[0].mxu0
        %v3927 = vadd.f32 %v3422, %v3926
        %v3928 = vpop.f32.mrb[0].mxu0
        %3929 = vmatprep.mubr.bf16.mxu0 0
        %3930 = vmatmul.mubr.bf16.gmra.mrb[0].mxu0 %v3546
        %v3931 = vpop.f32.mrb[0].mxu0
        %v3932 = vadd.f32 %v3422, %v3931
        %v3933 = vpop.f32.mrb[0].mxu0
        %v3934 = vpop.f32.mrb[0].mxu0
        %v3935 = vadd.f32 %v3422, %v3934
        %v3936 = vpop.f32.mrb[0].mxu0
        %3937 = vmatprep.mubr.bf16.mxu0 0
        %3938 = vmatmul.mubr.bf16.gmra.mrb[0].mxu0 %v3549
        %v3939 = vpop.f32.mrb[0].mxu0
        %v3940 = vadd.f32 %v3422, %v3939
        %v3941 = vpop.f32.mrb[0].mxu0
        %v3942 = vpop.f32.mrb[0].mxu0
        %v3943 = vadd.f32 %v3422, %v3942
        %v3944 = vpop.f32.mrb[0].mxu0
        %3945 = vmatprep.mubr.bf16.mxu0 0
        %3946 = vmatmul.mubr.bf16.gmra.mrb[0].mxu0 %v3552
        %v3947 = vpop.f32.mrb[0].mxu0
        %v3948 = vadd.f32 %v3422, %v3947
        %v3949 = vpop.f32.mrb[0].mxu0
        %v3950 = vpop.f32.mrb[0].mxu0
        %v3951 = vadd.f32 %v3422, %v3950
        %v3952 = vpop.f32.mrb[0].mxu0
        %3953 = vmatprep.mubr.bf16.mxu0 0
        %3954 = vmatmul.mubr.bf16.gmra.mrb[0].mxu0 %v3555
        %v3955 = vpop.f32.mrb[0].mxu0
        %v3956 = vadd.f32 %v3422, %v3955
        %v3957 = vpop.f32.mrb[0].mxu0
        %v3958 = vpop.f32.mrb[0].mxu0
        %v3959 = vadd.f32 %v3422, %v3958
        %v3960 = vpop.f32.mrb[0].mxu0
        %3961 = vmatprep.mubr.bf16.mxu0 0
        %3962 = vmatmul.mubr.bf16.gmra.mrb[0].mxu0 %v3558
        %v3963 = vpop.f32.mrb[0].mxu0
        %v3964 = vadd.f32 %v3422, %v3963
        %v3965 = vpop.f32.mrb[0].mxu0
        %v3966 = vpop.f32.mrb[0].mxu0
        %v3967 = vadd.f32 %v3422, %v3966
        %v3968 = vpop.f32.mrb[0].mxu0
        %3969 = vmatprep.mubr.bf16.mxu0 0
        %3970 = vmatmul.mubr.bf16.gmra.mrb[0].mxu0 %v3561
        %v3971 = vpop.f32.mrb[0].mxu0
        %v3972 = vadd.f32 %v3422, %v3971
        %v3973 = vpop.f32.mrb[0].mxu0
        %v3974 = vpop.f32.mrb[0].mxu0
        %v3975 = vadd.f32 %v3422, %v3974
        %v3976 = vpop.f32.mrb[0].mxu0
        %3977 = vmatprep.mubr.bf16.mxu0 0
        %3978 = vmatmul.mubr.bf16.gmra.mrb[0].mxu0 %v3564
        %v3979 = vpop.f32.mrb[0].mxu0
        %v3980 = vadd.f32 %v3422, %v3979
        %v3981 = vpop.f32.mrb[0].mxu0
        %v3982 = vpop.f32.mrb[0].mxu0
        %v3983 = vadd.f32 %v3422, %v3982
        %v3984 = vpop.f32.mrb[0].mxu0
        %3985 = vmatprep.mubr.bf16.mxu0 0
        %3986 = vmatmul.mubr.bf16.gmra.mrb[0].mxu0 %v3567
        %v3987 = vpop.f32.mrb[0].mxu0
        %v3988 = vadd.f32 %v3422, %v3987
        %v3989 = vpop.f32.mrb[0].mxu0
        %v3990 = vpop.f32.mrb[0].mxu0
        %v3991 = vadd.f32 %v3422, %v3990
        %v3992 = vpop.f32.mrb[0].mxu0
        %3993 = vmatprep.mubr.bf16.mxu0 0
        %3994 = vmatmul.mubr.bf16.gmra.mrb[0].mxu0 %v3570
        %v3995 = vpop.f32.mrb[0].mxu0
        %v3996 = vadd.f32 %v3422, %v3995
        %v3997 = vpop.f32.mrb[0].mxu0
        %v3998 = vpop.f32.mrb[0].mxu0
        %v3999 = vadd.f32 %v3422, %v3998
        %v4000 = vpop.f32.mrb[0].mxu0
        %4001 = vmatprep.mubr.bf16.mxu0 0
        %4002 = vmatmul.mubr.bf16.gmra.mrb[0].mxu0 %v3573
        %v4003 = vpop.f32.mrb[0].mxu0
        %v4004 = vadd.f32 %v3422, %v4003
        %v4005 = vpop.f32.mrb[0].mxu0
        %v4006 = vpop.f32.mrb[0].mxu0
        %v4007 = vadd.f32 %v3422, %v4006
        %v4008 = vpop.f32.mrb[0].mxu0
        %4009 = vmatprep.mubr.bf16.mxu0 0
        %4010 = vmatmul.mubr.bf16.gmra.mrb[0].mxu0 %v3576
        %v4011 = vpop.f32.mrb[0].mxu0
        %v4012 = vadd.f32 %v3422, %v4011
        %v4013 = vpop.f32.mrb[0].mxu0
        %v4014 = vpop.f32.mrb[0].mxu0
        %v4015 = vadd.f32 %v3422, %v4014
        %v4016 = vpop.f32.mrb[0].mxu0
        %4017 = vmatprep.mubr.bf16.mxu0 0
        %4018 = vmatmul.mubr.bf16.gmra.mrb[0].mxu0 %v3579
        %v4019 = vpop.f32.mrb[0].mxu0
        %v4020 = vadd.f32 %v3422, %v4019
        %v4021 = vpop.f32.mrb[0].mxu0
        %v4022 = vpop.f32.mrb[0].mxu0
        %v4023 = vadd.f32 %v3422, %v4022
        %v4024 = vpop.f32.mrb[0].mxu0
        %4025 = vmatprep.mubr.bf16.mxu0 0
        %4026 = vmatmul.mubr.bf16.gmra.mrb[0].mxu0 %v3582
        %v4027 = vpop.f32.mrb[0].mxu0
        %v4028 = vadd.f32 %v3422, %v4027
        %v4029 = vpop.f32.mrb[0].mxu0
        %v4030 = vpop.f32.mrb[0].mxu0
        %v4031 = vadd.f32 %v3422, %v4030
        %v4032 = vpop.f32.mrb[0].mxu0
        %4033 = vmatprep.mubr.bf16.mxu0 0
        %4034 = vmatmul.mubr.bf16.gmra.mrb[0].mxu0 %v3585
        %v4035 = vpop.f32.mrb[0].mxu0
        %v4036 = vadd.f32 %v3422, %v4035
        %v4037 = vpop.f32.mrb[0].mxu0
        %v4038 = vpop.f32.mrb[0].mxu0
        %v4039 = vadd.f32 %v3422, %v4038
        %v4040 = vpop.f32.mrb[0].mxu0
        %4041 = vmatprep.mubr.bf16.mxu0 0
        %4042 = vmatmul.mubr.bf16.gmra.mrb[0].mxu0 %v3588
        %v4043 = vpop.f32.mrb[0].mxu0
        %v4044 = vadd.f32 %v3422, %v4043
        %v4045 = vpop.f32.mrb[0].mxu0
        %v4046 = vpop.f32.mrb[0].mxu0
        %v4047 = vadd.f32 %v3422, %v4046
        %v4048 = vpop.f32.mrb[0].mxu0
        %4049 = vmatprep.mubr.bf16.mxu0 0
        %4050 = vmatmul.mubr.bf16.gmra.mrb[0].mxu0 %v3591
        %v4051 = vpop.f32.mrb[0].mxu0
        %v4052 = vadd.f32 %v3422, %v4051
        %v4053 = vpop.f32.mrb[0].mxu0
        %v4054 = vpop.f32.mrb[0].mxu0
        %v4055 = vadd.f32 %v3422, %v4054
        %v4056 = vpop.f32.mrb[0].mxu0
        %4057 = vmatprep.mubr.bf16.mxu0 0
        %4058 = vmatmul.mubr.bf16.gmra.mrb[0].mxu0 %v3594
        %v4059 = vpop.f32.mrb[0].mxu0
        %v4060 = vadd.f32 %v3422, %v4059
        %v4061 = vpop.f32.mrb[0].mxu0
        %v4062 = vpop.f32.mrb[0].mxu0
        %v4063 = vadd.f32 %v3422, %v4062
        %v4064 = vpop.f32.mrb[0].mxu0
        %4065 = vmatprep.mubr.bf16.mxu0 0
        %4066 = vmatmul.mubr.bf16.gmra.mrb[0].mxu0 %v3597
        %v4067 = vpop.f32.mrb[0].mxu0
        %v4068 = vadd.f32 %v3422, %v4067
        %v4069 = vpop.f32.mrb[0].mxu0
        %v4070 = vpop.f32.mrb[0].mxu0
        %v4071 = vadd.f32 %v3422, %v4070
        %v4072 = vpop.f32.mrb[0].mxu0
        %4073 = vmatprep.mubr.bf16.mxu0 0
        %4074 = vmatmul.mubr.bf16.gmra.mrb[0].mxu0 %v3600
        %v4075 = vpop.f32.mrb[0].mxu0
        %v4076 = vadd.f32 %v3422, %v4075
        %v4077 = vpop.f32.mrb[0].mxu0
        %v4078 = vpop.f32.mrb[0].mxu0
        %v4079 = vadd.f32 %v3422, %v4078
        %v4080 = vpop.f32.mrb[0].mxu0
        %4081 = vmatprep.mubr.bf16.mxu0 0
        %4082 = vmatmul.mubr.bf16.gmra.mrb[0].mxu0 %v3603
        %v4083 = vpop.f32.mrb[0].mxu0
        %v4084 = vadd.f32 %v3422, %v4083
        %v4085 = vpop.f32.mrb[0].mxu0
        %v4086 = vpop.f32.mrb[0].mxu0
        %v4087 = vadd.f32 %v3422, %v4086
        %v4088 = vpop.f32.mrb[0].mxu0
        %4089 = vmatprep.mubr.bf16.mxu0 0
        %4090 = vmatmul.mubr.bf16.gmra.mrb[0].mxu0 %v3606
        %v4091 = vpop.f32.mrb[0].mxu0
        %v4092 = vadd.f32 %v3422, %v4091
        %v4093 = vpop.f32.mrb[0].mxu0
        %v4094 = vpop.f32.mrb[0].mxu0
        %v4095 = vadd.f32 %v3422, %v4094
        %v4096 = vpop.f32.mrb[0].mxu0
        %4097 = vmatprep.mubr.bf16.mxu0 0
        %4098 = vmatmul.mubr.bf16.gmra.mrb[0].mxu0 %v3609
        %v4099 = vpop.f32.mrb[0].mxu0
        %v4100 = vadd.f32 %v3422, %v4099
        %v4101 = vpop.f32.mrb[0].mxu0
        %v4102 = vpop.f32.mrb[0].mxu0
        %v4103 = vadd.f32 %v3422, %v4102
        %v4104 = vpop.f32.mrb[0].mxu0
        %4105 = vmatprep.mubr.bf16.mxu0 0
        %4106 = vmatmul.mubr.bf16.gmra.mrb[0].mxu0 %v3612
        %v4107 = vpop.f32.mrb[0].mxu0
        %v4108 = vadd.f32 %v3422, %v4107
        %v4109 = vpop.f32.mrb[0].mxu0
        %v4110 = vpop.f32.mrb[0].mxu0
        %v4111 = vadd.f32 %v3422, %v4110
        %v4112 = vpop.f32.mrb[0].mxu0
        %4113 = vmatprep.mubr.bf16.mxu0 0
        %4114 = vmatmul.mubr.bf16.gmra.mrb[0].mxu0 %v3615
        %v4115 = vpop.f32.mrb[0].mxu0
        %v4116 = vadd.f32 %v3422, %v4115
        %v4117 = vpop.f32.mrb[0].mxu0
        %v4118 = vpop.f32.mrb[0].mxu0
        %v4119 = vadd.f32 %v3422, %v4118
        %v4120 = vpop.f32.mrb[0].mxu0
        %4121 = vmatprep.mubr.bf16.mxu0 0
        %4122 = vmatmul.mubr.bf16.gmra.mrb[0].mxu0 %v3618
        %v4123 = vpop.f32.mrb[0].mxu0
        %v4124 = vadd.f32 %v3422, %v4123
        %v4125 = vpop.f32.mrb[0].mxu0
        %v4126 = vpop.f32.mrb[0].mxu0
        %v4127 = vadd.f32 %v3422, %v4126
        %v4128 = vpop.f32.mrb[0].mxu0
        %4129 = vmatprep.mubr.bf16.mxu0 0
        %4130 = vmatmul.mubr.bf16.gmra.mrb[0].mxu0 %v3621
        %v4131 = vpop.f32.mrb[0].mxu0
        %v4132 = vadd.f32 %v3422, %v4131
        %v4133 = vpop.f32.mrb[0].mxu0
        %v4134 = vpop.f32.mrb[0].mxu0
        %v4135 = vadd.f32 %v3422, %v4134
        %v4136 = vpop.f32.mrb[0].mxu0
        %4137 = vmatprep.mubr.bf16.mxu0 0
        %4138 = vmatmul.mubr.bf16.gmra.mrb[0].mxu0 %v3624
        %v4139 = vpop.f32.mrb[0].mxu0
        %v4140 = vadd.f32 %v3422, %v4139
        %v4141 = vpop.f32.mrb[0].mxu0
        %v4142 = vpop.f32.mrb[0].mxu0
        %v4143 = vadd.f32 %v3422, %v4142
        %v4144 = vpop.f32.mrb[0].mxu0
        %4145 = vmatprep.mubr.bf16.mxu0 0
        %4146 = vmatmul.mubr.bf16.gmra.mrb[0].mxu0 %v3627
        %v4147 = vpop.f32.mrb[0].mxu0
        %v4148 = vadd.f32 %v3422, %v4147
        %v4149 = vpop.f32.mrb[0].mxu0
        %v4150 = vpop.f32.mrb[0].mxu0
        %v4151 = vadd.f32 %v3422, %v4150
        %v4152 = vpop.f32.mrb[0].mxu0
        %4153 = vmatprep.mubr.bf16.mxu0 0
        %4154 = vmatmul.mubr.bf16.gmra.mrb[0].mxu0 %v3630
        %v4155 = vpop.f32.mrb[0].mxu0
        %v4156 = vadd.f32 %v3422, %v4155
        %v4157 = vpop.f32.mrb[0].mxu0
        %v4158 = vpop.f32.mrb[0].mxu0
        %v4159 = vadd.f32 %v3422, %v4158
        %v4160 = vpop.f32.mrb[0].mxu0
        %4161 = vmatprep.mubr.bf16.mxu0 0
        %4162 = vmatmul.mubr.bf16.gmra.mrb[0].mxu0 %v3633
        %v4163 = vpop.f32.mrb[0].mxu0
        %v4164 = vadd.f32 %v3422, %v4163
        %v4165 = vpop.f32.mrb[0].mxu0
        %v4166 = vpop.f32.mrb[0].mxu0
        %v4167 = vadd.f32 %v3422, %v4166
        %v4168 = vpop.f32.mrb[0].mxu0
        %4169 = vmatprep.mubr.bf16.mxu0 0
        %4170 = vmatmul.mubr.bf16.gmra.mrb[0].mxu0 %v3636
        %v4171 = vpop.f32.mrb[0].mxu0
        %v4172 = vadd.f32 %v3422, %v4171
        %v4173 = vpop.f32.mrb[0].mxu0
        %v4174 = vpop.f32.mrb[0].mxu0
        %v4175 = vadd.f32 %v3422, %v4174
        %v4176 = vpop.f32.mrb[0].mxu0
        %4177 = vmatprep.mubr.bf16.mxu0 0
        %4178 = vmatmul.mubr.bf16.gmra.mrb[0].mxu0 %v3639
        %v4179 = vpop.f32.mrb[0].mxu0
        %v4180 = vadd.f32 %v3422, %v4179
        %v4181 = vpop.f32.mrb[0].mxu0
        %v4182 = vpop.f32.mrb[0].mxu0
        %v4183 = vadd.f32 %v3422, %v4182
        %v4184 = vpop.f32.mrb[0].mxu0
        %4185 = vdwg.mxu0
        %v4186 = vpack.c.bf16 %v3679, %v3676
        %v4187 = vpack.c.bf16 %v3687, %v3684
        %v4188 = vpack.c.bf16 %v3695, %v3692
        %v4189 = vpack.c.bf16 %v3703, %v3700
        %v4190 = vpack.c.bf16 %v3711, %v3708
        %v4191 = vpack.c.bf16 %v3719, %v3716
        %v4192 = vpack.c.bf16 %v3727, %v3724
        %v4193 = vpack.c.bf16 %v3735, %v3732
        %v4194 = vpack.c.bf16 %v3743, %v3740
        %v4195 = vpack.c.bf16 %v3751, %v3748
        %v4196 = vpack.c.bf16 %v3759, %v3756
        %v4197 = vpack.c.bf16 %v3767, %v3764
        %v4198 = vpack.c.bf16 %v3775, %v3772
        %v4199 = vpack.c.bf16 %v3783, %v3780
        %v4200 = vpack.c.bf16 %v3791, %v3788
        %v4201 = vpack.c.bf16 %v3799, %v3796
        %v4202 = vpack.c.bf16 %v3807, %v3804
        %v4203 = vpack.c.bf16 %v3815, %v3812
        %v4204 = vpack.c.bf16 %v3823, %v3820
        %v4205 = vpack.c.bf16 %v3831, %v3828
        %v4206 = vpack.c.bf16 %v3839, %v3836
        %v4207 = vpack.c.bf16 %v3847, %v3844
        %v4208 = vpack.c.bf16 %v3855, %v3852
        %v4209 = vpack.c.bf16 %v3863, %v3860
        %v4210 = vpack.c.bf16 %v3871, %v3868
        %v4211 = vpack.c.bf16 %v3879, %v3876
        %v4212 = vpack.c.bf16 %v3887, %v3884
        %v4213 = vpack.c.bf16 %v3895, %v3892
        %v4214 = vpack.c.bf16 %v3903, %v3900
        %v4215 = vpack.c.bf16 %v3911, %v3908
        %v4216 = vpack.c.bf16 %v3919, %v3916
        %v4217 = vpack.c.bf16 %v3927, %v3924
        %v4218 = vpack.c.bf16 %v3935, %v3932
        %v4219 = vpack.c.bf16 %v3943, %v3940
        %v4220 = vpack.c.bf16 %v3951, %v3948
        %v4221 = vpack.c.bf16 %v3959, %v3956
        %v4222 = vpack.c.bf16 %v3967, %v3964
        %v4223 = vpack.c.bf16 %v3975, %v3972
        %v4224 = vpack.c.bf16 %v3983, %v3980
        %v4225 = vpack.c.bf16 %v3991, %v3988
        %v4226 = vpack.c.bf16 %v3999, %v3996
        %v4227 = vpack.c.bf16 %v4007, %v4004
        %v4228 = vpack.c.bf16 %v4015, %v4012
        %v4229 = vpack.c.bf16 %v4023, %v4020
        %v4230 = vpack.c.bf16 %v4031, %v4028
        %v4231 = vpack.c.bf16 %v4039, %v4036
        %v4232 = vpack.c.bf16 %v4047, %v4044
        %v4233 = vpack.c.bf16 %v4055, %v4052
        %v4234 = vpack.c.bf16 %v4063, %v4060
        %v4235 = vpack.c.bf16 %v4071, %v4068
        %v4236 = vpack.c.bf16 %v4079, %v4076
        %v4237 = vpack.c.bf16 %v4087, %v4084
        %v4238 = vpack.c.bf16 %v4095, %v4092
        %v4239 = vpack.c.bf16 %v4103, %v4100
        %v4240 = vpack.c.bf16 %v4111, %v4108
        %v4241 = vpack.c.bf16 %v4119, %v4116
        %v4242 = vpack.c.bf16 %v4127, %v4124
        %v4243 = vpack.c.bf16 %v4135, %v4132
        %v4244 = vpack.c.bf16 %v4143, %v4140
        %v4245 = vpack.c.bf16 %v4151, %v4148
        %v4246 = vpack.c.bf16 %v4159, %v4156
        %v4247 = vpack.c.bf16 %v4167, %v4164
        %v4248 = vpack.c.bf16 %v4175, %v4172
        %v4249 = vpack.c.bf16 %v4183, %v4180
        %v4314 = vunpack.c.l.b16 %v4186
        %v4315 = vunpack.c.h.b16 %v4186
        %v4316 = vunpack.c.l.b16 %v4187
        %v4317 = vunpack.c.h.b16 %v4187
        %v4318 = vunpack.c.l.b16 %v4188
        %v4319 = vunpack.c.h.b16 %v4188
        %v4320 = vunpack.c.l.b16 %v4189
        %v4321 = vunpack.c.h.b16 %v4189
        %v4322 = vunpack.c.l.b16 %v4190
        %v4323 = vunpack.c.h.b16 %v4190
        %v4324 = vunpack.c.l.b16 %v4191
        %v4325 = vunpack.c.h.b16 %v4191
        %v4326 = vunpack.c.l.b16 %v4192
        %v4327 = vunpack.c.h.b16 %v4192
        %v4328 = vunpack.c.l.b16 %v4193
        %v4329 = vunpack.c.h.b16 %v4193
        %v4330 = vunpack.c.l.b16 %v4194
        %v4331 = vunpack.c.h.b16 %v4194
        %v4332 = vunpack.c.l.b16 %v4195
        %v4333 = vunpack.c.h.b16 %v4195
        %v4334 = vunpack.c.l.b16 %v4196
        %v4335 = vunpack.c.h.b16 %v4196
        %v4336 = vunpack.c.l.b16 %v4197
        %v4337 = vunpack.c.h.b16 %v4197
        %v4338 = vunpack.c.l.b16 %v4198
        %v4339 = vunpack.c.h.b16 %v4198
        %v4340 = vunpack.c.l.b16 %v4199
        %v4341 = vunpack.c.h.b16 %v4199
        %v4342 = vunpack.c.l.b16 %v4200
        %v4343 = vunpack.c.h.b16 %v4200
        %v4344 = vunpack.c.l.b16 %v4201
        %v4345 = vunpack.c.h.b16 %v4201
        %v4346 = vunpack.c.l.b16 %v4202
        %v4347 = vunpack.c.h.b16 %v4202
        %v4348 = vunpack.c.l.b16 %v4203
        %v4349 = vunpack.c.h.b16 %v4203
        %v4350 = vunpack.c.l.b16 %v4204
        %v4351 = vunpack.c.h.b16 %v4204
        %v4352 = vunpack.c.l.b16 %v4205
        %v4353 = vunpack.c.h.b16 %v4205
        %v4354 = vunpack.c.l.b16 %v4206
        %v4355 = vunpack.c.h.b16 %v4206
        %v4356 = vunpack.c.l.b16 %v4207
        %v4357 = vunpack.c.h.b16 %v4207
        %v4358 = vunpack.c.l.b16 %v4208
        %v4359 = vunpack.c.h.b16 %v4208
        %v4360 = vunpack.c.l.b16 %v4209
        %v4361 = vunpack.c.h.b16 %v4209
        %v4362 = vunpack.c.l.b16 %v4210
        %v4363 = vunpack.c.h.b16 %v4210
        %v4364 = vunpack.c.l.b16 %v4211
        %v4365 = vunpack.c.h.b16 %v4211
        %v4366 = vunpack.c.l.b16 %v4212
        %v4367 = vunpack.c.h.b16 %v4212
        %v4368 = vunpack.c.l.b16 %v4213
        %v4369 = vunpack.c.h.b16 %v4213
        %v4370 = vunpack.c.l.b16 %v4214
        %v4371 = vunpack.c.h.b16 %v4214
        %v4372 = vunpack.c.l.b16 %v4215
        %v4373 = vunpack.c.h.b16 %v4215
        %v4374 = vunpack.c.l.b16 %v4216
        %v4375 = vunpack.c.h.b16 %v4216
        %v4376 = vunpack.c.l.b16 %v4217
        %v4377 = vunpack.c.h.b16 %v4217
        %v4378 = vunpack.c.l.b16 %v4218
        %v4379 = vunpack.c.h.b16 %v4218
        %v4380 = vunpack.c.l.b16 %v4219
        %v4381 = vunpack.c.h.b16 %v4219
        %v4382 = vunpack.c.l.b16 %v4220
        %v4383 = vunpack.c.h.b16 %v4220
        %v4384 = vunpack.c.l.b16 %v4221
        %v4385 = vunpack.c.h.b16 %v4221
        %v4386 = vunpack.c.l.b16 %v4222
        %v4387 = vunpack.c.h.b16 %v4222
        %v4388 = vunpack.c.l.b16 %v4223
        %v4389 = vunpack.c.h.b16 %v4223
        %v4390 = vunpack.c.l.b16 %v4224
        %v4391 = vunpack.c.h.b16 %v4224
        %v4392 = vunpack.c.l.b16 %v4225
        %v4393 = vunpack.c.h.b16 %v4225
        %v4394 = vunpack.c.l.b16 %v4226
        %v4395 = vunpack.c.h.b16 %v4226
        %v4396 = vunpack.c.l.b16 %v4227
        %v4397 = vunpack.c.h.b16 %v4227
        %v4398 = vunpack.c.l.b16 %v4228
        %v4399 = vunpack.c.h.b16 %v4228
        %v4400 = vunpack.c.l.b16 %v4229
        %v4401 = vunpack.c.h.b16 %v4229
        %v4402 = vunpack.c.l.b16 %v4230
        %v4403 = vunpack.c.h.b16 %v4230
        %v4404 = vunpack.c.l.b16 %v4231
        %v4405 = vunpack.c.h.b16 %v4231
        %v4406 = vunpack.c.l.b16 %v4232
        %v4407 = vunpack.c.h.b16 %v4232
        %v4408 = vunpack.c.l.b16 %v4233
        %v4409 = vunpack.c.h.b16 %v4233
        %v4410 = vunpack.c.l.b16 %v4234
        %v4411 = vunpack.c.h.b16 %v4234
        %v4412 = vunpack.c.l.b16 %v4235
        %v4413 = vunpack.c.h.b16 %v4235
        %v4414 = vunpack.c.l.b16 %v4236
        %v4415 = vunpack.c.h.b16 %v4236
        %v4416 = vunpack.c.l.b16 %v4237
        %v4417 = vunpack.c.h.b16 %v4237
        %v4418 = vunpack.c.l.b16 %v4238
        %v4419 = vunpack.c.h.b16 %v4238
        %v4420 = vunpack.c.l.b16 %v4239
        %v4421 = vunpack.c.h.b16 %v4239
        %v4422 = vunpack.c.l.b16 %v4240
        %v4423 = vunpack.c.h.b16 %v4240
        %v4424 = vunpack.c.l.b16 %v4241
        %v4425 = vunpack.c.h.b16 %v4241
        %v4426 = vunpack.c.l.b16 %v4242
        %v4427 = vunpack.c.h.b16 %v4242
        %v4428 = vunpack.c.l.b16 %v4243
        %v4429 = vunpack.c.h.b16 %v4243
        %v4430 = vunpack.c.l.b16 %v4244
        %v4431 = vunpack.c.h.b16 %v4244
        %v4432 = vunpack.c.l.b16 %v4245
        %v4433 = vunpack.c.h.b16 %v4245
        %v4434 = vunpack.c.l.b16 %v4246
        %v4435 = vunpack.c.h.b16 %v4246
        %v4436 = vunpack.c.l.b16 %v4247
        %v4437 = vunpack.c.h.b16 %v4247
        %v4438 = vunpack.c.l.b16 %v4248
        %v4439 = vunpack.c.h.b16 %v4248
        %v4440 = vunpack.c.l.b16 %v4249
        %v4441 = vunpack.c.h.b16 %v4249
        %v4442 = vpack.c.b16 %v4314, %v4314
        %v4443 = vpack.c.b16 %v4315, %v4315
        %v4444 = vpack.c.b16 %v4316, %v4316
        %v4445 = vpack.c.b16 %v4317, %v4317
        %v4446 = vpack.c.b16 %v4318, %v4318
        %v4447 = vpack.c.b16 %v4319, %v4319
        %v4448 = vpack.c.b16 %v4320, %v4320
        %v4449 = vpack.c.b16 %v4321, %v4321
        %v4450 = vpack.c.b16 %v4322, %v4322
        %v4451 = vpack.c.b16 %v4323, %v4323
        %v4452 = vpack.c.b16 %v4324, %v4324
        %v4453 = vpack.c.b16 %v4325, %v4325
        %v4454 = vpack.c.b16 %v4326, %v4326
        %v4455 = vpack.c.b16 %v4327, %v4327
        %v4456 = vpack.c.b16 %v4328, %v4328
        %v4457 = vpack.c.b16 %v4329, %v4329
        %v4458 = vpack.c.b16 %v4330, %v4330
        %v4459 = vpack.c.b16 %v4331, %v4331
        %v4460 = vpack.c.b16 %v4332, %v4332
        %v4461 = vpack.c.b16 %v4333, %v4333
        %v4462 = vpack.c.b16 %v4334, %v4334
        %v4463 = vpack.c.b16 %v4335, %v4335
        %v4464 = vpack.c.b16 %v4336, %v4336
        %v4465 = vpack.c.b16 %v4337, %v4337
        %v4466 = vpack.c.b16 %v4338, %v4338
        %v4467 = vpack.c.b16 %v4339, %v4339
        %v4468 = vpack.c.b16 %v4340, %v4340
        %v4469 = vpack.c.b16 %v4341, %v4341
        %v4470 = vpack.c.b16 %v4342, %v4342
        %v4471 = vpack.c.b16 %v4343, %v4343
        %v4472 = vpack.c.b16 %v4344, %v4344
        %v4473 = vpack.c.b16 %v4345, %v4345
        %v4474 = vpack.c.b16 %v4346, %v4346
        %v4475 = vpack.c.b16 %v4347, %v4347
        %v4476 = vpack.c.b16 %v4348, %v4348
        %v4477 = vpack.c.b16 %v4349, %v4349
        %v4478 = vpack.c.b16 %v4350, %v4350
        %v4479 = vpack.c.b16 %v4351, %v4351
        %v4480 = vpack.c.b16 %v4352, %v4352
        %v4481 = vpack.c.b16 %v4353, %v4353
        %v4482 = vpack.c.b16 %v4354, %v4354
        %v4483 = vpack.c.b16 %v4355, %v4355
        %v4484 = vpack.c.b16 %v4356, %v4356
        %v4485 = vpack.c.b16 %v4357, %v4357
        %v4486 = vpack.c.b16 %v4358, %v4358
        %v4487 = vpack.c.b16 %v4359, %v4359
        %v4488 = vpack.c.b16 %v4360, %v4360
        %v4489 = vpack.c.b16 %v4361, %v4361
        %v4490 = vpack.c.b16 %v4362, %v4362
        %v4491 = vpack.c.b16 %v4363, %v4363
        %v4492 = vpack.c.b16 %v4364, %v4364
        %v4493 = vpack.c.b16 %v4365, %v4365
        %v4494 = vpack.c.b16 %v4366, %v4366
        %v4495 = vpack.c.b16 %v4367, %v4367
        %v4496 = vpack.c.b16 %v4368, %v4368
        %v4497 = vpack.c.b16 %v4369, %v4369
        %v4498 = vpack.c.b16 %v4370, %v4370
        %v4499 = vpack.c.b16 %v4371, %v4371
        %v4500 = vpack.c.b16 %v4372, %v4372
        %v4501 = vpack.c.b16 %v4373, %v4373
        %v4502 = vpack.c.b16 %v4374, %v4374
        %v4503 = vpack.c.b16 %v4375, %v4375
        %v4504 = vpack.c.b16 %v4376, %v4376
        %v4505 = vpack.c.b16 %v4377, %v4377
        %v4506 = vpack.c.b16 %v4378, %v4378
        %v4507 = vpack.c.b16 %v4379, %v4379
        %v4508 = vpack.c.b16 %v4380, %v4380
        %v4509 = vpack.c.b16 %v4381, %v4381
        %v4510 = vpack.c.b16 %v4382, %v4382
        %v4511 = vpack.c.b16 %v4383, %v4383
        %v4512 = vpack.c.b16 %v4384, %v4384
        %v4513 = vpack.c.b16 %v4385, %v4385
        %v4514 = vpack.c.b16 %v4386, %v4386
        %v4515 = vpack.c.b16 %v4387, %v4387
        %v4516 = vpack.c.b16 %v4388, %v4388
        %v4517 = vpack.c.b16 %v4389, %v4389
        %v4518 = vpack.c.b16 %v4390, %v4390
        %v4519 = vpack.c.b16 %v4391, %v4391
        %v4520 = vpack.c.b16 %v4392, %v4392
        %v4521 = vpack.c.b16 %v4393, %v4393
        %v4522 = vpack.c.b16 %v4394, %v4394
        %v4523 = vpack.c.b16 %v4395, %v4395
        %v4524 = vpack.c.b16 %v4396, %v4396
        %v4525 = vpack.c.b16 %v4397, %v4397
        %v4526 = vpack.c.b16 %v4398, %v4398
        %v4527 = vpack.c.b16 %v4399, %v4399
        %v4528 = vpack.c.b16 %v4400, %v4400
        %v4529 = vpack.c.b16 %v4401, %v4401
        %v4530 = vpack.c.b16 %v4402, %v4402
        %v4531 = vpack.c.b16 %v4403, %v4403
        %v4532 = vpack.c.b16 %v4404, %v4404
        %v4533 = vpack.c.b16 %v4405, %v4405
        %v4534 = vpack.c.b16 %v4406, %v4406
        %v4535 = vpack.c.b16 %v4407, %v4407
        %v4536 = vpack.c.b16 %v4408, %v4408
        %v4537 = vpack.c.b16 %v4409, %v4409
        %v4538 = vpack.c.b16 %v4410, %v4410
        %v4539 = vpack.c.b16 %v4411, %v4411
        %v4540 = vpack.c.b16 %v4412, %v4412
        %v4541 = vpack.c.b16 %v4413, %v4413
        %v4542 = vpack.c.b16 %v4414, %v4414
        %v4543 = vpack.c.b16 %v4415, %v4415
        %v4544 = vpack.c.b16 %v4416, %v4416
        %v4545 = vpack.c.b16 %v4417, %v4417
        %v4546 = vpack.c.b16 %v4418, %v4418
        %v4547 = vpack.c.b16 %v4419, %v4419
        %v4548 = vpack.c.b16 %v4420, %v4420
        %v4549 = vpack.c.b16 %v4421, %v4421
        %v4550 = vpack.c.b16 %v4422, %v4422
        %v4551 = vpack.c.b16 %v4423, %v4423
        %v4552 = vpack.c.b16 %v4424, %v4424
        %v4553 = vpack.c.b16 %v4425, %v4425
        %v4554 = vpack.c.b16 %v4426, %v4426
        %v4555 = vpack.c.b16 %v4427, %v4427
        %v4556 = vpack.c.b16 %v4428, %v4428
        %v4557 = vpack.c.b16 %v4429, %v4429
        %v4558 = vpack.c.b16 %v4430, %v4430
        %v4559 = vpack.c.b16 %v4431, %v4431
        %v4560 = vpack.c.b16 %v4432, %v4432
        %v4561 = vpack.c.b16 %v4433, %v4433
        %v4562 = vpack.c.b16 %v4434, %v4434
        %v4563 = vpack.c.b16 %v4435, %v4435
        %v4564 = vpack.c.b16 %v4436, %v4436
        %v4565 = vpack.c.b16 %v4437, %v4437
        %v4566 = vpack.c.b16 %v4438, %v4438
        %v4567 = vpack.c.b16 %v4439, %v4439
        %v4568 = vpack.c.b16 %v4440, %v4440
        %v4569 = vpack.c.b16 %v4441, %v4441
        %4698 = vst [vmem:[%s218] sm:$0xf] %v4442
        %4699 = vst [vmem:[%s218 + $0x4] sm:$0xf] %v4443
        %4700 = vst [vmem:[%s218 + $0x8] sm:$0xf] %v4444
        %4701 = vst [vmem:[%s218 + $0xc] sm:$0xf] %v4445
        %4702 = vst [vmem:[%s218 + $0x10] sm:$0xf] %v4446
        %4703 = vst [vmem:[%s218 + $0x14] sm:$0xf] %v4447
        %4704 = vst [vmem:[%s218 + $0x18] sm:$0xf] %v4448
        %4705 = vst [vmem:[%s218 + $0x1c] sm:$0xf] %v4449
        %4706 = vst [vmem:[%s218 + $0x20] sm:$0xf] %v4450
        %4707 = vst [vmem:[%s218 + $0x24] sm:$0xf] %v4451
        %4708 = vst [vmem:[%s218 + $0x28] sm:$0xf] %v4452
        %4709 = vst [vmem:[%s218 + $0x2c] sm:$0xf] %v4453
        %4710 = vst [vmem:[%s218 + $0x30] sm:$0xf] %v4454
        %4711 = vst [vmem:[%s218 + $0x34] sm:$0xf] %v4455
        %4712 = vst [vmem:[%s218 + $0x38] sm:$0xf] %v4456
        %4713 = vst [vmem:[%s218 + $0x3c] sm:$0xf] %v4457
        %4714 = vst [vmem:[%s218 + $0x40] sm:$0xf] %v4458
        %4715 = vst [vmem:[%s218 + $0x44] sm:$0xf] %v4459
        %4716 = vst [vmem:[%s218 + $0x48] sm:$0xf] %v4460
        %4717 = vst [vmem:[%s218 + $0x4c] sm:$0xf] %v4461
        %4718 = vst [vmem:[%s218 + $0x50] sm:$0xf] %v4462
        %4719 = vst [vmem:[%s218 + $0x54] sm:$0xf] %v4463
        %4720 = vst [vmem:[%s218 + $0x58] sm:$0xf] %v4464
        %4721 = vst [vmem:[%s218 + $0x5c] sm:$0xf] %v4465
        %4722 = vst [vmem:[%s218 + $0x60] sm:$0xf] %v4466
        %4723 = vst [vmem:[%s218 + $0x64] sm:$0xf] %v4467
        %4724 = vst [vmem:[%s218 + $0x68] sm:$0xf] %v4468
        %4725 = vst [vmem:[%s218 + $0x6c] sm:$0xf] %v4469
        %4726 = vst [vmem:[%s218 + $0x70] sm:$0xf] %v4470
        %4727 = vst [vmem:[%s218 + $0x74] sm:$0xf] %v4471
        %4728 = vst [vmem:[%s218 + $0x78] sm:$0xf] %v4472
        %4729 = vst [vmem:[%s218 + $0x7c] sm:$0xf] %v4473
        %4730 = vst [vmem:[%s218 + $0x80] sm:$0xf] %v4474
        %4731 = vst [vmem:[%s218 + $0x84] sm:$0xf] %v4475
        %4732 = vst [vmem:[%s218 + $0x88] sm:$0xf] %v4476
        %4733 = vst [vmem:[%s218 + $0x8c] sm:$0xf] %v4477
        %4734 = vst [vmem:[%s218 + $0x90] sm:$0xf] %v4478
        %4735 = vst [vmem:[%s218 + $0x94] sm:$0xf] %v4479
        %4736 = vst [vmem:[%s218 + $0x98] sm:$0xf] %v4480
        %4737 = vst [vmem:[%s218 + $0x9c] sm:$0xf] %v4481
        %4738 = vst [vmem:[%s218 + $0xa0] sm:$0xf] %v4482
        %4739 = vst [vmem:[%s218 + $0xa4] sm:$0xf] %v4483
        %4740 = vst [vmem:[%s218 + $0xa8] sm:$0xf] %v4484
        %4741 = vst [vmem:[%s218 + $0xac] sm:$0xf] %v4485
        %4742 = vst [vmem:[%s218 + $0xb0] sm:$0xf] %v4486
        %4743 = vst [vmem:[%s218 + $0xb4] sm:$0xf] %v4487
        %4744 = vst [vmem:[%s218 + $0xb8] sm:$0xf] %v4488
        %4745 = vst [vmem:[%s218 + $0xbc] sm:$0xf] %v4489
        %4746 = vst [vmem:[%s218 + $0xc0] sm:$0xf] %v4490
        %4747 = vst [vmem:[%s218 + $0xc4] sm:$0xf] %v4491
        %4748 = vst [vmem:[%s218 + $0xc8] sm:$0xf] %v4492
        %4749 = vst [vmem:[%s218 + $0xcc] sm:$0xf] %v4493
        %4750 = vst [vmem:[%s218 + $0xd0] sm:$0xf] %v4494
        %4751 = vst [vmem:[%s218 + $0xd4] sm:$0xf] %v4495
        %4752 = vst [vmem:[%s218 + $0xd8] sm:$0xf] %v4496
        %4753 = vst [vmem:[%s218 + $0xdc] sm:$0xf] %v4497
        %4754 = vst [vmem:[%s218 + $0xe0] sm:$0xf] %v4498
        %4755 = vst [vmem:[%s218 + $0xe4] sm:$0xf] %v4499
        %4756 = vst [vmem:[%s218 + $0xe8] sm:$0xf] %v4500
        %4757 = vst [vmem:[%s218 + $0xec] sm:$0xf] %v4501
        %4758 = vst [vmem:[%s218 + $0xf0] sm:$0xf] %v4502
        %4759 = vst [vmem:[%s218 + $0xf4] sm:$0xf] %v4503
        %4760 = vst [vmem:[%s218 + $0xf8] sm:$0xf] %v4504
        %4761 = vst [vmem:[%s218 + $0xfc] sm:$0xf] %v4505
        %4762 = vst [vmem:[%s218 + $0x100] sm:$0xf] %v4506
        %4763 = vst [vmem:[%s218 + $0x104] sm:$0xf] %v4507
        %4764 = vst [vmem:[%s218 + $0x108] sm:$0xf] %v4508
        %4765 = vst [vmem:[%s218 + $0x10c] sm:$0xf] %v4509
        %4766 = vst [vmem:[%s218 + $0x110] sm:$0xf] %v4510
        %4767 = vst [vmem:[%s218 + $0x114] sm:$0xf] %v4511
        %4768 = vst [vmem:[%s218 + $0x118] sm:$0xf] %v4512
        %4769 = vst [vmem:[%s218 + $0x11c] sm:$0xf] %v4513
        %4770 = vst [vmem:[%s218 + $0x120] sm:$0xf] %v4514
        %4771 = vst [vmem:[%s218 + $0x124] sm:$0xf] %v4515
        %4772 = vst [vmem:[%s218 + $0x128] sm:$0xf] %v4516
        %4773 = vst [vmem:[%s218 + $0x12c] sm:$0xf] %v4517
        %4774 = vst [vmem:[%s218 + $0x130] sm:$0xf] %v4518
        %4775 = vst [vmem:[%s218 + $0x134] sm:$0xf] %v4519
        %4776 = vst [vmem:[%s218 + $0x138] sm:$0xf] %v4520
        %4777 = vst [vmem:[%s218 + $0x13c] sm:$0xf] %v4521
        %4778 = vst [vmem:[%s218 + $0x140] sm:$0xf] %v4522
        %4779 = vst [vmem:[%s218 + $0x144] sm:$0xf] %v4523
        %4780 = vst [vmem:[%s218 + $0x148] sm:$0xf] %v4524
        %4781 = vst [vmem:[%s218 + $0x14c] sm:$0xf] %v4525
        %4782 = vst [vmem:[%s218 + $0x150] sm:$0xf] %v4526
        %4783 = vst [vmem:[%s218 + $0x154] sm:$0xf] %v4527
        %4784 = vst [vmem:[%s218 + $0x158] sm:$0xf] %v4528
        %4785 = vst [vmem:[%s218 + $0x15c] sm:$0xf] %v4529
        %4786 = vst [vmem:[%s218 + $0x160] sm:$0xf] %v4530
        %4787 = vst [vmem:[%s218 + $0x164] sm:$0xf] %v4531
        %4788 = vst [vmem:[%s218 + $0x168] sm:$0xf] %v4532
        %4789 = vst [vmem:[%s218 + $0x16c] sm:$0xf] %v4533
        %4790 = vst [vmem:[%s218 + $0x170] sm:$0xf] %v4534
        %4791 = vst [vmem:[%s218 + $0x174] sm:$0xf] %v4535
        %4792 = vst [vmem:[%s218 + $0x178] sm:$0xf] %v4536
        %4793 = vst [vmem:[%s218 + $0x17c] sm:$0xf] %v4537
        %4794 = vst [vmem:[%s218 + $0x180] sm:$0xf] %v4538
        %4795 = vst [vmem:[%s218 + $0x184] sm:$0xf] %v4539
        %4796 = vst [vmem:[%s218 + $0x188] sm:$0xf] %v4540
        %4797 = vst [vmem:[%s218 + $0x18c] sm:$0xf] %v4541
        %4798 = vst [vmem:[%s218 + $0x190] sm:$0xf] %v4542
        %4799 = vst [vmem:[%s218 + $0x194] sm:$0xf] %v4543
        %4800 = vst [vmem:[%s218 + $0x198] sm:$0xf] %v4544
        %4801 = vst [vmem:[%s218 + $0x19c] sm:$0xf] %v4545
        %4802 = vst [vmem:[%s218 + $0x1a0] sm:$0xf] %v4546
        %4803 = vst [vmem:[%s218 + $0x1a4] sm:$0xf] %v4547
        %4804 = vst [vmem:[%s218 + $0x1a8] sm:$0xf] %v4548
        %4805 = vst [vmem:[%s218 + $0x1ac] sm:$0xf] %v4549
        %4806 = vst [vmem:[%s218 + $0x1b0] sm:$0xf] %v4550
        %4807 = vst [vmem:[%s218 + $0x1b4] sm:$0xf] %v4551
        %4808 = vst [vmem:[%s218 + $0x1b8] sm:$0xf] %v4552
        %4809 = vst [vmem:[%s218 + $0x1bc] sm:$0xf] %v4553
        %4810 = vst [vmem:[%s218 + $0x1c0] sm:$0xf] %v4554
        %4811 = vst [vmem:[%s218 + $0x1c4] sm:$0xf] %v4555
        %4812 = vst [vmem:[%s218 + $0x1c8] sm:$0xf] %v4556
        %4813 = vst [vmem:[%s218 + $0x1cc] sm:$0xf] %v4557
        %4814 = vst [vmem:[%s218 + $0x1d0] sm:$0xf] %v4558
        %4815 = vst [vmem:[%s218 + $0x1d4] sm:$0xf] %v4559
        %4816 = vst [vmem:[%s218 + $0x1d8] sm:$0xf] %v4560
        %4817 = vst [vmem:[%s218 + $0x1dc] sm:$0xf] %v4561
        %4818 = vst [vmem:[%s218 + $0x1e0] sm:$0xf] %v4562
        %4819 = vst [vmem:[%s218 + $0x1e4] sm:$0xf] %v4563
        %4820 = vst [vmem:[%s218 + $0x1e8] sm:$0xf] %v4564
        %4821 = vst [vmem:[%s218 + $0x1ec] sm:$0xf] %v4565
        %4822 = vst [vmem:[%s218 + $0x1f0] sm:$0xf] %v4566
        %4823 = vst [vmem:[%s218 + $0x1f4] sm:$0xf] %v4567
        %4824 = vst [vmem:[%s218 + $0x1f8] sm:$0xf] %v4568
        %4825 = vst [vmem:[%s218 + $0x1fc] sm:$0xf] %v4569
        %s4826 = sand.u32 %s137, 1
        %s4827 = scalar_lea.sflag [#allocation3], %s4826
        %s4828 = sand.u32 %s137, 1
        %s4829 = smul.addr %s4828, 512
        %s4830 = scalar_lea.vmem [#allocation2], %s4829
        // Predicated region
        $region41: #{tpu_custom_call.1} parent=39 // pred_check
          %p4831 = pneg %p147
        $region42: #{tpu_custom_call.1} parent=39 // pred_check_branch
          %4833 = sbr.rel (%p4831) target = $region44
        $region43: #{tpu_custom_call.1} parent=39 // pred_region
          %s4834 = smul.u32 128, %s19
          %s4836 = ssub.s32 8192, 8192
          %4837 = vsyncadd %s4827, %s4836
          %s4838 = smul.addr %s4834, 64
          %s4839 = scalar_lea.hbm %s5, %s4838
          %s4840 = sshll.u32 %s4830, 4
          %s4841 = int_to_ptr.vmem [resolvable:$true] %s4840
          %4846 = dma.vmem_to_hbm [thread:$0]  %s4841, 8192, %s4839, %s4827, 64, 64, 4
        $region44: #{tpu_custom_call.1} parent=39 // pred_fallthru
          _
      $region40: #{tpu_custom_call.1} parent=5 // pred_fallthru
        _
      %p4847 = scmp.le.s32.totalorder 2, %s14
      // Predicated region
      $region45: #{tpu_custom_call.1} parent=5 // pred_check
        %p4848 = pneg %p4847
      $region46: #{tpu_custom_call.1} parent=5 // pred_check_branch
        %4850 = sbr.rel (%p4848) target = $region48
      $region47: #{tpu_custom_call.1} parent=5 // pred_region
        %s4851 = ssub.s32 %s14, 2
        // Predicated region
        $region49: #{tpu_custom_call.1} parent=47 // pred_check
          %p4852 = pneg %p153
        $region50: #{tpu_custom_call.1} parent=47 // pred_check_branch
          %4854 = sbr.rel (%p4852) target = $region52
        $region51: #{tpu_custom_call.1} parent=47 // pred_region
          %s4855 = sand.u32 %s138, 1
          %s4856 = scalar_lea.sflag [#allocation3], %s4855
          %s4857 = sand.u32 %s138, 1
          %s4858 = smul.addr %s4857, 512
          %s4859 = scalar_lea.vmem [#allocation2], %s4858
          %4860 = dma.done %s4856, 8192
        $region52: #{tpu_custom_call.1} parent=47 // pred_fallthru
          _
      $region48: #{tpu_custom_call.1} parent=5 // pred_fallthru
        _
    $region6: #{tpu_custom_call.1} parent=1 // loop_footer
      %s18 = sadd.s32 1, %s14
    $region7: #{tpu_custom_call.1} parent=1 // loop_footer_branch
      %13 = sbr.rel target = $region3
    $region8: #{tpu_custom_call.1} parent=1 // loop_exit
      _
    %4861 = vsyncpa [#allocation3], 1
    %s4862 = scalar_lea.sflag [#allocation3], 1
    %4863 = vsyncpa %s4862, 1

</llo_original>
